<compile_context>
chip_gen: v5e
topology: v5e:2x2
jax: 0.10.0
libtpu: 0.0.40
codegen_flags: <defaults>
</compile_context>

<pallas_src>
import functools

import jax
import jax.numpy as jnp
from jax import lax
from jax.experimental import pallas as pl
from jax.experimental.pallas import tpu as pltpu


# (cin, cout, kernel, padding, pool_after) for every MaxFeature conv of
# LightCNN(3).features; MaxPool2d(2,2,ceil_mode=True) layers are folded into
# the preceding conv's epilogue (pool_after=True).
LAYERS = (
    (3,   48,  5, 2, True),
    (48,  48,  1, 0, False),
    (48,  96,  3, 1, True),
    (96,  96,  1, 0, False),
    (96,  192, 3, 1, True),
    (192, 192, 1, 0, False),
    (192, 128, 3, 1, False),
    (128, 128, 1, 0, False),
    (128, 128, 3, 1, True),
)

LANE = 128
_MARGIN = 16                       # bf16-tile-aligned left margin in the padded scratch
_VMEM_LIMIT = 48 * 1024 * 1024     # explicit scoped-VMEM cap (v5e default is 16 MiB)


def _round_up(x, m):
    return (x + m - 1) // m * m


def _row_tile(h):
    for t in (32, 16, 8, 4, 2, 1):
        if h % t == 0:
            return t
    return 1


def _batch_tile(n, h, w):
    """Merge several images into one grid step for the tiny deep layers, but
    keep >=2 batch-grid steps so both v7x TensorCores get work."""
    best = 1
    for bt in range(1, n + 1):
        if n % bt != 0:
            continue
        if bt * h * w > 2048:
            continue
        if n >= 2 and n // bt < 2:
            continue
        best = bt
    return best


def _maxout_pool_store(y, o_ref, *, bt, tr, w, pool):
    """Shared epilogue: lane-aligned maxout split -> cast -> optional 2x2 pool."""
    coutp = y.shape[-1] // 2
    y = jnp.maximum(y[:, :coutp], y[:, coutp:]).astype(o_ref.dtype)
    if pool:
        y = y.reshape(bt * tr // 2, 2, w, coutp)
        y = jnp.maximum(y[:, 0], y[:, 1])                 # pool rows
        y = y.reshape(bt * tr // 2, w // 2, 2, coutp)
        y = jnp.maximum(y[:, :, 0], y[:, :, 1])           # pool cols
        o_ref[...] = y.reshape(bt, tr // 2, w // 2, coutp)
    else:
        o_ref[...] = y.reshape(bt, tr, w, coutp)


# --------------------------- 5x5 stem (patch matmul) ---------------------------


def _stem_matmul_kernel(x_ref, w_ref, b_ref, o_ref, *, tr, w, pool):
    cin = x_ref.shape[-1]
    xm = x_ref[...].astype(jnp.bfloat16).reshape(tr * w, cin)
    # Single wide matmul (both maxout halves) -> lane-aligned split in epilogue.
    y = jnp.dot(xm, w_ref[...], preferred_element_type=jnp.float32) + b_ref[...]
    _maxout_pool_store(y, o_ref, bt=1, tr=tr, w=w, pool=pool)


def stem_matmul(x, w_wide, b_wide, *, pool, out_dtype):
    """x: (N,H,W,75) bf16 patches -> (N,H/2,W/2,Coutp)."""
    n, h, w, cin = x.shape
    coutp = w_wide.shape[-1] // 2
    if pool:
        assert h % 2 == 0 and w % 2 == 0  # TODO(synk): ceil_mode for odd sizes
    tr = _row_tile(h)
    nr = h // tr
    ho, wo, tro = (h // 2, w // 2, tr // 2) if pool else (h, w, tr)

    kernel = functools.partial(_stem_matmul_kernel, tr=tr, w=w, pool=pool)
    return pl.pallas_call(
        kernel,
        out_shape=jax.ShapeDtypeStruct((n, ho, wo, coutp), out_dtype),
        grid_spec=pltpu.PrefetchScalarGridSpec(
            num_scalar_prefetch=0,
            grid=(n, nr),
            in_specs=[
                pl.BlockSpec((1, tr, w, cin), lambda bi, r: (bi, r, 0, 0)),
                pl.BlockSpec((cin, 2 * coutp), lambda bi, r: (0, 0)),
                pl.BlockSpec((1, 2 * coutp), lambda bi, r: (0, 0)),
            ],
            out_specs=pl.BlockSpec((1, tro, wo, coutp),
                                   lambda bi, r: (bi, r, 0, 0)),
        ),
        compiler_params=pltpu.CompilerParams(
            dimension_semantics=("parallel", "parallel"),
            vmem_limit_bytes=_VMEM_LIMIT),
    )(x, w_wide, b_wide)


# ---------------------- fused 1x1-maxout + 3x3-maxout block --------------------


def _fused_conv_kernel(x_ref, w1_ref, b1_ref, w3_ref, b3_ref, o_ref, xpad_ref, *,
                       k, pad, bt, tr, h, w, pool):
    cinp = x_ref.shape[-1]
    cmidp = w1_ref.shape[-1] // 2
    r = pl.program_id(1)

    @pl.when(r == 0)
    def _():
        # 1x1 maxout on the whole resident image(s), written straight into the
        # interior of the padded VMEM scratch (no HBM round trip for the 1x1).
        xm = x_ref[...].astype(jnp.bfloat16).reshape(bt * h * w, cinp)
        y1 = jnp.dot(xm, w1_ref[...], preferred_element_type=jnp.float32) + b1_ref[...]
        y1 = jnp.maximum(y1[:, :cmidp], y1[:, cmidp:]).astype(jnp.bfloat16)
        xpad_ref[:, pad:pad + h, _MARGIN:_MARGIN + w, :] = y1.reshape(bt, h, w, cmidp)
        # Zero ONLY the halo actually read by the 3x3 taps (not the whole buffer).
        wp = xpad_ref.shape[2]
        zrow = jnp.zeros((bt, pad, wp, cmidp), jnp.bfloat16)
        xpad_ref[:, :pad, :, :] = zrow
        xpad_ref[:, pad + h:, :, :] = zrow
        zcol = jnp.zeros((bt, h, pad, cmidp), jnp.bfloat16)
        xpad_ref[:, pad:pad + h, _MARGIN - pad:_MARGIN, :] = zcol
        xpad_ref[:, pad:pad + h, _MARGIN + w:_MARGIN + w + pad, :] = zcol

    row0 = r * tr
    cols = []
    for kh in range(k):
        for kw in range(k):
            c0 = _MARGIN - pad + kw
            cols.append(xpad_ref[:, pl.ds(row0 + kh, tr), c0:c0 + w, :])
    # im2col slab -> ONE wide matmul (both maxout halves), K = k*k*cmidp.
    patches = jnp.concatenate(cols, axis=-1).reshape(bt * tr * w, k * k * cmidp)
    y = jnp.dot(patches, w3_ref[...], preferred_element_type=jnp.float32) + b3_ref[...]
    _maxout_pool_store(y, o_ref, bt=bt, tr=tr, w=w, pool=pool)


def fused_mf_block(x, w1, b1, w3, b3, *, pool, out_dtype):
    """Fused (1x1 MaxFeature) -> (3x3 MaxFeature) [-> MaxPool2d(2,2)] block.

    x: (N,H,W,Cinp) bf16 -> (N,H[/2],W[/2],Coutp).
    """
    n, h, w, cinp = x.shape
    cmidp = w1.shape[-1] // 2
    coutp = w3.shape[-1] // 2
    k, pad = 3, 1
    if pool:
        assert h % 2 == 0 and w % 2 == 0  # TODO(synk): ceil_mode for odd sizes
    tr = _row_tile(h)
    nr = h // tr
    bt = _batch_tile(n, h, w)
    ho, wo, tro = (h // 2, w // 2, tr // 2) if pool else (h, w, tr)

    kernel = functools.partial(_fused_conv_kernel, k=k, pad=pad, bt=bt, tr=tr,
                               h=h, w=w, pool=pool)
    return pl.pallas_call(
        kernel,
        out_shape=jax.ShapeDtypeStruct((n, ho, wo, coutp), out_dtype),
        grid_spec=pltpu.PrefetchScalarGridSpec(
            num_scalar_prefetch=0,
            grid=(n // bt, nr),
            in_specs=[
                # whole (un-padded) image block stays resident across the row
                # tiles of one batch step; re-DMA'd only when bi moves.
                pl.BlockSpec((bt, h, w, cinp), lambda bi, r: (bi, 0, 0, 0)),
                pl.BlockSpec((cinp, 2 * cmidp), lambda bi, r: (0, 0)),
                pl.BlockSpec((1, 2 * cmidp), lambda bi, r: (0, 0)),
                pl.BlockSpec((k * k * cmidp, 2 * coutp), lambda bi, r: (0, 0)),
                pl.BlockSpec((1, 2 * coutp), lambda bi, r: (0, 0)),
            ],
            out_specs=pl.BlockSpec((bt, tro, wo, coutp),
                                   lambda bi, r: (bi, r, 0, 0)),
            scratch_shapes=[
                pltpu.VMEM((bt, h + 2 * pad, w + 2 * _MARGIN, cmidp),
                           jnp.bfloat16)],
        ),
        compiler_params=pltpu.CompilerParams(
            # row axis reuses the per-image padded scratch -> sequential;
            # batch axis is megacore-parallel.
            dimension_semantics=("parallel", "arbitrary"),
            vmem_limit_bytes=_VMEM_LIMIT),
    )(x, w1, b1, w3, b3)


# -------------------------------- parameters ----------------------------------


def init_reference_params(key):
    """Synthetic LightCNN weights in standard (KH, KW, Cin, 2*Cout) layout.

    Weights are rounded to bf16 (kept as f32) so the Pallas kernels (bf16
    operands) and the f32 JAX reference share identical effective weights.
    """
    params = []
    for i, (cin, cout, k, _pad, _pool) in enumerate(LAYERS):
        kw_key, kb_key = jax.random.split(jax.random.fold_in(key, i))
        scale = 1.0 / float(cin * k * k) ** 0.5
        wgt = jax.random.normal(kw_key, (k, k, cin, 2 * cout), jnp.float32) * scale
        bia = jax.random.normal(kb_key, (2 * cout,), jnp.float32) * scale
        wgt = wgt.astype(jnp.bfloat16).astype(jnp.float32)
        params.append((wgt, bia))
    return params


def _pack_wide(wgt, bia, cin_eff, cinp, cout, coutp, k_eff):
    """Pad channels to 128-multiples, split maxout halves, and pack as a single
    wide (K, 2*Coutp) im2col weight + (1, 2*Coutp) bias."""
    def pw(wh):
        wh = jnp.pad(wh, ((0, 0), (0, 0),
                          (0, cinp - cin_eff),
                          (0, coutp - cout)))
        return wh.reshape(k_eff * k_eff * cinp, coutp)

    def pb(bh):
        return jnp.pad(bh, (0, coutp - cout))

    w_wide = jnp.concatenate([pw(wgt[..., :cout]), pw(wgt[..., cout:])],
                             axis=-1).astype(jnp.bfloat16)
    b_wide = jnp.concatenate([pb(bia[:cout]), pb(bia[cout:])])[None, :]
    return w_wide, b_wide.astype(jnp.float32)


def pack_params(ref_params):
    """-> (stem_params, [fused block params]) in kernel layout."""
    cin0, cout0, k0, _p0, _pool0 = LAYERS[0]
    w0, b0 = ref_params[0]
    coutp0 = _round_up(cout0, LANE)
    # 5x5 stem is consumed as prebuilt (H,W,75) patches: a 1x1 conv with 75
    # "input channels" (no cin padding).
    stem = _pack_wide(w0.reshape(1, 1, k0 * k0 * cin0, 2 * cout0), b0,
                      k0 * k0 * cin0, k0 * k0 * cin0, cout0, coutp0, 1)

    blocks = []
    prev_cp = coutp0
    for idx in range(1, len(LAYERS), 2):
        cin1, cmid, k1, _, _ = LAYERS[idx]          # 1x1 MaxFeature
        cin3, cout3, k3, _, _ = LAYERS[idx + 1]     # 3x3 MaxFeature
        w1, b1 = ref_params[idx]
        w3, b3 = ref_params[idx + 1]
        cmidp = _round_up(cmid, LANE)
        coutp = _round_up(cout3, LANE)
        p1 = _pack_wide(w1, b1, cin1, prev_cp, cmid, cmidp, k1)
        p3 = _pack_wide(w3, b3, cin3, cmidp, cout3, coutp, k3)
        blocks.append(p1 + p3)
        prev_cp = coutp
    return stem, blocks


# -------------------------------- full forward --------------------------------


def _im2col_5x5(x, k, pad):
    """Space-to-depth for the stem: (N,H,W,3) -> (N,H,W,k*k*3), (kh,kw,cin) order."""
    _n, h, w, _c = x.shape
    xp = jnp.pad(x, ((0, 0), (pad, pad), (pad, pad), (0, 0)))
    cols = [xp[:, kh:kh + h, kw:kw + w, :] for kh in range(k) for kw in range(k)]
    return jnp.concatenate(cols, axis=-1)


def lightcnn_feature(x_nchw, packed_params):
    """LightCNNFeature.forward: NCHW float32 in -> NCHW float32 features out."""
    stem_p, blocks = packed_params
    x = jnp.transpose(x_nchw, (0, 2, 3, 1)).astype(jnp.bfloat16)   # NCHW -> NHWC
    patches = _im2col_5x5(x, LAYERS[0][2], LAYERS[0][3])
    x = stem_matmul(patches, *stem_p, pool=LAYERS[0][4], out_dtype=jnp.bfloat16)
    for bi, prm in enumerate(blocks):
        pool = LAYERS[2 * bi + 2][4]
        out_dtype = jnp.float32 if bi == len(blocks) - 1 else jnp.bfloat16
        x = fused_mf_block(x, *prm, pool=pool, out_dtype=out_dtype)
    return jnp.transpose(x, (0, 3, 1, 2))                          # NHWC -> NCHW


# ------------------------------- pure-JAX reference ---------------------------


def reference_forward(x_nchw, ref_params):
    x = jnp.transpose(x_nchw, (0, 2, 3, 1))
    for (cin, cout, _k, pad, pool), (wgt, bia) in zip(LAYERS, ref_params):
        y = lax.conv_general_dilated(
            x, wgt, window_strides=(1, 1), padding=[(pad, pad), (pad, pad)],
            dimension_numbers=("NHWC", "HWIO", "NHWC"))
        y = y + bia
        x = jnp.maximum(y[..., :cout], y[..., cout:])
        if pool:
            n, h, w, c = x.shape
            x = x.reshape(n, h // 2, 2, w // 2, 2, c).max(axis=(2, 4))
    return jnp.transpose(x, (0, 3, 1, 2))


if __name__ == "__main__":
    key = jax.random.PRNGKey(0)
    ref_params = init_reference_params(key)
    packed = pack_params(ref_params)

    # Small input consistent with the module: NCHW, 3 channels (LightCNN(3)),
    # spatial 32 (real model uses 128); output spatial = 32 / 2**4 = 2.
    x = jax.random.normal(jax.random.fold_in(key, 1000), (2, 3, 32, 32),
                          jnp.float32)

    out = jax.block_until_ready(lightcnn_feature(x, packed))
    assert out.shape == (2, 128, 2, 2), out.shape
    assert bool(jnp.isfinite(out).all())

    # Numerical check against the f32 XLA reference (bf16 ops -> loose tolerance).
    ref = jax.block_until_ready(reference_forward(x, ref_params))
    err = float(jnp.max(jnp.abs(out - ref)))
    scale = float(jnp.max(jnp.abs(ref)))
    assert err <= 0.15 * scale + 0.05, (err, scale)

    print("KERNEL_OK")
</pallas_src>

<mosaic_0001>
module attributes {stable_mosaic.version = 11 : i64} {
  func.func @_stem_matmul_kernel(%arg0: i32, %arg1: i32, %arg2: memref<1x32x32x75xbf16, #tpu.memory_space<vmem>>, %arg3: memref<75x256xbf16, #tpu.memory_space<vmem>>, %arg4: memref<1x256xf32, #tpu.memory_space<vmem>>, %arg5: memref<1x16x16x128xbf16, #tpu.memory_space<vmem>>) attributes {dimension_semantics = [#tpu.dimension_semantics<parallel>, #tpu.dimension_semantics<parallel>], iteration_bounds = array<i64: 2, 1>, scalar_prefetch = 0 : i64, scratch_operands = 0 : i64, tpu.core_type = #tpu.core_type<tc>, window_params = [{transform_indices = @transform_0, window_bounds = array<i64: 1, 32, 32, 75>}, {pipeline_mode = #tpu.pipeline_mode<synchronous>, transform_indices = @transform_1, window_bounds = array<i64: 75, 256>}, {pipeline_mode = #tpu.pipeline_mode<synchronous>, transform_indices = @transform_2, window_bounds = array<i64: 1, 256>}, {transform_indices = @transform_3, window_bounds = array<i64: 1, 16, 16, 128>}]} {
    %c0 = arith.constant 0 : index
    %c0_0 = arith.constant 0 : index
    %c0_1 = arith.constant 0 : index
    %c0_2 = arith.constant 0 : index
    %0 = vector.load %arg2[%c0, %c0_0, %c0_1, %c0_2] : memref<1x32x32x75xbf16, #tpu.memory_space<vmem>>, vector<1x32x32x75xbf16>
    %1 = vector.shape_cast %0 : vector<1x32x32x75xbf16> to vector<1024x75xbf16>
    %c0_3 = arith.constant 0 : index
    %c0_4 = arith.constant 0 : index
    %2 = vector.load %arg3[%c0_3, %c0_4] : memref<75x256xbf16, #tpu.memory_space<vmem>>, vector<75x256xbf16>
    %cst = arith.constant dense<0.000000e+00> : vector<1024x256xf32>
    %3 = tpu.matmul %1, %2, %cst {dimension_numbers = #tpu.dot_dimension_numbers<[1], [0], [0], [1], [0, 0, 1, 1], [], []>} : vector<1024x75xbf16>, vector<75x256xbf16>, vector<1024x256xf32> -> vector<1024x256xf32>
    %c0_5 = arith.constant 0 : index
    %c0_6 = arith.constant 0 : index
    %4 = vector.load %arg4[%c0_5, %c0_6] : memref<1x256xf32, #tpu.memory_space<vmem>>, vector<1x256xf32>
    %5 = vector.broadcast %4 : vector<1x256xf32> to vector<1024x256xf32>
    %6 = arith.addf %3, %5 : vector<1024x256xf32>
    %7 = vector.extract_strided_slice %6 {offsets = [0, 0], sizes = [1024, 128], strides = [1, 1]} : vector<1024x256xf32> to vector<1024x128xf32>
    %8 = vector.extract_strided_slice %6 {offsets = [0, 128], sizes = [1024, 128], strides = [1, 1]} : vector<1024x256xf32> to vector<1024x128xf32>
    %9 = arith.maximumf %7, %8 : vector<1024x128xf32>
    %10 = arith.truncf %9 : vector<1024x128xf32> to vector<1024x128xbf16>
    %11 = vector.shape_cast %10 : vector<1024x128xbf16> to vector<16x2x32x128xbf16>
    %12 = vector.extract_strided_slice %11 {offsets = [0, 0, 0, 0], sizes = [16, 1, 32, 128], strides = [1, 1, 1, 1]} : vector<16x2x32x128xbf16> to vector<16x1x32x128xbf16>
    %13 = vector.shape_cast %12 : vector<16x1x32x128xbf16> to vector<16x32x128xbf16>
    %14 = vector.extract_strided_slice %11 {offsets = [0, 1, 0, 0], sizes = [16, 1, 32, 128], strides = [1, 1, 1, 1]} : vector<16x2x32x128xbf16> to vector<16x1x32x128xbf16>
    %15 = vector.shape_cast %14 : vector<16x1x32x128xbf16> to vector<16x32x128xbf16>
    %16 = arith.maximumf %13, %15 : vector<16x32x128xbf16>
    %17 = vector.shape_cast %16 : vector<16x32x128xbf16> to vector<16x16x2x128xbf16>
    %18 = vector.extract_strided_slice %17 {offsets = [0, 0, 0, 0], sizes = [16, 16, 1, 128], strides = [1, 1, 1, 1]} : vector<16x16x2x128xbf16> to vector<16x16x1x128xbf16>
    %19 = vector.shape_cast %18 : vector<16x16x1x128xbf16> to vector<16x16x128xbf16>
    %20 = vector.extract_strided_slice %17 {offsets = [0, 0, 1, 0], sizes = [16, 16, 1, 128], strides = [1, 1, 1, 1]} : vector<16x16x2x128xbf16> to vector<16x16x1x128xbf16>
    %21 = vector.shape_cast %20 : vector<16x16x1x128xbf16> to vector<16x16x128xbf16>
    %22 = arith.maximumf %19, %21 : vector<16x16x128xbf16>
    %23 = vector.shape_cast %22 : vector<16x16x128xbf16> to vector<1x16x16x128xbf16>
    %c0_7 = arith.constant 0 : index
    %c0_8 = arith.constant 0 : index
    %c0_9 = arith.constant 0 : index
    %c0_10 = arith.constant 0 : index
    %24 = vector.load %arg5[%c0_7, %c0_8, %c0_9, %c0_10] : memref<1x16x16x128xbf16, #tpu.memory_space<vmem>>, vector<1x16x16x128xbf16>
    tpu.vector_store %arg5[%c0_7, %c0_8, %c0_9, %c0_10], %23 {strides = array<i32>} : memref<1x16x16x128xbf16, #tpu.memory_space<vmem>>, vector<1x16x16x128xbf16>,
    return
  }
  func.func @transform_0(%arg0: i32, %arg1: i32) -> (i32, i32, i32, i32) {
    %c0_i32 = arith.constant 0 : i32
    %c0_i32_0 = arith.constant 0 : i32
    %c0_i32_1 = arith.constant 0 : i32
    return %arg0, %arg1, %c0_i32, %c0_i32_0 : i32, i32, i32, i32
  }
  func.func @transform_1(%arg0: i32, %arg1: i32) -> (i32, i32) {
    %c0_i32 = arith.constant 0 : i32
    %c0_i32_0 = arith.constant 0 : i32
    %c0_i32_1 = arith.constant 0 : i32
    return %c0_i32, %c0_i32_0 : i32, i32
  }
  func.func @transform_2(%arg0: i32, %arg1: i32) -> (i32, i32) {
    %c0_i32 = arith.constant 0 : i32
    %c0_i32_0 = arith.constant 0 : i32
    %c0_i32_1 = arith.constant 0 : i32
    return %c0_i32, %c0_i32_0 : i32, i32
  }
  func.func @transform_3(%arg0: i32, %arg1: i32) -> (i32, i32, i32, i32) {
    %c0_i32 = arith.constant 0 : i32
    %c0_i32_0 = arith.constant 0 : i32
    %c0_i32_1 = arith.constant 0 : i32
    return %arg0, %arg1, %c0_i32, %c0_i32_0 : i32, i32, i32, i32
  }
}

</mosaic_0001>

<llo_original>
// kernel: tpu_custom_call.1
$region0: #{tpu_custom_call.1}
  #allocation0 [shape = 'u32[]', space=smem, size = 0x4, offset = 0x4, fixed_abs, tag = 'smem constant byte address 0x4 - core index']
  #allocation1 [shape = 'u32[72,128]{1,0:T(1,128)}', space=vmem, size = 0x9000, scoped, tag = 'internal scratch']
  %s0 = inlined_call_operand.hbm [shape: bf16[2,32,32,75], index: 0, kind: input, shape index: {}]
  %s1 = inlined_call_operand.hbm [shape: bf16[75,256], index: 1, kind: input, shape index: {}]
  %s2 = inlined_call_operand.hbm [shape: f32[1,256], index: 2, kind: input, shape index: {}]
  %s3 = inlined_call_operand.hbm [shape: bf16[2,16,16,128], index: 3, kind: output, shape index: {}]
  %s4 = sld [smem:[#allocation0]]
  $region57: #{tpu_custom_call.1} parent=0
    _
  %s6 = ssub.s32 1, %s4
  %s7 = scalar_select 0, %s6, %s4
  $region1: #{tpu_custom_call.1} parent=0
    #allocation2 [shape = 'u8[524288]{0}', space=vmem, size = 0x80000, scoped, tag = 'input window, operand 0']
    #allocation3 [shape = 's32[2]{0}', space=sflag, size = 0x8, scoped, tag = 'scoped memory for tpu_custom_call.1']
    #allocation4 [shape = 's32[2]{0}', space=sflag, size = 0x8, scoped, tag = 'scoped memory for tpu_custom_call.1']
    #allocation5 [shape = 'u8[40960]{0}', space=vmem, size = 0xa000, scoped, tag = 'input window, operand 1, single buffered']
    #allocation6 [shape = 's32[1]{0}', space=sflag, size = 0x4, scoped, tag = 'scoped memory for tpu_custom_call.1']
    #allocation7 [shape = 'u8[1024]{0}', space=vmem, size = 0x400, scoped, tag = 'input window, operand 2, single buffered']
    #allocation8 [shape = 'u8[131072]{0}', space=vmem, size = 0x20000, scoped, tag = 'output window, operand 0']
    %8 = vsyncpa [#allocation3], 0
    %s9 = scalar_lea.sflag [#allocation3], 1
    %10 = vsyncpa %s9, 0
    %11 = vsyncpa [#allocation6], 0
    %12 = vsyncpa [#allocation4], 0
    %s13 = scalar_lea.sflag [#allocation4], 1
    %14 = vsyncpa %s13, 0
    loop: start=0, step=1, limit=4
    $region2: #{tpu_custom_call.1} parent=1 // loop_pre_header
      _
    $region3: #{tpu_custom_call.1} parent=1 // loop_header
      %s16 = sphi 0, %s20
      %p17 = scmp.ge.s32.totalorder %s16, 4
      %s23 = sphi 0, %s35
      %s24 = sphi 0, %s31
      %s25 = sphi 0, %s23
      %s26 = sphi 0, %s24
      %s27 = sphi 0, %s25
      %s28 = sphi 0, %s26
      %s40 = sphi 0, %s42
      %s43 = sphi 0, %s40
      %s44 = sphi 0, %s43
      %s60 = sphi 0, %s44
      %s64 = sphi 0, %s64
      %s66 = sphi 0, %s64
      %s67 = sphi 0, %s66
      %s81 = sphi 0, %s67
      %s85 = sphi 0, %s85
      %s87 = sphi 0, %s85
      %s88 = sphi 0, %s87
      %s102 = sphi 0, %s88
      %s110 = sphi 0, %s112
      %s113 = sphi 0, %s110
      %s114 = sphi 0, %s113
      %s130 = sphi 0, %s114
    $region4: #{tpu_custom_call.1} parent=1 // loop_header_branch
      %19 = sbr.rel (%p17) target = $region8
    $region5: #{tpu_custom_call.1} parent=1 // loop_body
      %s21 = ssub.s32 %s16, 1
      %s22 = ssub.s32 %s16, 2
      %s29 = sadd.s32 1, %s24
      %p30 = scmp.ge.s32.totalorder %s29, 1
      %s31 = scalar_select %p30, 0, %s29
      %s32 = sadd.s32 1, %s23
      %s33 = scalar_select %p30, %s32, %s23
      %p34 = scmp.ge.s32.totalorder %s33, 2
      %s35 = scalar_select %p34, 0, %s33
      %s36 = ssub.s32 %s23, %s35
      %s37 = ssub.s32 %s24, %s31
      %s38 = sor.u32 %s36, %s37
      %p39 = scmp.eq.s32.totalorder %s38, 0
      %s41 = sadd.s32 %s40, 1
      %s42 = scalar_select %p39, %s40, %s41
      %p45 = pneg %p39
      %p46 = scmp.eq.s32.totalorder %s16, 1
      %p47 = por %p45, %p46
      %p48 = scmp.ne.s32.totalorder %s40, %s43
      %p49 = scmp.eq.s32.totalorder %s16, 0
      %p50 = por %p48, %p49
      %p51 = scmp.ne.s32.totalorder %s40, %s43
      %p52 = scmp.eq.s32.totalorder %s21, 1
      %p53 = por %p51, %p52
      %p54 = scmp.ne.s32.totalorder %s43, %s44
      %p55 = scmp.eq.s32.totalorder %s21, 0
      %p56 = por %p54, %p55
      %p57 = scmp.ne.s32.totalorder %s43, %s44
      %p58 = scmp.eq.s32.totalorder %s22, 1
      %p59 = por %p57, %p58
      %p61 = scmp.ne.s32.totalorder %s44, %s60
      %p62 = scmp.eq.s32.totalorder %s22, 0
      %p63 = por %p61, %p62
      %s65 = sadd.s32 %s64, 1
      %p68 = scmp.eq.s32.totalorder %s16, 1
      %p69 = scmp.ne.s32.totalorder %s64, %s66
      %p70 = scmp.eq.s32.totalorder %s16, 0
      %p71 = por %p69, %p70
      %p72 = scmp.ne.s32.totalorder %s64, %s66
      %p73 = scmp.eq.s32.totalorder %s21, 1
      %p74 = por %p72, %p73
      %p75 = scmp.ne.s32.totalorder %s66, %s67
      %p76 = scmp.eq.s32.totalorder %s21, 0
      %p77 = por %p75, %p76
      %p78 = scmp.ne.s32.totalorder %s66, %s67
      %p79 = scmp.eq.s32.totalorder %s22, 1
      %p80 = por %p78, %p79
      %p82 = scmp.ne.s32.totalorder %s67, %s81
      %p83 = scmp.eq.s32.totalorder %s22, 0
      %p84 = por %p82, %p83
      %s86 = sadd.s32 %s85, 1
      %p89 = scmp.eq.s32.totalorder %s16, 1
      %p90 = scmp.ne.s32.totalorder %s85, %s87
      %p91 = scmp.eq.s32.totalorder %s16, 0
      %p92 = por %p90, %p91
      %p93 = scmp.ne.s32.totalorder %s85, %s87
      %p94 = scmp.eq.s32.totalorder %s21, 1
      %p95 = por %p93, %p94
      %p96 = scmp.ne.s32.totalorder %s87, %s88
      %p97 = scmp.eq.s32.totalorder %s21, 0
      %p98 = por %p96, %p97
      %p99 = scmp.ne.s32.totalorder %s87, %s88
      %p100 = scmp.eq.s32.totalorder %s22, 1
      %p101 = por %p99, %p100
      %p103 = scmp.ne.s32.totalorder %s88, %s102
      %p104 = scmp.eq.s32.totalorder %s22, 0
      %p105 = por %p103, %p104
      %s106 = ssub.s32 %s23, %s35
      %s107 = ssub.s32 %s24, %s31
      %s108 = sor.u32 %s106, %s107
      %p109 = scmp.eq.s32.totalorder %s108, 0
      %s111 = sadd.s32 %s110, 1
      %s112 = scalar_select %p109, %s110, %s111
      %p115 = pneg %p109
      %p116 = scmp.eq.s32.totalorder %s16, 1
      %p117 = por %p115, %p116
      %p118 = scmp.ne.s32.totalorder %s110, %s113
      %p119 = scmp.eq.s32.totalorder %s16, 0
      %p120 = por %p118, %p119
      %p121 = scmp.ne.s32.totalorder %s110, %s113
      %p122 = scmp.eq.s32.totalorder %s21, 1
      %p123 = por %p121, %p122
      %p124 = scmp.ne.s32.totalorder %s113, %s114
      %p125 = scmp.eq.s32.totalorder %s21, 0
      %p126 = por %p124, %p125
      %p127 = scmp.ne.s32.totalorder %s113, %s114
      %p128 = scmp.eq.s32.totalorder %s22, 1
      %p129 = por %p127, %p128
      %p131 = scmp.ne.s32.totalorder %s114, %s130
      %p132 = scmp.eq.s32.totalorder %s22, 0
      %p133 = por %p131, %p132
      %p134 = scmp.le.s32.totalorder 1, %s16
      %p135 = scmp.lt.s32.totalorder %s16, 3
      %p136 = pnand %p134, %p135
      %p137 = pneg %p136
      // Predicated region
      $region9: #{tpu_custom_call.1} parent=5 // pred_check
        _
      $region10: #{tpu_custom_call.1} parent=5 // pred_check_branch
        %139 = sbr.rel (%p136) target = $region12
      $region11: #{tpu_custom_call.1} parent=5 // pred_region
        %s140 = ssub.s32 %s16, 1
        // Predicated region
        $region13: #{tpu_custom_call.1} parent=11 // pred_check
          %p141 = pneg %p77
        $region14: #{tpu_custom_call.1} parent=11 // pred_check_branch
          %143 = sbr.rel (%p141) target = $region16
        $region15: #{tpu_custom_call.1} parent=11 // pred_region
          %145 = vsyncadd [#allocation6], 0
          %s146 = sshll.u32 %s1, 4
          %s147 = int_to_ptr.hbm [resolvable:$true] %s146
          %s148 = sshll.u32 [#allocation5], 4
          %s149 = int_to_ptr.vmem [resolvable:$true] %s148
          %154 = dma.hbm_to_vmem [thread:$0]  %s147, 1280, %s149, [#allocation6], 128, 128, 8
        $region16: #{tpu_custom_call.1} parent=11 // pred_fallthru
          _
        // Predicated region
        $region17: #{tpu_custom_call.1} parent=11 // pred_check
          %p155 = pneg %p98
        $region18: #{tpu_custom_call.1} parent=11 // pred_check_branch
          %157 = sbr.rel (%p155) target = $region20
        $region19: #{tpu_custom_call.1} parent=11 // pred_region
          %159 = vsyncadd [#allocation6], 0
          %s161 = sshll.u32 %s2, 4
          %s162 = int_to_ptr.hbm [resolvable:$true] %s161
          %s163 = sshll.u32 [#allocation7], 4
          %s164 = int_to_ptr.vmem [resolvable:$true] %s163
          %166 = dma.hbm_to_vmem [thread:$0]  %s162, 32, %s164, [#allocation6]
        $region20: #{tpu_custom_call.1} parent=11 // pred_fallthru
          _
      $region12: #{tpu_custom_call.1} parent=5 // pred_fallthru
        _
      %p167 = scmp.lt.s32.totalorder %s16, 2
      // Predicated region
      $region21: #{tpu_custom_call.1} parent=5 // pred_check
        %p168 = pneg %p167
      $region22: #{tpu_custom_call.1} parent=5 // pred_check_branch
        %170 = sbr.rel (%p168) target = $region24
      $region23: #{tpu_custom_call.1} parent=5 // pred_region
        // Predicated region
        $region25: #{tpu_custom_call.1} parent=23 // pred_check
          %p171 = pneg %p50
        $region26: #{tpu_custom_call.1} parent=23 // pred_check_branch
          %173 = sbr.rel (%p171) target = $region28
        $region27: #{tpu_custom_call.1} parent=23 // pred_region
          %s174 = sand.u32 %s40, 1
          %s175 = scalar_lea.sflag [#allocation3], %s174
          %s176 = sand.u32 %s40, 1
          %s177 = smul.addr %s176, 512
          %s178 = scalar_lea.vmem [#allocation2], %s177
          %s179 = smul.u32 32, %s24
          %181 = vsyncadd %s175, 0
          %s182 = smul.addr %s179, 4
          %s183 = smul.addr %s23, 128
          %s184 = sadd.s32 %s182, %s183
          %s185 = smul.addr %s184, 4
          %s186 = scalar_lea.hbm %s0, %s185
          %s187 = sshll.u32 %s186, 4
          %s188 = int_to_ptr.hbm [resolvable:$true] %s187
          %s189 = sshll.u32 %s178, 4
          %s190 = int_to_ptr.vmem [resolvable:$true] %s189
          %195 = dma.hbm_to_vmem [thread:$0]  %s188, 8192, %s190, %s175, 64, 64, 4
        $region28: #{tpu_custom_call.1} parent=23 // pred_fallthru
          _
      $region24: #{tpu_custom_call.1} parent=5 // pred_fallthru
        _
      %p196 = scmp.le.s32.totalorder 1, %s16
      %p197 = scmp.lt.s32.totalorder %s16, 3
      %p198 = pnand %p196, %p197
      %p199 = pneg %p198
      // Predicated region
      $region29: #{tpu_custom_call.1} parent=5 // pred_check
        _
      $region30: #{tpu_custom_call.1} parent=5 // pred_check_branch
        %201 = sbr.rel (%p198) target = $region32
      $region31: #{tpu_custom_call.1} parent=5 // pred_region
        %s202 = ssub.s32 %s16, 1
        %s203 = sand.u32 %s43, 1
        %s204 = scalar_lea.sflag [#allocation3], %s203
        %s205 = sand.u32 %s43, 1
        %s206 = smul.addr %s205, 512
        %s207 = scalar_lea.vmem [#allocation2], %s206
        // Predicated region
        $region33: #{tpu_custom_call.1} parent=31 // pred_check
          %p208 = pneg %p56
        $region34: #{tpu_custom_call.1} parent=31 // pred_check_branch
          %210 = sbr.rel (%p208) target = $region36
        $region35: #{tpu_custom_call.1} parent=31 // pred_region
          %212 = dma.done %s204, 8192
        $region36: #{tpu_custom_call.1} parent=31 // pred_fallthru
          _
        // Predicated region
        $region37: #{tpu_custom_call.1} parent=31 // pred_check
          %p213 = pneg %p77
        $region38: #{tpu_custom_call.1} parent=31 // pred_check_branch
          %215 = sbr.rel (%p213) target = $region40
        $region39: #{tpu_custom_call.1} parent=31 // pred_region
          %217 = dma.done [#allocation6], 1280
        $region40: #{tpu_custom_call.1} parent=31 // pred_fallthru
          _
        // Predicated region
        $region41: #{tpu_custom_call.1} parent=31 // pred_check
          %p218 = pneg %p98
        $region42: #{tpu_custom_call.1} parent=31 // pred_check_branch
          %220 = sbr.rel (%p218) target = $region44
        $region43: #{tpu_custom_call.1} parent=31 // pred_region
          %222 = dma.done [#allocation6], 32
        $region44: #{tpu_custom_call.1} parent=31 // pred_fallthru
          _
        %s223 = sand.u32 %s43, 1
        %s224 = scalar_lea.sflag [#allocation3], %s223
        %s225 = sand.u32 %s43, 1
        %s226 = smul.addr %s225, 512
        %s227 = scalar_lea.vmem [#allocation2], %s226
        %p228 = pneg %p56
        %p229 = pneg %p53
        %p230 = pneg %p77
        %p231 = pneg %p74
        %p232 = pneg %p98
        %p233 = pneg %p95
        %p234 = pneg %p126
        %p235 = pneg %p123
        %s236 = sand.u32 %s113, 1
        %s237 = scalar_lea.sflag [#allocation4], %s236
        %s238 = sand.u32 %s113, 1
        %s239 = smul.addr %s238, 128
        %s240 = scalar_lea.vmem [#allocation8], %s239
        %s241 = smul.u32 32, %s26
        %s242 = smul.u32 16, %s26
        %v244 = vld [vmem:[%s207] sm:$0xf]
        %v245 = vld [vmem:[%s207 + $0x4] sm:$0xf]
        %v246 = vld [vmem:[%s207 + $0x8] sm:$0xf]
        %v247 = vld [vmem:[%s207 + $0xc] sm:$0xf]
        %v248 = vld [vmem:[%s207 + $0x10] sm:$0xf]
        %v249 = vld [vmem:[%s207 + $0x14] sm:$0xf]
        %v250 = vld [vmem:[%s207 + $0x18] sm:$0xf]
        %v251 = vld [vmem:[%s207 + $0x1c] sm:$0xf]
        %v252 = vld [vmem:[%s207 + $0x20] sm:$0xf]
        %v253 = vld [vmem:[%s207 + $0x24] sm:$0xf]
        %v254 = vld [vmem:[%s207 + $0x28] sm:$0xf]
        %v255 = vld [vmem:[%s207 + $0x2c] sm:$0xf]
        %v256 = vld [vmem:[%s207 + $0x30] sm:$0xf]
        %v257 = vld [vmem:[%s207 + $0x34] sm:$0xf]
        %v258 = vld [vmem:[%s207 + $0x38] sm:$0xf]
        %v259 = vld [vmem:[%s207 + $0x3c] sm:$0xf]
        %v260 = vld [vmem:[%s207 + $0x40] sm:$0xf]
        %v261 = vld [vmem:[%s207 + $0x44] sm:$0xf]
        %v262 = vld [vmem:[%s207 + $0x48] sm:$0xf]
        %v263 = vld [vmem:[%s207 + $0x4c] sm:$0xf]
        %v264 = vld [vmem:[%s207 + $0x50] sm:$0xf]
        %v265 = vld [vmem:[%s207 + $0x54] sm:$0xf]
        %v266 = vld [vmem:[%s207 + $0x58] sm:$0xf]
        %v267 = vld [vmem:[%s207 + $0x5c] sm:$0xf]
        %v268 = vld [vmem:[%s207 + $0x60] sm:$0xf]
        %v269 = vld [vmem:[%s207 + $0x64] sm:$0xf]
        %v270 = vld [vmem:[%s207 + $0x68] sm:$0xf]
        %v271 = vld [vmem:[%s207 + $0x6c] sm:$0xf]
        %v272 = vld [vmem:[%s207 + $0x70] sm:$0xf]
        %v273 = vld [vmem:[%s207 + $0x74] sm:$0xf]
        %v274 = vld [vmem:[%s207 + $0x78] sm:$0xf]
        %v275 = vld [vmem:[%s207 + $0x7c] sm:$0xf]
        %v276 = vld [vmem:[%s207 + $0x80] sm:$0xf]
        %v277 = vld [vmem:[%s207 + $0x84] sm:$0xf]
        %v278 = vld [vmem:[%s207 + $0x88] sm:$0xf]
        %v279 = vld [vmem:[%s207 + $0x8c] sm:$0xf]
        %v280 = vld [vmem:[%s207 + $0x90] sm:$0xf]
        %v281 = vld [vmem:[%s207 + $0x94] sm:$0xf]
        %v282 = vld [vmem:[%s207 + $0x98] sm:$0xf]
        %v283 = vld [vmem:[%s207 + $0x9c] sm:$0xf]
        %v284 = vld [vmem:[%s207 + $0xa0] sm:$0xf]
        %v285 = vld [vmem:[%s207 + $0xa4] sm:$0xf]
        %v286 = vld [vmem:[%s207 + $0xa8] sm:$0xf]
        %v287 = vld [vmem:[%s207 + $0xac] sm:$0xf]
        %v288 = vld [vmem:[%s207 + $0xb0] sm:$0xf]
        %v289 = vld [vmem:[%s207 + $0xb4] sm:$0xf]
        %v290 = vld [vmem:[%s207 + $0xb8] sm:$0xf]
        %v291 = vld [vmem:[%s207 + $0xbc] sm:$0xf]
        %v292 = vld [vmem:[%s207 + $0xc0] sm:$0xf]
        %v293 = vld [vmem:[%s207 + $0xc4] sm:$0xf]
        %v294 = vld [vmem:[%s207 + $0xc8] sm:$0xf]
        %v295 = vld [vmem:[%s207 + $0xcc] sm:$0xf]
        %v296 = vld [vmem:[%s207 + $0xd0] sm:$0xf]
        %v297 = vld [vmem:[%s207 + $0xd4] sm:$0xf]
        %v298 = vld [vmem:[%s207 + $0xd8] sm:$0xf]
        %v299 = vld [vmem:[%s207 + $0xdc] sm:$0xf]
        %v300 = vld [vmem:[%s207 + $0xe0] sm:$0xf]
        %v301 = vld [vmem:[%s207 + $0xe4] sm:$0xf]
        %v302 = vld [vmem:[%s207 + $0xe8] sm:$0xf]
        %v303 = vld [vmem:[%s207 + $0xec] sm:$0xf]
        %v304 = vld [vmem:[%s207 + $0xf0] sm:$0xf]
        %v305 = vld [vmem:[%s207 + $0xf4] sm:$0xf]
        %v306 = vld [vmem:[%s207 + $0xf8] sm:$0xf]
        %v307 = vld [vmem:[%s207 + $0xfc] sm:$0xf]
        %v308 = vld [vmem:[%s207 + $0x100] sm:$0xf]
        %v309 = vld [vmem:[%s207 + $0x104] sm:$0xf]
        %v310 = vld [vmem:[%s207 + $0x108] sm:$0xf]
        %v311 = vld [vmem:[%s207 + $0x10c] sm:$0xf]
        %v312 = vld [vmem:[%s207 + $0x110] sm:$0xf]
        %v313 = vld [vmem:[%s207 + $0x114] sm:$0xf]
        %v314 = vld [vmem:[%s207 + $0x118] sm:$0xf]
        %v315 = vld [vmem:[%s207 + $0x11c] sm:$0xf]
        %v316 = vld [vmem:[%s207 + $0x120] sm:$0xf]
        %v317 = vld [vmem:[%s207 + $0x124] sm:$0xf]
        %v318 = vld [vmem:[%s207 + $0x128] sm:$0xf]
        %v319 = vld [vmem:[%s207 + $0x12c] sm:$0xf]
        %v320 = vld [vmem:[%s207 + $0x130] sm:$0xf]
        %v321 = vld [vmem:[%s207 + $0x134] sm:$0xf]
        %v322 = vld [vmem:[%s207 + $0x138] sm:$0xf]
        %v323 = vld [vmem:[%s207 + $0x13c] sm:$0xf]
        %v324 = vld [vmem:[%s207 + $0x140] sm:$0xf]
        %v325 = vld [vmem:[%s207 + $0x144] sm:$0xf]
        %v326 = vld [vmem:[%s207 + $0x148] sm:$0xf]
        %v327 = vld [vmem:[%s207 + $0x14c] sm:$0xf]
        %v328 = vld [vmem:[%s207 + $0x150] sm:$0xf]
        %v329 = vld [vmem:[%s207 + $0x154] sm:$0xf]
        %v330 = vld [vmem:[%s207 + $0x158] sm:$0xf]
        %v331 = vld [vmem:[%s207 + $0x15c] sm:$0xf]
        %v332 = vld [vmem:[%s207 + $0x160] sm:$0xf]
        %v333 = vld [vmem:[%s207 + $0x164] sm:$0xf]
        %v334 = vld [vmem:[%s207 + $0x168] sm:$0xf]
        %v335 = vld [vmem:[%s207 + $0x16c] sm:$0xf]
        %v336 = vld [vmem:[%s207 + $0x170] sm:$0xf]
        %v337 = vld [vmem:[%s207 + $0x174] sm:$0xf]
        %v338 = vld [vmem:[%s207 + $0x178] sm:$0xf]
        %v339 = vld [vmem:[%s207 + $0x17c] sm:$0xf]
        %v340 = vld [vmem:[%s207 + $0x180] sm:$0xf]
        %v341 = vld [vmem:[%s207 + $0x184] sm:$0xf]
        %v342 = vld [vmem:[%s207 + $0x188] sm:$0xf]
        %v343 = vld [vmem:[%s207 + $0x18c] sm:$0xf]
        %v344 = vld [vmem:[%s207 + $0x190] sm:$0xf]
        %v345 = vld [vmem:[%s207 + $0x194] sm:$0xf]
        %v346 = vld [vmem:[%s207 + $0x198] sm:$0xf]
        %v347 = vld [vmem:[%s207 + $0x19c] sm:$0xf]
        %v348 = vld [vmem:[%s207 + $0x1a0] sm:$0xf]
        %v349 = vld [vmem:[%s207 + $0x1a4] sm:$0xf]
        %v350 = vld [vmem:[%s207 + $0x1a8] sm:$0xf]
        %v351 = vld [vmem:[%s207 + $0x1ac] sm:$0xf]
        %v352 = vld [vmem:[%s207 + $0x1b0] sm:$0xf]
        %v353 = vld [vmem:[%s207 + $0x1b4] sm:$0xf]
        %v354 = vld [vmem:[%s207 + $0x1b8] sm:$0xf]
        %v355 = vld [vmem:[%s207 + $0x1bc] sm:$0xf]
        %v356 = vld [vmem:[%s207 + $0x1c0] sm:$0xf]
        %v357 = vld [vmem:[%s207 + $0x1c4] sm:$0xf]
        %v358 = vld [vmem:[%s207 + $0x1c8] sm:$0xf]
        %v359 = vld [vmem:[%s207 + $0x1cc] sm:$0xf]
        %v360 = vld [vmem:[%s207 + $0x1d0] sm:$0xf]
        %v361 = vld [vmem:[%s207 + $0x1d4] sm:$0xf]
        %v362 = vld [vmem:[%s207 + $0x1d8] sm:$0xf]
        %v363 = vld [vmem:[%s207 + $0x1dc] sm:$0xf]
        %v364 = vld [vmem:[%s207 + $0x1e0] sm:$0xf]
        %v365 = vld [vmem:[%s207 + $0x1e4] sm:$0xf]
        %v366 = vld [vmem:[%s207 + $0x1e8] sm:$0xf]
        %v367 = vld [vmem:[%s207 + $0x1ec] sm:$0xf]
        %v368 = vld [vmem:[%s207 + $0x1f0] sm:$0xf]
        %v369 = vld [vmem:[%s207 + $0x1f4] sm:$0xf]
        %v370 = vld [vmem:[%s207 + $0x1f8] sm:$0xf]
        %v371 = vld [vmem:[%s207 + $0x1fc] sm:$0xf]
        %v372 = vld [vmem:[#allocation5] sm:$0xff]
        %v373 = vld [vmem:[#allocation5 + $0x8] sm:$0xff]
        %v374 = vld [vmem:[#allocation5 + $0x10] sm:$0xff]
        %v375 = vld [vmem:[#allocation5 + $0x18] sm:$0xff]
        %v376 = vld [vmem:[#allocation5 + $0x20] sm:$0xff]
        %v377 = vld [vmem:[#allocation5 + $0x28] sm:$0xff]
        %v378 = vld [vmem:[#allocation5 + $0x30] sm:$0xff]
        %v379 = vld [vmem:[#allocation5 + $0x38] sm:$0xff]
        %v380 = vld [vmem:[#allocation5 + $0x40] sm:$0xff]
        %v381 = vld [vmem:[#allocation5 + $0x48] sm:$0x33]
        %v382 = vld [vmem:[#allocation7] sm:$0x3]
        %v384 = vperm.slane %v382, 0
        %v385 = vperm.slane %v382, 1
        %v516 = vunpack.c.l.b16 %v244
        %v517 = vunpack.c.l.b16 %v245
        %v518 = vunpack.c.l.b16 %v246
        %v519 = vunpack.c.l.b16 %v247
        %v520 = vunpack.c.l.b16 %v248
        %v521 = vunpack.c.l.b16 %v249
        %v522 = vunpack.c.l.b16 %v250
        %v523 = vunpack.c.l.b16 %v251
        %v524 = vunpack.c.l.b16 %v252
        %v525 = vunpack.c.l.b16 %v253
        %v526 = vunpack.c.l.b16 %v254
        %v527 = vunpack.c.l.b16 %v255
        %v528 = vunpack.c.l.b16 %v256
        %v529 = vunpack.c.l.b16 %v257
        %v530 = vunpack.c.l.b16 %v258
        %v531 = vunpack.c.l.b16 %v259
        %v532 = vunpack.c.l.b16 %v260
        %v533 = vunpack.c.l.b16 %v261
        %v534 = vunpack.c.l.b16 %v262
        %v535 = vunpack.c.l.b16 %v263
        %v536 = vunpack.c.l.b16 %v264
        %v537 = vunpack.c.l.b16 %v265
        %v538 = vunpack.c.l.b16 %v266
        %v539 = vunpack.c.l.b16 %v267
        %v540 = vunpack.c.l.b16 %v268
        %v541 = vunpack.c.l.b16 %v269
        %v542 = vunpack.c.l.b16 %v270
        %v543 = vunpack.c.l.b16 %v271
        %v544 = vunpack.c.l.b16 %v272
        %v545 = vunpack.c.l.b16 %v273
        %v546 = vunpack.c.l.b16 %v274
        %v547 = vunpack.c.l.b16 %v275
        %v548 = vunpack.c.l.b16 %v276
        %v549 = vunpack.c.l.b16 %v277
        %v550 = vunpack.c.l.b16 %v278
        %v551 = vunpack.c.l.b16 %v279
        %v552 = vunpack.c.l.b16 %v280
        %v553 = vunpack.c.l.b16 %v281
        %v554 = vunpack.c.l.b16 %v282
        %v555 = vunpack.c.l.b16 %v283
        %v556 = vunpack.c.l.b16 %v284
        %v557 = vunpack.c.l.b16 %v285
        %v558 = vunpack.c.l.b16 %v286
        %v559 = vunpack.c.l.b16 %v287
        %v560 = vunpack.c.l.b16 %v288
        %v561 = vunpack.c.l.b16 %v289
        %v562 = vunpack.c.l.b16 %v290
        %v563 = vunpack.c.l.b16 %v291
        %v564 = vunpack.c.l.b16 %v292
        %v565 = vunpack.c.l.b16 %v293
        %v566 = vunpack.c.l.b16 %v294
        %v567 = vunpack.c.l.b16 %v295
        %v568 = vunpack.c.l.b16 %v296
        %v569 = vunpack.c.l.b16 %v297
        %v570 = vunpack.c.l.b16 %v298
        %v571 = vunpack.c.l.b16 %v299
        %v572 = vunpack.c.l.b16 %v300
        %v573 = vunpack.c.l.b16 %v301
        %v574 = vunpack.c.l.b16 %v302
        %v575 = vunpack.c.l.b16 %v303
        %v576 = vunpack.c.l.b16 %v304
        %v577 = vunpack.c.l.b16 %v305
        %v578 = vunpack.c.l.b16 %v306
        %v579 = vunpack.c.l.b16 %v307
        %v580 = vunpack.c.l.b16 %v308
        %v581 = vunpack.c.l.b16 %v309
        %v582 = vunpack.c.l.b16 %v310
        %v583 = vunpack.c.l.b16 %v311
        %v584 = vunpack.c.l.b16 %v312
        %v585 = vunpack.c.l.b16 %v313
        %v586 = vunpack.c.l.b16 %v314
        %v587 = vunpack.c.l.b16 %v315
        %v588 = vunpack.c.l.b16 %v316
        %v589 = vunpack.c.l.b16 %v317
        %v590 = vunpack.c.l.b16 %v318
        %v591 = vunpack.c.l.b16 %v319
        %v592 = vunpack.c.l.b16 %v320
        %v593 = vunpack.c.l.b16 %v321
        %v594 = vunpack.c.l.b16 %v322
        %v595 = vunpack.c.l.b16 %v323
        %v596 = vunpack.c.l.b16 %v324
        %v597 = vunpack.c.l.b16 %v325
        %v598 = vunpack.c.l.b16 %v326
        %v599 = vunpack.c.l.b16 %v327
        %v600 = vunpack.c.l.b16 %v328
        %v601 = vunpack.c.l.b16 %v329
        %v602 = vunpack.c.l.b16 %v330
        %v603 = vunpack.c.l.b16 %v331
        %v604 = vunpack.c.l.b16 %v332
        %v605 = vunpack.c.l.b16 %v333
        %v606 = vunpack.c.l.b16 %v334
        %v607 = vunpack.c.l.b16 %v335
        %v608 = vunpack.c.l.b16 %v336
        %v609 = vunpack.c.l.b16 %v337
        %v610 = vunpack.c.l.b16 %v338
        %v611 = vunpack.c.l.b16 %v339
        %v612 = vunpack.c.l.b16 %v340
        %v613 = vunpack.c.l.b16 %v341
        %v614 = vunpack.c.l.b16 %v342
        %v615 = vunpack.c.l.b16 %v343
        %v616 = vunpack.c.l.b16 %v344
        %v617 = vunpack.c.l.b16 %v345
        %v618 = vunpack.c.l.b16 %v346
        %v619 = vunpack.c.l.b16 %v347
        %v620 = vunpack.c.l.b16 %v348
        %v621 = vunpack.c.l.b16 %v349
        %v622 = vunpack.c.l.b16 %v350
        %v623 = vunpack.c.l.b16 %v351
        %v624 = vunpack.c.l.b16 %v352
        %v625 = vunpack.c.l.b16 %v353
        %v626 = vunpack.c.l.b16 %v354
        %v627 = vunpack.c.l.b16 %v355
        %v628 = vunpack.c.l.b16 %v356
        %v629 = vunpack.c.l.b16 %v357
        %v630 = vunpack.c.l.b16 %v358
        %v631 = vunpack.c.l.b16 %v359
        %v632 = vunpack.c.l.b16 %v360
        %v633 = vunpack.c.l.b16 %v361
        %v634 = vunpack.c.l.b16 %v362
        %v635 = vunpack.c.l.b16 %v363
        %v636 = vunpack.c.l.b16 %v364
        %v637 = vunpack.c.l.b16 %v365
        %v638 = vunpack.c.l.b16 %v366
        %v639 = vunpack.c.l.b16 %v367
        %v640 = vunpack.c.l.b16 %v368
        %v641 = vunpack.c.l.b16 %v369
        %v642 = vunpack.c.l.b16 %v370
        %v643 = vunpack.c.l.b16 %v371
        %v644 = vpack.c.b16 %v517, %v516
        %v645 = vpack.c.b16 %v519, %v518
        %v646 = vpack.c.b16 %v521, %v520
        %v647 = vpack.c.b16 %v523, %v522
        %v648 = vpack.c.b16 %v525, %v524
        %v649 = vpack.c.b16 %v527, %v526
        %v650 = vpack.c.b16 %v529, %v528
        %v651 = vpack.c.b16 %v531, %v530
        %v652 = vpack.c.b16 %v533, %v532
        %v653 = vpack.c.b16 %v535, %v534
        %v654 = vpack.c.b16 %v537, %v536
        %v655 = vpack.c.b16 %v539, %v538
        %v656 = vpack.c.b16 %v541, %v540
        %v657 = vpack.c.b16 %v543, %v542
        %v658 = vpack.c.b16 %v545, %v544
        %v659 = vpack.c.b16 %v547, %v546
        %v660 = vpack.c.b16 %v549, %v548
        %v661 = vpack.c.b16 %v551, %v550
        %v662 = vpack.c.b16 %v553, %v552
        %v663 = vpack.c.b16 %v555, %v554
        %v664 = vpack.c.b16 %v557, %v556
        %v665 = vpack.c.b16 %v559, %v558
        %v666 = vpack.c.b16 %v561, %v560
        %v667 = vpack.c.b16 %v563, %v562
        %v668 = vpack.c.b16 %v565, %v564
        %v669 = vpack.c.b16 %v567, %v566
        %v670 = vpack.c.b16 %v569, %v568
        %v671 = vpack.c.b16 %v571, %v570
        %v672 = vpack.c.b16 %v573, %v572
        %v673 = vpack.c.b16 %v575, %v574
        %v674 = vpack.c.b16 %v577, %v576
        %v675 = vpack.c.b16 %v579, %v578
        %v676 = vpack.c.b16 %v581, %v580
        %v677 = vpack.c.b16 %v583, %v582
        %v678 = vpack.c.b16 %v585, %v584
        %v679 = vpack.c.b16 %v587, %v586
        %v680 = vpack.c.b16 %v589, %v588
        %v681 = vpack.c.b16 %v591, %v590
        %v682 = vpack.c.b16 %v593, %v592
        %v683 = vpack.c.b16 %v595, %v594
        %v684 = vpack.c.b16 %v597, %v596
        %v685 = vpack.c.b16 %v599, %v598
        %v686 = vpack.c.b16 %v601, %v600
        %v687 = vpack.c.b16 %v603, %v602
        %v688 = vpack.c.b16 %v605, %v604
        %v689 = vpack.c.b16 %v607, %v606
        %v690 = vpack.c.b16 %v609, %v608
        %v691 = vpack.c.b16 %v611, %v610
        %v692 = vpack.c.b16 %v613, %v612
        %v693 = vpack.c.b16 %v615, %v614
        %v694 = vpack.c.b16 %v617, %v616
        %v695 = vpack.c.b16 %v619, %v618
        %v696 = vpack.c.b16 %v621, %v620
        %v697 = vpack.c.b16 %v623, %v622
        %v698 = vpack.c.b16 %v625, %v624
        %v699 = vpack.c.b16 %v627, %v626
        %v700 = vpack.c.b16 %v629, %v628
        %v701 = vpack.c.b16 %v631, %v630
        %v702 = vpack.c.b16 %v633, %v632
        %v703 = vpack.c.b16 %v635, %v634
        %v704 = vpack.c.b16 %v637, %v636
        %v705 = vpack.c.b16 %v639, %v638
        %v706 = vpack.c.b16 %v641, %v640
        %v707 = vpack.c.b16 %v643, %v642
        %v718 = vunpack.c.l.b16 %v372
        %v719 = vunpack.c.h.b16 %v372
        %v720 = vunpack.c.l.b16 %v373
        %v721 = vunpack.c.h.b16 %v373
        %v722 = vunpack.c.l.b16 %v374
        %v723 = vunpack.c.h.b16 %v374
        %v724 = vunpack.c.l.b16 %v375
        %v725 = vunpack.c.h.b16 %v375
        %v726 = vunpack.c.l.b16 %v376
        %v727 = vunpack.c.h.b16 %v376
        %v728 = vunpack.c.l.b16 %v377
        %v729 = vunpack.c.h.b16 %v377
        %v730 = vunpack.c.l.b16 %v378
        %v731 = vunpack.c.h.b16 %v378
        %v732 = vunpack.c.l.b16 %v379
        %v733 = vunpack.c.h.b16 %v379
        %v734 = vunpack.c.l.b16 %v380
        %v735 = vunpack.c.h.b16 %v380
        %v736 = vunpack.c.l.b16 %v381
        %v737 = vunpack.c.h.b16 %v381
        %v738 = vpack.c.b16 %v720, %v718
        %v739 = vpack.c.b16 %v721, %v719
        %v740 = vpack.c.b16 %v724, %v722
        %v741 = vpack.c.b16 %v725, %v723
        %v742 = vpack.c.b16 %v728, %v726
        %v743 = vpack.c.b16 %v729, %v727
        %v744 = vpack.c.b16 %v732, %v730
        %v745 = vpack.c.b16 %v733, %v731
        %v746 = vpack.c.b16 %v736, %v734
        %v747 = vpack.c.b16 %v737, %v735
        %vm756 = vcmask 613376
        %v758 = vsel %vm756, %v644, 0
        %v761 = vsel %vm756, %v645, 0
        %v764 = vsel %vm756, %v646, 0
        %v767 = vsel %vm756, %v647, 0
        %v770 = vsel %vm756, %v648, 0
        %v773 = vsel %vm756, %v649, 0
        %v776 = vsel %vm756, %v650, 0
        %v779 = vsel %vm756, %v651, 0
        %v782 = vsel %vm756, %v652, 0
        %v785 = vsel %vm756, %v653, 0
        %v788 = vsel %vm756, %v654, 0
        %v791 = vsel %vm756, %v655, 0
        %v794 = vsel %vm756, %v656, 0
        %v797 = vsel %vm756, %v657, 0
        %v800 = vsel %vm756, %v658, 0
        %v803 = vsel %vm756, %v659, 0
        %v806 = vsel %vm756, %v660, 0
        %v809 = vsel %vm756, %v661, 0
        %v812 = vsel %vm756, %v662, 0
        %v815 = vsel %vm756, %v663, 0
        %v818 = vsel %vm756, %v664, 0
        %v821 = vsel %vm756, %v665, 0
        %v824 = vsel %vm756, %v666, 0
        %v827 = vsel %vm756, %v667, 0
        %v830 = vsel %vm756, %v668, 0
        %v833 = vsel %vm756, %v669, 0
        %v836 = vsel %vm756, %v670, 0
        %v839 = vsel %vm756, %v671, 0
        %v842 = vsel %vm756, %v672, 0
        %v845 = vsel %vm756, %v673, 0
        %v848 = vsel %vm756, %v674, 0
        %v851 = vsel %vm756, %v675, 0
        %v854 = vsel %vm756, %v676, 0
        %v857 = vsel %vm756, %v677, 0
        %v860 = vsel %vm756, %v678, 0
        %v863 = vsel %vm756, %v679, 0
        %v866 = vsel %vm756, %v680, 0
        %v869 = vsel %vm756, %v681, 0
        %v872 = vsel %vm756, %v682, 0
        %v875 = vsel %vm756, %v683, 0
        %v878 = vsel %vm756, %v684, 0
        %v881 = vsel %vm756, %v685, 0
        %v884 = vsel %vm756, %v686, 0
        %v887 = vsel %vm756, %v687, 0
        %v890 = vsel %vm756, %v688, 0
        %v893 = vsel %vm756, %v689, 0
        %v896 = vsel %vm756, %v690, 0
        %v899 = vsel %vm756, %v691, 0
        %v902 = vsel %vm756, %v692, 0
        %v905 = vsel %vm756, %v693, 0
        %v908 = vsel %vm756, %v694, 0
        %v911 = vsel %vm756, %v695, 0
        %v914 = vsel %vm756, %v696, 0
        %v917 = vsel %vm756, %v697, 0
        %v920 = vsel %vm756, %v698, 0
        %v923 = vsel %vm756, %v699, 0
        %v926 = vsel %vm756, %v700, 0
        %v929 = vsel %vm756, %v701, 0
        %v932 = vsel %vm756, %v702, 0
        %v935 = vsel %vm756, %v703, 0
        %v938 = vsel %vm756, %v704, 0
        %v941 = vsel %vm756, %v705, 0
        %v944 = vsel %vm756, %v706, 0
        %v947 = vsel %vm756, %v707, 0
        %vm949 = vcmask 1044480
        %vm950 = vcmask 1045504
        %v951 = vsel %vm949, 4294967295, 65535
        %v952 = vsel %vm950, %v951, 0
        %v954 = vand.u32 %v746, %v952
        %v957 = vand.u32 %v747, %v952
        %959 = vmatpush.bf16.msra.mxu0 0
        %960 = vmatpush.bf16.msra.mxu0 0
        %961 = vmatpush.bf16.msra.mxu0 0
        %962 = vmatpush.bf16.msra.mxu0 %v954
        %963 = vmatpush.bf16.msra.mxu0 %v744
        %964 = vmatpush.bf16.msra.mxu0 %v742
        %965 = vmatpush.bf16.msra.mxu0 %v740
        %966 = vmatpush.bf16.msra.mxu0 %v738
        %967 = vmatmul.bf16.gmra.mxu0 %v758
        %v968 = vpop.f32.mrf.mxu0
        %v969 = vadd.f32 %v384, %v968
        %v970 = vpop.f32.mrf.mxu0
        %v971 = vadd.f32 %v384, %v970
        %972 = vmatmul.bf16.gmra.mxu0 %v761
        %v973 = vpop.f32.mrf.mxu0
        %v974 = vadd.f32 %v384, %v973
        %v975 = vpop.f32.mrf.mxu0
        %v976 = vadd.f32 %v384, %v975
        %977 = vmatmul.bf16.gmra.mxu0 %v764
        %v978 = vpop.f32.mrf.mxu0
        %v979 = vadd.f32 %v384, %v978
        %v980 = vpop.f32.mrf.mxu0
        %v981 = vadd.f32 %v384, %v980
        %982 = vmatmul.bf16.gmra.mxu0 %v767
        %v983 = vpop.f32.mrf.mxu0
        %v984 = vadd.f32 %v384, %v983
        %v985 = vpop.f32.mrf.mxu0
        %v986 = vadd.f32 %v384, %v985
        %987 = vmatmul.bf16.gmra.mxu0 %v770
        %v988 = vpop.f32.mrf.mxu0
        %v989 = vadd.f32 %v384, %v988
        %v990 = vpop.f32.mrf.mxu0
        %v991 = vadd.f32 %v384, %v990
        %992 = vmatmul.bf16.gmra.mxu0 %v773
        %v993 = vpop.f32.mrf.mxu0
        %v994 = vadd.f32 %v384, %v993
        %v995 = vpop.f32.mrf.mxu0
        %v996 = vadd.f32 %v384, %v995
        %997 = vmatmul.bf16.gmra.mxu0 %v776
        %v998 = vpop.f32.mrf.mxu0
        %v999 = vadd.f32 %v384, %v998
        %v1000 = vpop.f32.mrf.mxu0
        %v1001 = vadd.f32 %v384, %v1000
        %1002 = vmatmul.bf16.gmra.mxu0 %v779
        %v1003 = vpop.f32.mrf.mxu0
        %v1004 = vadd.f32 %v384, %v1003
        %v1005 = vpop.f32.mrf.mxu0
        %v1006 = vadd.f32 %v384, %v1005
        %1007 = vmatmul.bf16.gmra.mxu0 %v782
        %v1008 = vpop.f32.mrf.mxu0
        %v1009 = vadd.f32 %v384, %v1008
        %v1010 = vpop.f32.mrf.mxu0
        %v1011 = vadd.f32 %v384, %v1010
        %1012 = vmatmul.bf16.gmra.mxu0 %v785
        %v1013 = vpop.f32.mrf.mxu0
        %v1014 = vadd.f32 %v384, %v1013
        %v1015 = vpop.f32.mrf.mxu0
        %v1016 = vadd.f32 %v384, %v1015
        %1017 = vmatmul.bf16.gmra.mxu0 %v788
        %v1018 = vpop.f32.mrf.mxu0
        %v1019 = vadd.f32 %v384, %v1018
        %v1020 = vpop.f32.mrf.mxu0
        %v1021 = vadd.f32 %v384, %v1020
        %1022 = vmatmul.bf16.gmra.mxu0 %v791
        %v1023 = vpop.f32.mrf.mxu0
        %v1024 = vadd.f32 %v384, %v1023
        %v1025 = vpop.f32.mrf.mxu0
        %v1026 = vadd.f32 %v384, %v1025
        %1027 = vmatmul.bf16.gmra.mxu0 %v794
        %v1028 = vpop.f32.mrf.mxu0
        %v1029 = vadd.f32 %v384, %v1028
        %v1030 = vpop.f32.mrf.mxu0
        %v1031 = vadd.f32 %v384, %v1030
        %1032 = vmatmul.bf16.gmra.mxu0 %v797
        %v1033 = vpop.f32.mrf.mxu0
        %v1034 = vadd.f32 %v384, %v1033
        %v1035 = vpop.f32.mrf.mxu0
        %v1036 = vadd.f32 %v384, %v1035
        %1037 = vmatmul.bf16.gmra.mxu0 %v800
        %v1038 = vpop.f32.mrf.mxu0
        %v1039 = vadd.f32 %v384, %v1038
        %v1040 = vpop.f32.mrf.mxu0
        %v1041 = vadd.f32 %v384, %v1040
        %1042 = vmatmul.bf16.gmra.mxu0 %v803
        %v1043 = vpop.f32.mrf.mxu0
        %v1044 = vadd.f32 %v384, %v1043
        %v1045 = vpop.f32.mrf.mxu0
        %v1046 = vadd.f32 %v384, %v1045
        %1047 = vmatmul.bf16.gmra.mxu0 %v806
        %v1048 = vpop.f32.mrf.mxu0
        %v1049 = vadd.f32 %v384, %v1048
        %v1050 = vpop.f32.mrf.mxu0
        %v1051 = vadd.f32 %v384, %v1050
        %1052 = vmatmul.bf16.gmra.mxu0 %v809
        %v1053 = vpop.f32.mrf.mxu0
        %v1054 = vadd.f32 %v384, %v1053
        %v1055 = vpop.f32.mrf.mxu0
        %v1056 = vadd.f32 %v384, %v1055
        %1057 = vmatmul.bf16.gmra.mxu0 %v812
        %v1058 = vpop.f32.mrf.mxu0
        %v1059 = vadd.f32 %v384, %v1058
        %v1060 = vpop.f32.mrf.mxu0
        %v1061 = vadd.f32 %v384, %v1060
        %1062 = vmatmul.bf16.gmra.mxu0 %v815
        %v1063 = vpop.f32.mrf.mxu0
        %v1064 = vadd.f32 %v384, %v1063
        %v1065 = vpop.f32.mrf.mxu0
        %v1066 = vadd.f32 %v384, %v1065
        %1067 = vmatmul.bf16.gmra.mxu0 %v818
        %v1068 = vpop.f32.mrf.mxu0
        %v1069 = vadd.f32 %v384, %v1068
        %v1070 = vpop.f32.mrf.mxu0
        %v1071 = vadd.f32 %v384, %v1070
        %1072 = vmatmul.bf16.gmra.mxu0 %v821
        %v1073 = vpop.f32.mrf.mxu0
        %v1074 = vadd.f32 %v384, %v1073
        %v1075 = vpop.f32.mrf.mxu0
        %v1076 = vadd.f32 %v384, %v1075
        %1077 = vmatmul.bf16.gmra.mxu0 %v824
        %v1078 = vpop.f32.mrf.mxu0
        %v1079 = vadd.f32 %v384, %v1078
        %v1080 = vpop.f32.mrf.mxu0
        %v1081 = vadd.f32 %v384, %v1080
        %1082 = vmatmul.bf16.gmra.mxu0 %v827
        %v1083 = vpop.f32.mrf.mxu0
        %v1084 = vadd.f32 %v384, %v1083
        %v1085 = vpop.f32.mrf.mxu0
        %v1086 = vadd.f32 %v384, %v1085
        %1087 = vmatmul.bf16.gmra.mxu0 %v830
        %v1088 = vpop.f32.mrf.mxu0
        %v1089 = vadd.f32 %v384, %v1088
        %v1090 = vpop.f32.mrf.mxu0
        %v1091 = vadd.f32 %v384, %v1090
        %1092 = vmatmul.bf16.gmra.mxu0 %v833
        %v1093 = vpop.f32.mrf.mxu0
        %v1094 = vadd.f32 %v384, %v1093
        %v1095 = vpop.f32.mrf.mxu0
        %v1096 = vadd.f32 %v384, %v1095
        %1097 = vmatmul.bf16.gmra.mxu0 %v836
        %v1098 = vpop.f32.mrf.mxu0
        %v1099 = vadd.f32 %v384, %v1098
        %v1100 = vpop.f32.mrf.mxu0
        %v1101 = vadd.f32 %v384, %v1100
        %1102 = vmatmul.bf16.gmra.mxu0 %v839
        %v1103 = vpop.f32.mrf.mxu0
        %v1104 = vadd.f32 %v384, %v1103
        %v1105 = vpop.f32.mrf.mxu0
        %v1106 = vadd.f32 %v384, %v1105
        %1107 = vmatmul.bf16.gmra.mxu0 %v842
        %v1108 = vpop.f32.mrf.mxu0
        %v1109 = vadd.f32 %v384, %v1108
        %v1110 = vpop.f32.mrf.mxu0
        %v1111 = vadd.f32 %v384, %v1110
        %1112 = vmatmul.bf16.gmra.mxu0 %v845
        %v1113 = vpop.f32.mrf.mxu0
        %v1114 = vadd.f32 %v384, %v1113
        %v1115 = vpop.f32.mrf.mxu0
        %v1116 = vadd.f32 %v384, %v1115
        %1117 = vmatmul.bf16.gmra.mxu0 %v848
        %v1118 = vpop.f32.mrf.mxu0
        %v1119 = vadd.f32 %v384, %v1118
        %v1120 = vpop.f32.mrf.mxu0
        %v1121 = vadd.f32 %v384, %v1120
        %1122 = vmatmul.bf16.gmra.mxu0 %v851
        %v1123 = vpop.f32.mrf.mxu0
        %v1124 = vadd.f32 %v384, %v1123
        %v1125 = vpop.f32.mrf.mxu0
        %v1126 = vadd.f32 %v384, %v1125
        %1127 = vmatmul.bf16.gmra.mxu0 %v854
        %v1128 = vpop.f32.mrf.mxu0
        %v1129 = vadd.f32 %v384, %v1128
        %v1130 = vpop.f32.mrf.mxu0
        %v1131 = vadd.f32 %v384, %v1130
        %1132 = vmatmul.bf16.gmra.mxu0 %v857
        %v1133 = vpop.f32.mrf.mxu0
        %v1134 = vadd.f32 %v384, %v1133
        %v1135 = vpop.f32.mrf.mxu0
        %v1136 = vadd.f32 %v384, %v1135
        %1137 = vmatmul.bf16.gmra.mxu0 %v860
        %v1138 = vpop.f32.mrf.mxu0
        %v1139 = vadd.f32 %v384, %v1138
        %v1140 = vpop.f32.mrf.mxu0
        %v1141 = vadd.f32 %v384, %v1140
        %1142 = vmatmul.bf16.gmra.mxu0 %v863
        %v1143 = vpop.f32.mrf.mxu0
        %v1144 = vadd.f32 %v384, %v1143
        %v1145 = vpop.f32.mrf.mxu0
        %v1146 = vadd.f32 %v384, %v1145
        %1147 = vmatmul.bf16.gmra.mxu0 %v866
        %v1148 = vpop.f32.mrf.mxu0
        %v1149 = vadd.f32 %v384, %v1148
        %v1150 = vpop.f32.mrf.mxu0
        %v1151 = vadd.f32 %v384, %v1150
        %1152 = vmatmul.bf16.gmra.mxu0 %v869
        %v1153 = vpop.f32.mrf.mxu0
        %v1154 = vadd.f32 %v384, %v1153
        %v1155 = vpop.f32.mrf.mxu0
        %v1156 = vadd.f32 %v384, %v1155
        %1157 = vmatmul.bf16.gmra.mxu0 %v872
        %v1158 = vpop.f32.mrf.mxu0
        %v1159 = vadd.f32 %v384, %v1158
        %v1160 = vpop.f32.mrf.mxu0
        %v1161 = vadd.f32 %v384, %v1160
        %1162 = vmatmul.bf16.gmra.mxu0 %v875
        %v1163 = vpop.f32.mrf.mxu0
        %v1164 = vadd.f32 %v384, %v1163
        %v1165 = vpop.f32.mrf.mxu0
        %v1166 = vadd.f32 %v384, %v1165
        %1167 = vmatmul.bf16.gmra.mxu0 %v878
        %v1168 = vpop.f32.mrf.mxu0
        %v1169 = vadd.f32 %v384, %v1168
        %v1170 = vpop.f32.mrf.mxu0
        %v1171 = vadd.f32 %v384, %v1170
        %1172 = vmatmul.bf16.gmra.mxu0 %v881
        %v1173 = vpop.f32.mrf.mxu0
        %v1174 = vadd.f32 %v384, %v1173
        %v1175 = vpop.f32.mrf.mxu0
        %v1176 = vadd.f32 %v384, %v1175
        %1177 = vmatmul.bf16.gmra.mxu0 %v884
        %v1178 = vpop.f32.mrf.mxu0
        %v1179 = vadd.f32 %v384, %v1178
        %v1180 = vpop.f32.mrf.mxu0
        %v1181 = vadd.f32 %v384, %v1180
        %1182 = vmatmul.bf16.gmra.mxu0 %v887
        %v1183 = vpop.f32.mrf.mxu0
        %v1184 = vadd.f32 %v384, %v1183
        %v1185 = vpop.f32.mrf.mxu0
        %v1186 = vadd.f32 %v384, %v1185
        %1187 = vmatmul.bf16.gmra.mxu0 %v890
        %v1188 = vpop.f32.mrf.mxu0
        %v1189 = vadd.f32 %v384, %v1188
        %v1190 = vpop.f32.mrf.mxu0
        %v1191 = vadd.f32 %v384, %v1190
        %1192 = vmatmul.bf16.gmra.mxu0 %v893
        %v1193 = vpop.f32.mrf.mxu0
        %v1194 = vadd.f32 %v384, %v1193
        %v1195 = vpop.f32.mrf.mxu0
        %v1196 = vadd.f32 %v384, %v1195
        %1197 = vmatmul.bf16.gmra.mxu0 %v896
        %v1198 = vpop.f32.mrf.mxu0
        %v1199 = vadd.f32 %v384, %v1198
        %v1200 = vpop.f32.mrf.mxu0
        %v1201 = vadd.f32 %v384, %v1200
        %1202 = vmatmul.bf16.gmra.mxu0 %v899
        %v1203 = vpop.f32.mrf.mxu0
        %v1204 = vadd.f32 %v384, %v1203
        %v1205 = vpop.f32.mrf.mxu0
        %v1206 = vadd.f32 %v384, %v1205
        %1207 = vmatmul.bf16.gmra.mxu0 %v902
        %v1208 = vpop.f32.mrf.mxu0
        %v1209 = vadd.f32 %v384, %v1208
        %v1210 = vpop.f32.mrf.mxu0
        %v1211 = vadd.f32 %v384, %v1210
        %1212 = vmatmul.bf16.gmra.mxu0 %v905
        %v1213 = vpop.f32.mrf.mxu0
        %v1214 = vadd.f32 %v384, %v1213
        %v1215 = vpop.f32.mrf.mxu0
        %v1216 = vadd.f32 %v384, %v1215
        %1217 = vmatmul.bf16.gmra.mxu0 %v908
        %v1218 = vpop.f32.mrf.mxu0
        %v1219 = vadd.f32 %v384, %v1218
        %v1220 = vpop.f32.mrf.mxu0
        %v1221 = vadd.f32 %v384, %v1220
        %1222 = vmatmul.bf16.gmra.mxu0 %v911
        %v1223 = vpop.f32.mrf.mxu0
        %v1224 = vadd.f32 %v384, %v1223
        %v1225 = vpop.f32.mrf.mxu0
        %v1226 = vadd.f32 %v384, %v1225
        %1227 = vmatmul.bf16.gmra.mxu0 %v914
        %v1228 = vpop.f32.mrf.mxu0
        %v1229 = vadd.f32 %v384, %v1228
        %v1230 = vpop.f32.mrf.mxu0
        %v1231 = vadd.f32 %v384, %v1230
        %1232 = vmatmul.bf16.gmra.mxu0 %v917
        %v1233 = vpop.f32.mrf.mxu0
        %v1234 = vadd.f32 %v384, %v1233
        %v1235 = vpop.f32.mrf.mxu0
        %v1236 = vadd.f32 %v384, %v1235
        %1237 = vmatmul.bf16.gmra.mxu0 %v920
        %v1238 = vpop.f32.mrf.mxu0
        %v1239 = vadd.f32 %v384, %v1238
        %v1240 = vpop.f32.mrf.mxu0
        %v1241 = vadd.f32 %v384, %v1240
        %1242 = vmatmul.bf16.gmra.mxu0 %v923
        %v1243 = vpop.f32.mrf.mxu0
        %v1244 = vadd.f32 %v384, %v1243
        %v1245 = vpop.f32.mrf.mxu0
        %v1246 = vadd.f32 %v384, %v1245
        %1247 = vmatmul.bf16.gmra.mxu0 %v926
        %v1248 = vpop.f32.mrf.mxu0
        %v1249 = vadd.f32 %v384, %v1248
        %v1250 = vpop.f32.mrf.mxu0
        %v1251 = vadd.f32 %v384, %v1250
        %1252 = vmatmul.bf16.gmra.mxu0 %v929
        %v1253 = vpop.f32.mrf.mxu0
        %v1254 = vadd.f32 %v384, %v1253
        %v1255 = vpop.f32.mrf.mxu0
        %v1256 = vadd.f32 %v384, %v1255
        %1257 = vmatmul.bf16.gmra.mxu0 %v932
        %v1258 = vpop.f32.mrf.mxu0
        %v1259 = vadd.f32 %v384, %v1258
        %v1260 = vpop.f32.mrf.mxu0
        %v1261 = vadd.f32 %v384, %v1260
        %1262 = vmatmul.bf16.gmra.mxu0 %v935
        %v1263 = vpop.f32.mrf.mxu0
        %v1264 = vadd.f32 %v384, %v1263
        %v1265 = vpop.f32.mrf.mxu0
        %v1266 = vadd.f32 %v384, %v1265
        %1267 = vmatmul.bf16.gmra.mxu0 %v938
        %v1268 = vpop.f32.mrf.mxu0
        %v1269 = vadd.f32 %v384, %v1268
        %v1270 = vpop.f32.mrf.mxu0
        %v1271 = vadd.f32 %v384, %v1270
        %1272 = vmatmul.bf16.gmra.mxu0 %v941
        %v1273 = vpop.f32.mrf.mxu0
        %v1274 = vadd.f32 %v384, %v1273
        %v1275 = vpop.f32.mrf.mxu0
        %v1276 = vadd.f32 %v384, %v1275
        %1277 = vmatmul.bf16.gmra.mxu0 %v944
        %v1278 = vpop.f32.mrf.mxu0
        %v1279 = vadd.f32 %v384, %v1278
        %v1280 = vpop.f32.mrf.mxu0
        %v1281 = vadd.f32 %v384, %v1280
        %1282 = vmatmul.bf16.gmra.mxu0 %v947
        %v1283 = vpop.f32.mrf.mxu0
        %v1284 = vadd.f32 %v384, %v1283
        %v1285 = vpop.f32.mrf.mxu0
        %v1286 = vadd.f32 %v384, %v1285
        %1287 = vdwg.mxu0
        %1288 = vmatpush.bf16.msra.mxu0 0
        %1289 = vmatpush.bf16.msra.mxu0 0
        %1290 = vmatpush.bf16.msra.mxu0 0
        %1291 = vmatpush.bf16.msra.mxu0 %v957
        %1292 = vmatpush.bf16.msra.mxu0 %v745
        %1293 = vmatpush.bf16.msra.mxu0 %v743
        %1294 = vmatpush.bf16.msra.mxu0 %v741
        %1295 = vmatpush.bf16.msra.mxu0 %v739
        %1296 = vmatmul.bf16.gmra.mxu0 %v758
        %v1297 = vpop.f32.mrf.mxu0
        %v1298 = vadd.f32 %v385, %v1297
        %v1299 = vpop.f32.mrf.mxu0
        %v1300 = vadd.f32 %v385, %v1299
        %1301 = vmatmul.bf16.gmra.mxu0 %v761
        %v1302 = vpop.f32.mrf.mxu0
        %v1303 = vadd.f32 %v385, %v1302
        %v1304 = vpop.f32.mrf.mxu0
        %v1305 = vadd.f32 %v385, %v1304
        %1306 = vmatmul.bf16.gmra.mxu0 %v764
        %v1307 = vpop.f32.mrf.mxu0
        %v1308 = vadd.f32 %v385, %v1307
        %v1309 = vpop.f32.mrf.mxu0
        %v1310 = vadd.f32 %v385, %v1309
        %1311 = vmatmul.bf16.gmra.mxu0 %v767
        %v1312 = vpop.f32.mrf.mxu0
        %v1313 = vadd.f32 %v385, %v1312
        %v1314 = vpop.f32.mrf.mxu0
        %v1315 = vadd.f32 %v385, %v1314
        %1316 = vmatmul.bf16.gmra.mxu0 %v770
        %v1317 = vpop.f32.mrf.mxu0
        %v1318 = vadd.f32 %v385, %v1317
        %v1319 = vpop.f32.mrf.mxu0
        %v1320 = vadd.f32 %v385, %v1319
        %1321 = vmatmul.bf16.gmra.mxu0 %v773
        %v1322 = vpop.f32.mrf.mxu0
        %v1323 = vadd.f32 %v385, %v1322
        %v1324 = vpop.f32.mrf.mxu0
        %v1325 = vadd.f32 %v385, %v1324
        %1326 = vmatmul.bf16.gmra.mxu0 %v776
        %v1327 = vpop.f32.mrf.mxu0
        %v1328 = vadd.f32 %v385, %v1327
        %v1329 = vpop.f32.mrf.mxu0
        %v1330 = vadd.f32 %v385, %v1329
        %1331 = vmatmul.bf16.gmra.mxu0 %v779
        %v1332 = vpop.f32.mrf.mxu0
        %v1333 = vadd.f32 %v385, %v1332
        %v1334 = vpop.f32.mrf.mxu0
        %v1335 = vadd.f32 %v385, %v1334
        %1336 = vmatmul.bf16.gmra.mxu0 %v782
        %v1337 = vpop.f32.mrf.mxu0
        %v1338 = vadd.f32 %v385, %v1337
        %v1339 = vpop.f32.mrf.mxu0
        %v1340 = vadd.f32 %v385, %v1339
        %1341 = vmatmul.bf16.gmra.mxu0 %v785
        %v1342 = vpop.f32.mrf.mxu0
        %v1343 = vadd.f32 %v385, %v1342
        %v1344 = vpop.f32.mrf.mxu0
        %v1345 = vadd.f32 %v385, %v1344
        %1346 = vmatmul.bf16.gmra.mxu0 %v788
        %v1347 = vpop.f32.mrf.mxu0
        %v1348 = vadd.f32 %v385, %v1347
        %v1349 = vpop.f32.mrf.mxu0
        %v1350 = vadd.f32 %v385, %v1349
        %1351 = vmatmul.bf16.gmra.mxu0 %v791
        %v1352 = vpop.f32.mrf.mxu0
        %v1353 = vadd.f32 %v385, %v1352
        %v1354 = vpop.f32.mrf.mxu0
        %v1355 = vadd.f32 %v385, %v1354
        %1356 = vmatmul.bf16.gmra.mxu0 %v794
        %v1357 = vpop.f32.mrf.mxu0
        %v1358 = vadd.f32 %v385, %v1357
        %v1359 = vpop.f32.mrf.mxu0
        %v1360 = vadd.f32 %v385, %v1359
        %1361 = vmatmul.bf16.gmra.mxu0 %v797
        %v1362 = vpop.f32.mrf.mxu0
        %v1363 = vadd.f32 %v385, %v1362
        %v1364 = vpop.f32.mrf.mxu0
        %v1365 = vadd.f32 %v385, %v1364
        %1366 = vmatmul.bf16.gmra.mxu0 %v800
        %v1367 = vpop.f32.mrf.mxu0
        %v1368 = vadd.f32 %v385, %v1367
        %v1369 = vpop.f32.mrf.mxu0
        %v1370 = vadd.f32 %v385, %v1369
        %1371 = vmatmul.bf16.gmra.mxu0 %v803
        %v1372 = vpop.f32.mrf.mxu0
        %v1373 = vadd.f32 %v385, %v1372
        %v1374 = vpop.f32.mrf.mxu0
        %v1375 = vadd.f32 %v385, %v1374
        %1376 = vmatmul.bf16.gmra.mxu0 %v806
        %v1377 = vpop.f32.mrf.mxu0
        %v1378 = vadd.f32 %v385, %v1377
        %v1379 = vpop.f32.mrf.mxu0
        %v1380 = vadd.f32 %v385, %v1379
        %1381 = vmatmul.bf16.gmra.mxu0 %v809
        %v1382 = vpop.f32.mrf.mxu0
        %v1383 = vadd.f32 %v385, %v1382
        %v1384 = vpop.f32.mrf.mxu0
        %v1385 = vadd.f32 %v385, %v1384
        %1386 = vmatmul.bf16.gmra.mxu0 %v812
        %v1387 = vpop.f32.mrf.mxu0
        %v1388 = vadd.f32 %v385, %v1387
        %v1389 = vpop.f32.mrf.mxu0
        %v1390 = vadd.f32 %v385, %v1389
        %1391 = vmatmul.bf16.gmra.mxu0 %v815
        %v1392 = vpop.f32.mrf.mxu0
        %v1393 = vadd.f32 %v385, %v1392
        %v1394 = vpop.f32.mrf.mxu0
        %v1395 = vadd.f32 %v385, %v1394
        %1396 = vmatmul.bf16.gmra.mxu0 %v818
        %v1397 = vpop.f32.mrf.mxu0
        %v1398 = vadd.f32 %v385, %v1397
        %v1399 = vpop.f32.mrf.mxu0
        %v1400 = vadd.f32 %v385, %v1399
        %1401 = vmatmul.bf16.gmra.mxu0 %v821
        %v1402 = vpop.f32.mrf.mxu0
        %v1403 = vadd.f32 %v385, %v1402
        %v1404 = vpop.f32.mrf.mxu0
        %v1405 = vadd.f32 %v385, %v1404
        %1406 = vmatmul.bf16.gmra.mxu0 %v824
        %v1407 = vpop.f32.mrf.mxu0
        %v1408 = vadd.f32 %v385, %v1407
        %v1409 = vpop.f32.mrf.mxu0
        %v1410 = vadd.f32 %v385, %v1409
        %1411 = vmatmul.bf16.gmra.mxu0 %v827
        %v1412 = vpop.f32.mrf.mxu0
        %v1413 = vadd.f32 %v385, %v1412
        %v1414 = vpop.f32.mrf.mxu0
        %v1415 = vadd.f32 %v385, %v1414
        %1416 = vmatmul.bf16.gmra.mxu0 %v830
        %v1417 = vpop.f32.mrf.mxu0
        %v1418 = vadd.f32 %v385, %v1417
        %v1419 = vpop.f32.mrf.mxu0
        %v1420 = vadd.f32 %v385, %v1419
        %1421 = vmatmul.bf16.gmra.mxu0 %v833
        %v1422 = vpop.f32.mrf.mxu0
        %v1423 = vadd.f32 %v385, %v1422
        %v1424 = vpop.f32.mrf.mxu0
        %v1425 = vadd.f32 %v385, %v1424
        %1426 = vmatmul.bf16.gmra.mxu0 %v836
        %v1427 = vpop.f32.mrf.mxu0
        %v1428 = vadd.f32 %v385, %v1427
        %v1429 = vpop.f32.mrf.mxu0
        %v1430 = vadd.f32 %v385, %v1429
        %1431 = vmatmul.bf16.gmra.mxu0 %v839
        %v1432 = vpop.f32.mrf.mxu0
        %v1433 = vadd.f32 %v385, %v1432
        %v1434 = vpop.f32.mrf.mxu0
        %v1435 = vadd.f32 %v385, %v1434
        %1436 = vmatmul.bf16.gmra.mxu0 %v842
        %v1437 = vpop.f32.mrf.mxu0
        %v1438 = vadd.f32 %v385, %v1437
        %v1439 = vpop.f32.mrf.mxu0
        %v1440 = vadd.f32 %v385, %v1439
        %1441 = vmatmul.bf16.gmra.mxu0 %v845
        %v1442 = vpop.f32.mrf.mxu0
        %v1443 = vadd.f32 %v385, %v1442
        %v1444 = vpop.f32.mrf.mxu0
        %v1445 = vadd.f32 %v385, %v1444
        %1446 = vmatmul.bf16.gmra.mxu0 %v848
        %v1447 = vpop.f32.mrf.mxu0
        %v1448 = vadd.f32 %v385, %v1447
        %v1449 = vpop.f32.mrf.mxu0
        %v1450 = vadd.f32 %v385, %v1449
        %1451 = vmatmul.bf16.gmra.mxu0 %v851
        %v1452 = vpop.f32.mrf.mxu0
        %v1453 = vadd.f32 %v385, %v1452
        %v1454 = vpop.f32.mrf.mxu0
        %v1455 = vadd.f32 %v385, %v1454
        %1456 = vmatmul.bf16.gmra.mxu0 %v854
        %v1457 = vpop.f32.mrf.mxu0
        %v1458 = vadd.f32 %v385, %v1457
        %v1459 = vpop.f32.mrf.mxu0
        %v1460 = vadd.f32 %v385, %v1459
        %1461 = vmatmul.bf16.gmra.mxu0 %v857
        %v1462 = vpop.f32.mrf.mxu0
        %v1463 = vadd.f32 %v385, %v1462
        %v1464 = vpop.f32.mrf.mxu0
        %v1465 = vadd.f32 %v385, %v1464
        %1466 = vmatmul.bf16.gmra.mxu0 %v860
        %v1467 = vpop.f32.mrf.mxu0
        %v1468 = vadd.f32 %v385, %v1467
        %v1469 = vpop.f32.mrf.mxu0
        %v1470 = vadd.f32 %v385, %v1469
        %1471 = vmatmul.bf16.gmra.mxu0 %v863
        %v1472 = vpop.f32.mrf.mxu0
        %v1473 = vadd.f32 %v385, %v1472
        %v1474 = vpop.f32.mrf.mxu0
        %v1475 = vadd.f32 %v385, %v1474
        %1476 = vmatmul.bf16.gmra.mxu0 %v866
        %v1477 = vpop.f32.mrf.mxu0
        %v1478 = vadd.f32 %v385, %v1477
        %v1479 = vpop.f32.mrf.mxu0
        %v1480 = vadd.f32 %v385, %v1479
        %1481 = vmatmul.bf16.gmra.mxu0 %v869
        %v1482 = vpop.f32.mrf.mxu0
        %v1483 = vadd.f32 %v385, %v1482
        %v1484 = vpop.f32.mrf.mxu0
        %v1485 = vadd.f32 %v385, %v1484
        %1486 = vmatmul.bf16.gmra.mxu0 %v872
        %v1487 = vpop.f32.mrf.mxu0
        %v1488 = vadd.f32 %v385, %v1487
        %v1489 = vpop.f32.mrf.mxu0
        %v1490 = vadd.f32 %v385, %v1489
        %1491 = vmatmul.bf16.gmra.mxu0 %v875
        %v1492 = vpop.f32.mrf.mxu0
        %v1493 = vadd.f32 %v385, %v1492
        %v1494 = vpop.f32.mrf.mxu0
        %v1495 = vadd.f32 %v385, %v1494
        %1496 = vmatmul.bf16.gmra.mxu0 %v878
        %v1497 = vpop.f32.mrf.mxu0
        %v1498 = vadd.f32 %v385, %v1497
        %v1499 = vpop.f32.mrf.mxu0
        %v1500 = vadd.f32 %v385, %v1499
        %1501 = vmatmul.bf16.gmra.mxu0 %v881
        %v1502 = vpop.f32.mrf.mxu0
        %v1503 = vadd.f32 %v385, %v1502
        %v1504 = vpop.f32.mrf.mxu0
        %v1505 = vadd.f32 %v385, %v1504
        %1506 = vmatmul.bf16.gmra.mxu0 %v884
        %v1507 = vpop.f32.mrf.mxu0
        %v1508 = vadd.f32 %v385, %v1507
        %v1509 = vpop.f32.mrf.mxu0
        %v1510 = vadd.f32 %v385, %v1509
        %1511 = vmatmul.bf16.gmra.mxu0 %v887
        %v1512 = vpop.f32.mrf.mxu0
        %v1513 = vadd.f32 %v385, %v1512
        %v1514 = vpop.f32.mrf.mxu0
        %v1515 = vadd.f32 %v385, %v1514
        %1516 = vmatmul.bf16.gmra.mxu0 %v890
        %v1517 = vpop.f32.mrf.mxu0
        %v1518 = vadd.f32 %v385, %v1517
        %v1519 = vpop.f32.mrf.mxu0
        %v1520 = vadd.f32 %v385, %v1519
        %1521 = vmatmul.bf16.gmra.mxu0 %v893
        %v1522 = vpop.f32.mrf.mxu0
        %v1523 = vadd.f32 %v385, %v1522
        %v1524 = vpop.f32.mrf.mxu0
        %v1525 = vadd.f32 %v385, %v1524
        %1526 = vmatmul.bf16.gmra.mxu0 %v896
        %v1527 = vpop.f32.mrf.mxu0
        %v1528 = vadd.f32 %v385, %v1527
        %v1529 = vpop.f32.mrf.mxu0
        %v1530 = vadd.f32 %v385, %v1529
        %1531 = vmatmul.bf16.gmra.mxu0 %v899
        %v1532 = vpop.f32.mrf.mxu0
        %v1533 = vadd.f32 %v385, %v1532
        %v1534 = vpop.f32.mrf.mxu0
        %v1535 = vadd.f32 %v385, %v1534
        %1536 = vmatmul.bf16.gmra.mxu0 %v902
        %v1537 = vpop.f32.mrf.mxu0
        %v1538 = vadd.f32 %v385, %v1537
        %v1539 = vpop.f32.mrf.mxu0
        %v1540 = vadd.f32 %v385, %v1539
        %1541 = vmatmul.bf16.gmra.mxu0 %v905
        %v1542 = vpop.f32.mrf.mxu0
        %v1543 = vadd.f32 %v385, %v1542
        %v1544 = vpop.f32.mrf.mxu0
        %v1545 = vadd.f32 %v385, %v1544
        %1546 = vmatmul.bf16.gmra.mxu0 %v908
        %v1547 = vpop.f32.mrf.mxu0
        %v1548 = vadd.f32 %v385, %v1547
        %v1549 = vpop.f32.mrf.mxu0
        %v1550 = vadd.f32 %v385, %v1549
        %1551 = vmatmul.bf16.gmra.mxu0 %v911
        %v1552 = vpop.f32.mrf.mxu0
        %v1553 = vadd.f32 %v385, %v1552
        %v1554 = vpop.f32.mrf.mxu0
        %v1555 = vadd.f32 %v385, %v1554
        %1556 = vmatmul.bf16.gmra.mxu0 %v914
        %v1557 = vpop.f32.mrf.mxu0
        %v1558 = vadd.f32 %v385, %v1557
        %v1559 = vpop.f32.mrf.mxu0
        %v1560 = vadd.f32 %v385, %v1559
        %1561 = vmatmul.bf16.gmra.mxu0 %v917
        %v1562 = vpop.f32.mrf.mxu0
        %v1563 = vadd.f32 %v385, %v1562
        %v1564 = vpop.f32.mrf.mxu0
        %v1565 = vadd.f32 %v385, %v1564
        %1566 = vmatmul.bf16.gmra.mxu0 %v920
        %v1567 = vpop.f32.mrf.mxu0
        %v1568 = vadd.f32 %v385, %v1567
        %v1569 = vpop.f32.mrf.mxu0
        %v1570 = vadd.f32 %v385, %v1569
        %1571 = vmatmul.bf16.gmra.mxu0 %v923
        %v1572 = vpop.f32.mrf.mxu0
        %v1573 = vadd.f32 %v385, %v1572
        %v1574 = vpop.f32.mrf.mxu0
        %v1575 = vadd.f32 %v385, %v1574
        %1576 = vmatmul.bf16.gmra.mxu0 %v926
        %v1577 = vpop.f32.mrf.mxu0
        %v1578 = vadd.f32 %v385, %v1577
        %v1579 = vpop.f32.mrf.mxu0
        %v1580 = vadd.f32 %v385, %v1579
        %1581 = vmatmul.bf16.gmra.mxu0 %v929
        %v1582 = vpop.f32.mrf.mxu0
        %v1583 = vadd.f32 %v385, %v1582
        %v1584 = vpop.f32.mrf.mxu0
        %v1585 = vadd.f32 %v385, %v1584
        %1586 = vmatmul.bf16.gmra.mxu0 %v932
        %v1587 = vpop.f32.mrf.mxu0
        %v1588 = vadd.f32 %v385, %v1587
        %v1589 = vpop.f32.mrf.mxu0
        %v1590 = vadd.f32 %v385, %v1589
        %1591 = vmatmul.bf16.gmra.mxu0 %v935
        %v1592 = vpop.f32.mrf.mxu0
        %v1593 = vadd.f32 %v385, %v1592
        %v1594 = vpop.f32.mrf.mxu0
        %v1595 = vadd.f32 %v385, %v1594
        %1596 = vmatmul.bf16.gmra.mxu0 %v938
        %v1597 = vpop.f32.mrf.mxu0
        %v1598 = vadd.f32 %v385, %v1597
        %v1599 = vpop.f32.mrf.mxu0
        %v1600 = vadd.f32 %v385, %v1599
        %1601 = vmatmul.bf16.gmra.mxu0 %v941
        %v1602 = vpop.f32.mrf.mxu0
        %v1603 = vadd.f32 %v385, %v1602
        %v1604 = vpop.f32.mrf.mxu0
        %v1605 = vadd.f32 %v385, %v1604
        %1606 = vmatmul.bf16.gmra.mxu0 %v944
        %v1607 = vpop.f32.mrf.mxu0
        %v1608 = vadd.f32 %v385, %v1607
        %v1609 = vpop.f32.mrf.mxu0
        %v1610 = vadd.f32 %v385, %v1609
        %1611 = vmatmul.bf16.gmra.mxu0 %v947
        %v1612 = vpop.f32.mrf.mxu0
        %v1613 = vadd.f32 %v385, %v1612
        %v1614 = vpop.f32.mrf.mxu0
        %v1615 = vadd.f32 %v385, %v1614
        %1616 = vdwg.mxu0
        %v1617 = vmax.f32 %v969, %v1298
        %v1618 = vmax.f32 %v971, %v1300
        %v1619 = vmax.f32 %v974, %v1303
        %v1620 = vmax.f32 %v976, %v1305
        %v1621 = vmax.f32 %v979, %v1308
        %v1622 = vmax.f32 %v981, %v1310
        %v1623 = vmax.f32 %v984, %v1313
        %v1624 = vmax.f32 %v986, %v1315
        %v1625 = vmax.f32 %v989, %v1318
        %v1626 = vmax.f32 %v991, %v1320
        %v1627 = vmax.f32 %v994, %v1323
        %v1628 = vmax.f32 %v996, %v1325
        %v1629 = vmax.f32 %v999, %v1328
        %v1630 = vmax.f32 %v1001, %v1330
        %v1631 = vmax.f32 %v1004, %v1333
        %v1632 = vmax.f32 %v1006, %v1335
        %v1633 = vmax.f32 %v1009, %v1338
        %v1634 = vmax.f32 %v1011, %v1340
        %v1635 = vmax.f32 %v1014, %v1343
        %v1636 = vmax.f32 %v1016, %v1345
        %v1637 = vmax.f32 %v1019, %v1348
        %v1638 = vmax.f32 %v1021, %v1350
        %v1639 = vmax.f32 %v1024, %v1353
        %v1640 = vmax.f32 %v1026, %v1355
        %v1641 = vmax.f32 %v1029, %v1358
        %v1642 = vmax.f32 %v1031, %v1360
        %v1643 = vmax.f32 %v1034, %v1363
        %v1644 = vmax.f32 %v1036, %v1365
        %v1645 = vmax.f32 %v1039, %v1368
        %v1646 = vmax.f32 %v1041, %v1370
        %v1647 = vmax.f32 %v1044, %v1373
        %v1648 = vmax.f32 %v1046, %v1375
        %v1649 = vmax.f32 %v1049, %v1378
        %v1650 = vmax.f32 %v1051, %v1380
        %v1651 = vmax.f32 %v1054, %v1383
        %v1652 = vmax.f32 %v1056, %v1385
        %v1653 = vmax.f32 %v1059, %v1388
        %v1654 = vmax.f32 %v1061, %v1390
        %v1655 = vmax.f32 %v1064, %v1393
        %v1656 = vmax.f32 %v1066, %v1395
        %v1657 = vmax.f32 %v1069, %v1398
        %v1658 = vmax.f32 %v1071, %v1400
        %v1659 = vmax.f32 %v1074, %v1403
        %v1660 = vmax.f32 %v1076, %v1405
        %v1661 = vmax.f32 %v1079, %v1408
        %v1662 = vmax.f32 %v1081, %v1410
        %v1663 = vmax.f32 %v1084, %v1413
        %v1664 = vmax.f32 %v1086, %v1415
        %v1665 = vmax.f32 %v1089, %v1418
        %v1666 = vmax.f32 %v1091, %v1420
        %v1667 = vmax.f32 %v1094, %v1423
        %v1668 = vmax.f32 %v1096, %v1425
        %v1669 = vmax.f32 %v1099, %v1428
        %v1670 = vmax.f32 %v1101, %v1430
        %v1671 = vmax.f32 %v1104, %v1433
        %v1672 = vmax.f32 %v1106, %v1435
        %v1673 = vmax.f32 %v1109, %v1438
        %v1674 = vmax.f32 %v1111, %v1440
        %v1675 = vmax.f32 %v1114, %v1443
        %v1676 = vmax.f32 %v1116, %v1445
        %v1677 = vmax.f32 %v1119, %v1448
        %v1678 = vmax.f32 %v1121, %v1450
        %v1679 = vmax.f32 %v1124, %v1453
        %v1680 = vmax.f32 %v1126, %v1455
        %v1681 = vmax.f32 %v1129, %v1458
        %v1682 = vmax.f32 %v1131, %v1460
        %v1683 = vmax.f32 %v1134, %v1463
        %v1684 = vmax.f32 %v1136, %v1465
        %v1685 = vmax.f32 %v1139, %v1468
        %v1686 = vmax.f32 %v1141, %v1470
        %v1687 = vmax.f32 %v1144, %v1473
        %v1688 = vmax.f32 %v1146, %v1475
        %v1689 = vmax.f32 %v1149, %v1478
        %v1690 = vmax.f32 %v1151, %v1480
        %v1691 = vmax.f32 %v1154, %v1483
        %v1692 = vmax.f32 %v1156, %v1485
        %v1693 = vmax.f32 %v1159, %v1488
        %v1694 = vmax.f32 %v1161, %v1490
        %v1695 = vmax.f32 %v1164, %v1493
        %v1696 = vmax.f32 %v1166, %v1495
        %v1697 = vmax.f32 %v1169, %v1498
        %v1698 = vmax.f32 %v1171, %v1500
        %v1699 = vmax.f32 %v1174, %v1503
        %v1700 = vmax.f32 %v1176, %v1505
        %v1701 = vmax.f32 %v1179, %v1508
        %v1702 = vmax.f32 %v1181, %v1510
        %v1703 = vmax.f32 %v1184, %v1513
        %v1704 = vmax.f32 %v1186, %v1515
        %v1705 = vmax.f32 %v1189, %v1518
        %v1706 = vmax.f32 %v1191, %v1520
        %v1707 = vmax.f32 %v1194, %v1523
        %v1708 = vmax.f32 %v1196, %v1525
        %v1709 = vmax.f32 %v1199, %v1528
        %v1710 = vmax.f32 %v1201, %v1530
        %v1711 = vmax.f32 %v1204, %v1533
        %v1712 = vmax.f32 %v1206, %v1535
        %v1713 = vmax.f32 %v1209, %v1538
        %v1714 = vmax.f32 %v1211, %v1540
        %v1715 = vmax.f32 %v1214, %v1543
        %v1716 = vmax.f32 %v1216, %v1545
        %v1717 = vmax.f32 %v1219, %v1548
        %v1718 = vmax.f32 %v1221, %v1550
        %v1719 = vmax.f32 %v1224, %v1553
        %v1720 = vmax.f32 %v1226, %v1555
        %v1721 = vmax.f32 %v1229, %v1558
        %v1722 = vmax.f32 %v1231, %v1560
        %v1723 = vmax.f32 %v1234, %v1563
        %v1724 = vmax.f32 %v1236, %v1565
        %v1725 = vmax.f32 %v1239, %v1568
        %v1726 = vmax.f32 %v1241, %v1570
        %v1727 = vmax.f32 %v1244, %v1573
        %v1728 = vmax.f32 %v1246, %v1575
        %v1729 = vmax.f32 %v1249, %v1578
        %v1730 = vmax.f32 %v1251, %v1580
        %v1731 = vmax.f32 %v1254, %v1583
        %v1732 = vmax.f32 %v1256, %v1585
        %v1733 = vmax.f32 %v1259, %v1588
        %v1734 = vmax.f32 %v1261, %v1590
        %v1735 = vmax.f32 %v1264, %v1593
        %v1736 = vmax.f32 %v1266, %v1595
        %v1737 = vmax.f32 %v1269, %v1598
        %v1738 = vmax.f32 %v1271, %v1600
        %v1739 = vmax.f32 %v1274, %v1603
        %v1740 = vmax.f32 %v1276, %v1605
        %v1741 = vmax.f32 %v1279, %v1608
        %v1742 = vmax.f32 %v1281, %v1610
        %v1743 = vmax.f32 %v1284, %v1613
        %v1744 = vmax.f32 %v1286, %v1615
        %v1745 = vpack.c.bf16 %v1617, %v1617
        %v1746 = vpack.c.bf16 %v1618, %v1618
        %v1747 = vpack.c.bf16 %v1619, %v1619
        %v1748 = vpack.c.bf16 %v1620, %v1620
        %v1749 = vpack.c.bf16 %v1621, %v1621
        %v1750 = vpack.c.bf16 %v1622, %v1622
        %v1751 = vpack.c.bf16 %v1623, %v1623
        %v1752 = vpack.c.bf16 %v1624, %v1624
        %v1753 = vpack.c.bf16 %v1625, %v1625
        %v1754 = vpack.c.bf16 %v1626, %v1626
        %v1755 = vpack.c.bf16 %v1627, %v1627
        %v1756 = vpack.c.bf16 %v1628, %v1628
        %v1757 = vpack.c.bf16 %v1629, %v1629
        %v1758 = vpack.c.bf16 %v1630, %v1630
        %v1759 = vpack.c.bf16 %v1631, %v1631
        %v1760 = vpack.c.bf16 %v1632, %v1632
        %v1761 = vpack.c.bf16 %v1633, %v1633
        %v1762 = vpack.c.bf16 %v1634, %v1634
        %v1763 = vpack.c.bf16 %v1635, %v1635
        %v1764 = vpack.c.bf16 %v1636, %v1636
        %v1765 = vpack.c.bf16 %v1637, %v1637
        %v1766 = vpack.c.bf16 %v1638, %v1638
        %v1767 = vpack.c.bf16 %v1639, %v1639
        %v1768 = vpack.c.bf16 %v1640, %v1640
        %v1769 = vpack.c.bf16 %v1641, %v1641
        %v1770 = vpack.c.bf16 %v1642, %v1642
        %v1771 = vpack.c.bf16 %v1643, %v1643
        %v1772 = vpack.c.bf16 %v1644, %v1644
        %v1773 = vpack.c.bf16 %v1645, %v1645
        %v1774 = vpack.c.bf16 %v1646, %v1646
        %v1775 = vpack.c.bf16 %v1647, %v1647
        %v1776 = vpack.c.bf16 %v1648, %v1648
        %v1777 = vpack.c.bf16 %v1649, %v1649
        %v1778 = vpack.c.bf16 %v1650, %v1650
        %v1779 = vpack.c.bf16 %v1651, %v1651
        %v1780 = vpack.c.bf16 %v1652, %v1652
        %v1781 = vpack.c.bf16 %v1653, %v1653
        %v1782 = vpack.c.bf16 %v1654, %v1654
        %v1783 = vpack.c.bf16 %v1655, %v1655
        %v1784 = vpack.c.bf16 %v1656, %v1656
        %v1785 = vpack.c.bf16 %v1657, %v1657
        %v1786 = vpack.c.bf16 %v1658, %v1658
        %v1787 = vpack.c.bf16 %v1659, %v1659
        %v1788 = vpack.c.bf16 %v1660, %v1660
        %v1789 = vpack.c.bf16 %v1661, %v1661
        %v1790 = vpack.c.bf16 %v1662, %v1662
        %v1791 = vpack.c.bf16 %v1663, %v1663
        %v1792 = vpack.c.bf16 %v1664, %v1664
        %v1793 = vpack.c.bf16 %v1665, %v1665
        %v1794 = vpack.c.bf16 %v1666, %v1666
        %v1795 = vpack.c.bf16 %v1667, %v1667
        %v1796 = vpack.c.bf16 %v1668, %v1668
        %v1797 = vpack.c.bf16 %v1669, %v1669
        %v1798 = vpack.c.bf16 %v1670, %v1670
        %v1799 = vpack.c.bf16 %v1671, %v1671
        %v1800 = vpack.c.bf16 %v1672, %v1672
        %v1801 = vpack.c.bf16 %v1673, %v1673
        %v1802 = vpack.c.bf16 %v1674, %v1674
        %v1803 = vpack.c.bf16 %v1675, %v1675
        %v1804 = vpack.c.bf16 %v1676, %v1676
        %v1805 = vpack.c.bf16 %v1677, %v1677
        %v1806 = vpack.c.bf16 %v1678, %v1678
        %v1807 = vpack.c.bf16 %v1679, %v1679
        %v1808 = vpack.c.bf16 %v1680, %v1680
        %v1809 = vpack.c.bf16 %v1681, %v1681
        %v1810 = vpack.c.bf16 %v1682, %v1682
        %v1811 = vpack.c.bf16 %v1683, %v1683
        %v1812 = vpack.c.bf16 %v1684, %v1684
        %v1813 = vpack.c.bf16 %v1685, %v1685
        %v1814 = vpack.c.bf16 %v1686, %v1686
        %v1815 = vpack.c.bf16 %v1687, %v1687
        %v1816 = vpack.c.bf16 %v1688, %v1688
        %v1817 = vpack.c.bf16 %v1689, %v1689
        %v1818 = vpack.c.bf16 %v1690, %v1690
        %v1819 = vpack.c.bf16 %v1691, %v1691
        %v1820 = vpack.c.bf16 %v1692, %v1692
        %v1821 = vpack.c.bf16 %v1693, %v1693
        %v1822 = vpack.c.bf16 %v1694, %v1694
        %v1823 = vpack.c.bf16 %v1695, %v1695
        %v1824 = vpack.c.bf16 %v1696, %v1696
        %v1825 = vpack.c.bf16 %v1697, %v1697
        %v1826 = vpack.c.bf16 %v1698, %v1698
        %v1827 = vpack.c.bf16 %v1699, %v1699
        %v1828 = vpack.c.bf16 %v1700, %v1700
        %v1829 = vpack.c.bf16 %v1701, %v1701
        %v1830 = vpack.c.bf16 %v1702, %v1702
        %v1831 = vpack.c.bf16 %v1703, %v1703
        %v1832 = vpack.c.bf16 %v1704, %v1704
        %v1833 = vpack.c.bf16 %v1705, %v1705
        %v1834 = vpack.c.bf16 %v1706, %v1706
        %v1835 = vpack.c.bf16 %v1707, %v1707
        %v1836 = vpack.c.bf16 %v1708, %v1708
        %v1837 = vpack.c.bf16 %v1709, %v1709
        %v1838 = vpack.c.bf16 %v1710, %v1710
        %v1839 = vpack.c.bf16 %v1711, %v1711
        %v1840 = vpack.c.bf16 %v1712, %v1712
        %v1841 = vpack.c.bf16 %v1713, %v1713
        %v1842 = vpack.c.bf16 %v1714, %v1714
        %v1843 = vpack.c.bf16 %v1715, %v1715
        %v1844 = vpack.c.bf16 %v1716, %v1716
        %v1845 = vpack.c.bf16 %v1717, %v1717
        %v1846 = vpack.c.bf16 %v1718, %v1718
        %v1847 = vpack.c.bf16 %v1719, %v1719
        %v1848 = vpack.c.bf16 %v1720, %v1720
        %v1849 = vpack.c.bf16 %v1721, %v1721
        %v1850 = vpack.c.bf16 %v1722, %v1722
        %v1851 = vpack.c.bf16 %v1723, %v1723
        %v1852 = vpack.c.bf16 %v1724, %v1724
        %v1853 = vpack.c.bf16 %v1725, %v1725
        %v1854 = vpack.c.bf16 %v1726, %v1726
        %v1855 = vpack.c.bf16 %v1727, %v1727
        %v1856 = vpack.c.bf16 %v1728, %v1728
        %v1857 = vpack.c.bf16 %v1729, %v1729
        %v1858 = vpack.c.bf16 %v1730, %v1730
        %v1859 = vpack.c.bf16 %v1731, %v1731
        %v1860 = vpack.c.bf16 %v1732, %v1732
        %v1861 = vpack.c.bf16 %v1733, %v1733
        %v1862 = vpack.c.bf16 %v1734, %v1734
        %v1863 = vpack.c.bf16 %v1735, %v1735
        %v1864 = vpack.c.bf16 %v1736, %v1736
        %v1865 = vpack.c.bf16 %v1737, %v1737
        %v1866 = vpack.c.bf16 %v1738, %v1738
        %v1867 = vpack.c.bf16 %v1739, %v1739
        %v1868 = vpack.c.bf16 %v1740, %v1740
        %v1869 = vpack.c.bf16 %v1741, %v1741
        %v1870 = vpack.c.bf16 %v1742, %v1742
        %v1871 = vpack.c.bf16 %v1743, %v1743
        %v1872 = vpack.c.bf16 %v1744, %v1744
        %v1873 = vunpack.c.l.bf16 %v1745
        %v1874 = vunpack.c.l.bf16 %v1746
        %v1875 = vunpack.c.l.bf16 %v1747
        %v1876 = vunpack.c.l.bf16 %v1748
        %v1877 = vunpack.c.l.bf16 %v1753
        %v1878 = vunpack.c.l.bf16 %v1754
        %v1879 = vunpack.c.l.bf16 %v1755
        %v1880 = vunpack.c.l.bf16 %v1756
        %v1881 = vunpack.c.l.bf16 %v1761
        %v1882 = vunpack.c.l.bf16 %v1762
        %v1883 = vunpack.c.l.bf16 %v1763
        %v1884 = vunpack.c.l.bf16 %v1764
        %v1885 = vunpack.c.l.bf16 %v1769
        %v1886 = vunpack.c.l.bf16 %v1770
        %v1887 = vunpack.c.l.bf16 %v1771
        %v1888 = vunpack.c.l.bf16 %v1772
        %v1889 = vunpack.c.l.bf16 %v1777
        %v1890 = vunpack.c.l.bf16 %v1778
        %v1891 = vunpack.c.l.bf16 %v1779
        %v1892 = vunpack.c.l.bf16 %v1780
        %v1893 = vunpack.c.l.bf16 %v1785
        %v1894 = vunpack.c.l.bf16 %v1786
        %v1895 = vunpack.c.l.bf16 %v1787
        %v1896 = vunpack.c.l.bf16 %v1788
        %v1897 = vunpack.c.l.bf16 %v1793
        %v1898 = vunpack.c.l.bf16 %v1794
        %v1899 = vunpack.c.l.bf16 %v1795
        %v1900 = vunpack.c.l.bf16 %v1796
        %v1901 = vunpack.c.l.bf16 %v1801
        %v1902 = vunpack.c.l.bf16 %v1802
        %v1903 = vunpack.c.l.bf16 %v1803
        %v1904 = vunpack.c.l.bf16 %v1804
        %v1905 = vunpack.c.l.bf16 %v1809
        %v1906 = vunpack.c.l.bf16 %v1810
        %v1907 = vunpack.c.l.bf16 %v1811
        %v1908 = vunpack.c.l.bf16 %v1812
        %v1909 = vunpack.c.l.bf16 %v1817
        %v1910 = vunpack.c.l.bf16 %v1818
        %v1911 = vunpack.c.l.bf16 %v1819
        %v1912 = vunpack.c.l.bf16 %v1820
        %v1913 = vunpack.c.l.bf16 %v1825
        %v1914 = vunpack.c.l.bf16 %v1826
        %v1915 = vunpack.c.l.bf16 %v1827
        %v1916 = vunpack.c.l.bf16 %v1828
        %v1917 = vunpack.c.l.bf16 %v1833
        %v1918 = vunpack.c.l.bf16 %v1834
        %v1919 = vunpack.c.l.bf16 %v1835
        %v1920 = vunpack.c.l.bf16 %v1836
        %v1921 = vunpack.c.l.bf16 %v1841
        %v1922 = vunpack.c.l.bf16 %v1842
        %v1923 = vunpack.c.l.bf16 %v1843
        %v1924 = vunpack.c.l.bf16 %v1844
        %v1925 = vunpack.c.l.bf16 %v1849
        %v1926 = vunpack.c.l.bf16 %v1850
        %v1927 = vunpack.c.l.bf16 %v1851
        %v1928 = vunpack.c.l.bf16 %v1852
        %v1929 = vunpack.c.l.bf16 %v1857
        %v1930 = vunpack.c.l.bf16 %v1858
        %v1931 = vunpack.c.l.bf16 %v1859
        %v1932 = vunpack.c.l.bf16 %v1860
        %v1933 = vunpack.c.l.bf16 %v1865
        %v1934 = vunpack.c.l.bf16 %v1866
        %v1935 = vunpack.c.l.bf16 %v1867
        %v1936 = vunpack.c.l.bf16 %v1868
        %v1937 = vunpack.c.l.bf16 %v1749
        %v1938 = vunpack.c.l.bf16 %v1750
        %v1939 = vunpack.c.l.bf16 %v1751
        %v1940 = vunpack.c.l.bf16 %v1752
        %v1941 = vunpack.c.l.bf16 %v1757
        %v1942 = vunpack.c.l.bf16 %v1758
        %v1943 = vunpack.c.l.bf16 %v1759
        %v1944 = vunpack.c.l.bf16 %v1760
        %v1945 = vunpack.c.l.bf16 %v1765
        %v1946 = vunpack.c.l.bf16 %v1766
        %v1947 = vunpack.c.l.bf16 %v1767
        %v1948 = vunpack.c.l.bf16 %v1768
        %v1949 = vunpack.c.l.bf16 %v1773
        %v1950 = vunpack.c.l.bf16 %v1774
        %v1951 = vunpack.c.l.bf16 %v1775
        %v1952 = vunpack.c.l.bf16 %v1776
        %v1953 = vunpack.c.l.bf16 %v1781
        %v1954 = vunpack.c.l.bf16 %v1782
        %v1955 = vunpack.c.l.bf16 %v1783
        %v1956 = vunpack.c.l.bf16 %v1784
        %v1957 = vunpack.c.l.bf16 %v1789
        %v1958 = vunpack.c.l.bf16 %v1790
        %v1959 = vunpack.c.l.bf16 %v1791
        %v1960 = vunpack.c.l.bf16 %v1792
        %v1961 = vunpack.c.l.bf16 %v1797
        %v1962 = vunpack.c.l.bf16 %v1798
        %v1963 = vunpack.c.l.bf16 %v1799
        %v1964 = vunpack.c.l.bf16 %v1800
        %v1965 = vunpack.c.l.bf16 %v1805
        %v1966 = vunpack.c.l.bf16 %v1806
        %v1967 = vunpack.c.l.bf16 %v1807
        %v1968 = vunpack.c.l.bf16 %v1808
        %v1969 = vunpack.c.l.bf16 %v1813
        %v1970 = vunpack.c.l.bf16 %v1814
        %v1971 = vunpack.c.l.bf16 %v1815
        %v1972 = vunpack.c.l.bf16 %v1816
        %v1973 = vunpack.c.l.bf16 %v1821
        %v1974 = vunpack.c.l.bf16 %v1822
        %v1975 = vunpack.c.l.bf16 %v1823
        %v1976 = vunpack.c.l.bf16 %v1824
        %v1977 = vunpack.c.l.bf16 %v1829
        %v1978 = vunpack.c.l.bf16 %v1830
        %v1979 = vunpack.c.l.bf16 %v1831
        %v1980 = vunpack.c.l.bf16 %v1832
        %v1981 = vunpack.c.l.bf16 %v1837
        %v1982 = vunpack.c.l.bf16 %v1838
        %v1983 = vunpack.c.l.bf16 %v1839
        %v1984 = vunpack.c.l.bf16 %v1840
        %v1985 = vunpack.c.l.bf16 %v1845
        %v1986 = vunpack.c.l.bf16 %v1846
        %v1987 = vunpack.c.l.bf16 %v1847
        %v1988 = vunpack.c.l.bf16 %v1848
        %v1989 = vunpack.c.l.bf16 %v1853
        %v1990 = vunpack.c.l.bf16 %v1854
        %v1991 = vunpack.c.l.bf16 %v1855
        %v1992 = vunpack.c.l.bf16 %v1856
        %v1993 = vunpack.c.l.bf16 %v1861
        %v1994 = vunpack.c.l.bf16 %v1862
        %v1995 = vunpack.c.l.bf16 %v1863
        %v1996 = vunpack.c.l.bf16 %v1864
        %v1997 = vunpack.c.l.bf16 %v1869
        %v1998 = vunpack.c.l.bf16 %v1870
        %v1999 = vunpack.c.l.bf16 %v1871
        %v2000 = vunpack.c.l.bf16 %v1872
        %v2001 = vmax.f32 %v1873, %v1937
        %v2002 = vmax.f32 %v1874, %v1938
        %v2003 = vmax.f32 %v1875, %v1939
        %v2004 = vmax.f32 %v1876, %v1940
        %v2005 = vmax.f32 %v1877, %v1941
        %v2006 = vmax.f32 %v1878, %v1942
        %v2007 = vmax.f32 %v1879, %v1943
        %v2008 = vmax.f32 %v1880, %v1944
        %v2009 = vmax.f32 %v1881, %v1945
        %v2010 = vmax.f32 %v1882, %v1946
        %v2011 = vmax.f32 %v1883, %v1947
        %v2012 = vmax.f32 %v1884, %v1948
        %v2013 = vmax.f32 %v1885, %v1949
        %v2014 = vmax.f32 %v1886, %v1950
        %v2015 = vmax.f32 %v1887, %v1951
        %v2016 = vmax.f32 %v1888, %v1952
        %v2017 = vmax.f32 %v1889, %v1953
        %v2018 = vmax.f32 %v1890, %v1954
        %v2019 = vmax.f32 %v1891, %v1955
        %v2020 = vmax.f32 %v1892, %v1956
        %v2021 = vmax.f32 %v1893, %v1957
        %v2022 = vmax.f32 %v1894, %v1958
        %v2023 = vmax.f32 %v1895, %v1959
        %v2024 = vmax.f32 %v1896, %v1960
        %v2025 = vmax.f32 %v1897, %v1961
        %v2026 = vmax.f32 %v1898, %v1962
        %v2027 = vmax.f32 %v1899, %v1963
        %v2028 = vmax.f32 %v1900, %v1964
        %v2029 = vmax.f32 %v1901, %v1965
        %v2030 = vmax.f32 %v1902, %v1966
        %v2031 = vmax.f32 %v1903, %v1967
        %v2032 = vmax.f32 %v1904, %v1968
        %v2033 = vmax.f32 %v1905, %v1969
        %v2034 = vmax.f32 %v1906, %v1970
        %v2035 = vmax.f32 %v1907, %v1971
        %v2036 = vmax.f32 %v1908, %v1972
        %v2037 = vmax.f32 %v1909, %v1973
        %v2038 = vmax.f32 %v1910, %v1974
        %v2039 = vmax.f32 %v1911, %v1975
        %v2040 = vmax.f32 %v1912, %v1976
        %v2041 = vmax.f32 %v1913, %v1977
        %v2042 = vmax.f32 %v1914, %v1978
        %v2043 = vmax.f32 %v1915, %v1979
        %v2044 = vmax.f32 %v1916, %v1980
        %v2045 = vmax.f32 %v1917, %v1981
        %v2046 = vmax.f32 %v1918, %v1982
        %v2047 = vmax.f32 %v1919, %v1983
        %v2048 = vmax.f32 %v1920, %v1984
        %v2049 = vmax.f32 %v1921, %v1985
        %v2050 = vmax.f32 %v1922, %v1986
        %v2051 = vmax.f32 %v1923, %v1987
        %v2052 = vmax.f32 %v1924, %v1988
        %v2053 = vmax.f32 %v1925, %v1989
        %v2054 = vmax.f32 %v1926, %v1990
        %v2055 = vmax.f32 %v1927, %v1991
        %v2056 = vmax.f32 %v1928, %v1992
        %v2057 = vmax.f32 %v1929, %v1993
        %v2058 = vmax.f32 %v1930, %v1994
        %v2059 = vmax.f32 %v1931, %v1995
        %v2060 = vmax.f32 %v1932, %v1996
        %v2061 = vmax.f32 %v1933, %v1997
        %v2062 = vmax.f32 %v1934, %v1998
        %v2063 = vmax.f32 %v1935, %v1999
        %v2064 = vmax.f32 %v1936, %v2000
        %v2065 = vpack.c.bf16 %v2001, %v2001
        %v2066 = vpack.c.bf16 %v2002, %v2002
        %v2067 = vpack.c.bf16 %v2003, %v2003
        %v2068 = vpack.c.bf16 %v2004, %v2004
        %v2069 = vpack.c.bf16 %v2005, %v2005
        %v2070 = vpack.c.bf16 %v2006, %v2006
        %v2071 = vpack.c.bf16 %v2007, %v2007
        %v2072 = vpack.c.bf16 %v2008, %v2008
        %v2073 = vpack.c.bf16 %v2009, %v2009
        %v2074 = vpack.c.bf16 %v2010, %v2010
        %v2075 = vpack.c.bf16 %v2011, %v2011
        %v2076 = vpack.c.bf16 %v2012, %v2012
        %v2077 = vpack.c.bf16 %v2013, %v2013
        %v2078 = vpack.c.bf16 %v2014, %v2014
        %v2079 = vpack.c.bf16 %v2015, %v2015
        %v2080 = vpack.c.bf16 %v2016, %v2016
        %v2081 = vpack.c.bf16 %v2017, %v2017
        %v2082 = vpack.c.bf16 %v2018, %v2018
        %v2083 = vpack.c.bf16 %v2019, %v2019
        %v2084 = vpack.c.bf16 %v2020, %v2020
        %v2085 = vpack.c.bf16 %v2021, %v2021
        %v2086 = vpack.c.bf16 %v2022, %v2022
        %v2087 = vpack.c.bf16 %v2023, %v2023
        %v2088 = vpack.c.bf16 %v2024, %v2024
        %v2089 = vpack.c.bf16 %v2025, %v2025
        %v2090 = vpack.c.bf16 %v2026, %v2026
        %v2091 = vpack.c.bf16 %v2027, %v2027
        %v2092 = vpack.c.bf16 %v2028, %v2028
        %v2093 = vpack.c.bf16 %v2029, %v2029
        %v2094 = vpack.c.bf16 %v2030, %v2030
        %v2095 = vpack.c.bf16 %v2031, %v2031
        %v2096 = vpack.c.bf16 %v2032, %v2032
        %v2097 = vpack.c.bf16 %v2033, %v2033
        %v2098 = vpack.c.bf16 %v2034, %v2034
        %v2099 = vpack.c.bf16 %v2035, %v2035
        %v2100 = vpack.c.bf16 %v2036, %v2036
        %v2101 = vpack.c.bf16 %v2037, %v2037
        %v2102 = vpack.c.bf16 %v2038, %v2038
        %v2103 = vpack.c.bf16 %v2039, %v2039
        %v2104 = vpack.c.bf16 %v2040, %v2040
        %v2105 = vpack.c.bf16 %v2041, %v2041
        %v2106 = vpack.c.bf16 %v2042, %v2042
        %v2107 = vpack.c.bf16 %v2043, %v2043
        %v2108 = vpack.c.bf16 %v2044, %v2044
        %v2109 = vpack.c.bf16 %v2045, %v2045
        %v2110 = vpack.c.bf16 %v2046, %v2046
        %v2111 = vpack.c.bf16 %v2047, %v2047
        %v2112 = vpack.c.bf16 %v2048, %v2048
        %v2113 = vpack.c.bf16 %v2049, %v2049
        %v2114 = vpack.c.bf16 %v2050, %v2050
        %v2115 = vpack.c.bf16 %v2051, %v2051
        %v2116 = vpack.c.bf16 %v2052, %v2052
        %v2117 = vpack.c.bf16 %v2053, %v2053
        %v2118 = vpack.c.bf16 %v2054, %v2054
        %v2119 = vpack.c.bf16 %v2055, %v2055
        %v2120 = vpack.c.bf16 %v2056, %v2056
        %v2121 = vpack.c.bf16 %v2057, %v2057
        %v2122 = vpack.c.bf16 %v2058, %v2058
        %v2123 = vpack.c.bf16 %v2059, %v2059
        %v2124 = vpack.c.bf16 %v2060, %v2060
        %v2125 = vpack.c.bf16 %v2061, %v2061
        %v2126 = vpack.c.bf16 %v2062, %v2062
        %v2127 = vpack.c.bf16 %v2063, %v2063
        %v2128 = vpack.c.bf16 %v2064, %v2064
        %v2193 = vrot.slane %v2065, 3
        %v2194 = vrot.slane %v2066, 3
        %v2195 = vrot.slane %v2067, 3
        %v2196 = vrot.slane %v2068, 3
        %v2197 = vrot.slane %v2069, 3
        %v2198 = vrot.slane %v2070, 3
        %v2199 = vrot.slane %v2071, 3
        %v2200 = vrot.slane %v2072, 3
        %v2201 = vrot.slane %v2073, 3
        %v2202 = vrot.slane %v2074, 3
        %v2203 = vrot.slane %v2075, 3
        %v2204 = vrot.slane %v2076, 3
        %v2205 = vrot.slane %v2077, 3
        %v2206 = vrot.slane %v2078, 3
        %v2207 = vrot.slane %v2079, 3
        %v2208 = vrot.slane %v2080, 3
        %v2209 = vrot.slane %v2081, 3
        %v2210 = vrot.slane %v2082, 3
        %v2211 = vrot.slane %v2083, 3
        %v2212 = vrot.slane %v2084, 3
        %v2213 = vrot.slane %v2085, 3
        %v2214 = vrot.slane %v2086, 3
        %v2215 = vrot.slane %v2087, 3
        %v2216 = vrot.slane %v2088, 3
        %v2217 = vrot.slane %v2089, 3
        %v2218 = vrot.slane %v2090, 3
        %v2219 = vrot.slane %v2091, 3
        %v2220 = vrot.slane %v2092, 3
        %v2221 = vrot.slane %v2093, 3
        %v2222 = vrot.slane %v2094, 3
        %v2223 = vrot.slane %v2095, 3
        %v2224 = vrot.slane %v2096, 3
        %v2225 = vrot.slane %v2097, 3
        %v2226 = vrot.slane %v2098, 3
        %v2227 = vrot.slane %v2099, 3
        %v2228 = vrot.slane %v2100, 3
        %v2229 = vrot.slane %v2101, 3
        %v2230 = vrot.slane %v2102, 3
        %v2231 = vrot.slane %v2103, 3
        %v2232 = vrot.slane %v2104, 3
        %v2233 = vrot.slane %v2105, 3
        %v2234 = vrot.slane %v2106, 3
        %v2235 = vrot.slane %v2107, 3
        %v2236 = vrot.slane %v2108, 3
        %v2237 = vrot.slane %v2109, 3
        %v2238 = vrot.slane %v2110, 3
        %v2239 = vrot.slane %v2111, 3
        %v2240 = vrot.slane %v2112, 3
        %v2241 = vrot.slane %v2113, 3
        %v2242 = vrot.slane %v2114, 3
        %v2243 = vrot.slane %v2115, 3
        %v2244 = vrot.slane %v2116, 3
        %v2245 = vrot.slane %v2117, 3
        %v2246 = vrot.slane %v2118, 3
        %v2247 = vrot.slane %v2119, 3
        %v2248 = vrot.slane %v2120, 3
        %v2249 = vrot.slane %v2121, 3
        %v2250 = vrot.slane %v2122, 3
        %v2251 = vrot.slane %v2123, 3
        %v2252 = vrot.slane %v2124, 3
        %v2253 = vrot.slane %v2125, 3
        %v2254 = vrot.slane %v2126, 3
        %v2255 = vrot.slane %v2127, 3
        %v2256 = vrot.slane %v2128, 3
        %vm2257 = vcmask 1040384
        %v2260 = vsel %vm2257, %v2065, %v2193
        %vm2261 = vcmask 1041409
        %v2262 = vsel %vm2261, %v2065, %v2193
        %v2264 = vrot.slane %v2262, 1
        %vm2265 = vcmask 1042434
        %v2266 = vsel %vm2265, %v2065, %v2193
        %v2268 = vrot.slane %v2266, 2
        %vm2269 = vcmask 1043459
        %v2270 = vsel %vm2269, %v2065, %v2193
        %v2272 = vrot.slane %v2270, 3
        %v2275 = vsel %vm2257, %v2066, %v2194
        %v2276 = vsel %vm2261, %v2066, %v2194
        %v2278 = vrot.slane %v2276, 1
        %v2279 = vsel %vm2265, %v2066, %v2194
        %v2281 = vrot.slane %v2279, 2
        %v2282 = vsel %vm2269, %v2066, %v2194
        %v2284 = vrot.slane %v2282, 3
        %v2287 = vsel %vm2257, %v2067, %v2195
        %v2288 = vsel %vm2261, %v2067, %v2195
        %v2290 = vrot.slane %v2288, 1
        %v2291 = vsel %vm2265, %v2067, %v2195
        %v2293 = vrot.slane %v2291, 2
        %v2294 = vsel %vm2269, %v2067, %v2195
        %v2296 = vrot.slane %v2294, 3
        %v2299 = vsel %vm2257, %v2068, %v2196
        %v2300 = vsel %vm2261, %v2068, %v2196
        %v2302 = vrot.slane %v2300, 1
        %v2303 = vsel %vm2265, %v2068, %v2196
        %v2305 = vrot.slane %v2303, 2
        %v2306 = vsel %vm2269, %v2068, %v2196
        %v2308 = vrot.slane %v2306, 3
        %v2311 = vsel %vm2257, %v2069, %v2197
        %v2312 = vsel %vm2261, %v2069, %v2197
        %v2314 = vrot.slane %v2312, 1
        %v2315 = vsel %vm2265, %v2069, %v2197
        %v2317 = vrot.slane %v2315, 2
        %v2318 = vsel %vm2269, %v2069, %v2197
        %v2320 = vrot.slane %v2318, 3
        %v2323 = vsel %vm2257, %v2070, %v2198
        %v2324 = vsel %vm2261, %v2070, %v2198
        %v2326 = vrot.slane %v2324, 1
        %v2327 = vsel %vm2265, %v2070, %v2198
        %v2329 = vrot.slane %v2327, 2
        %v2330 = vsel %vm2269, %v2070, %v2198
        %v2332 = vrot.slane %v2330, 3
        %v2335 = vsel %vm2257, %v2071, %v2199
        %v2336 = vsel %vm2261, %v2071, %v2199
        %v2338 = vrot.slane %v2336, 1
        %v2339 = vsel %vm2265, %v2071, %v2199
        %v2341 = vrot.slane %v2339, 2
        %v2342 = vsel %vm2269, %v2071, %v2199
        %v2344 = vrot.slane %v2342, 3
        %v2347 = vsel %vm2257, %v2072, %v2200
        %v2348 = vsel %vm2261, %v2072, %v2200
        %v2350 = vrot.slane %v2348, 1
        %v2351 = vsel %vm2265, %v2072, %v2200
        %v2353 = vrot.slane %v2351, 2
        %v2354 = vsel %vm2269, %v2072, %v2200
        %v2356 = vrot.slane %v2354, 3
        %v2359 = vsel %vm2257, %v2073, %v2201
        %v2360 = vsel %vm2261, %v2073, %v2201
        %v2362 = vrot.slane %v2360, 1
        %v2363 = vsel %vm2265, %v2073, %v2201
        %v2365 = vrot.slane %v2363, 2
        %v2366 = vsel %vm2269, %v2073, %v2201
        %v2368 = vrot.slane %v2366, 3
        %v2371 = vsel %vm2257, %v2074, %v2202
        %v2372 = vsel %vm2261, %v2074, %v2202
        %v2374 = vrot.slane %v2372, 1
        %v2375 = vsel %vm2265, %v2074, %v2202
        %v2377 = vrot.slane %v2375, 2
        %v2378 = vsel %vm2269, %v2074, %v2202
        %v2380 = vrot.slane %v2378, 3
        %v2383 = vsel %vm2257, %v2075, %v2203
        %v2384 = vsel %vm2261, %v2075, %v2203
        %v2386 = vrot.slane %v2384, 1
        %v2387 = vsel %vm2265, %v2075, %v2203
        %v2389 = vrot.slane %v2387, 2
        %v2390 = vsel %vm2269, %v2075, %v2203
        %v2392 = vrot.slane %v2390, 3
        %v2395 = vsel %vm2257, %v2076, %v2204
        %v2396 = vsel %vm2261, %v2076, %v2204
        %v2398 = vrot.slane %v2396, 1
        %v2399 = vsel %vm2265, %v2076, %v2204
        %v2401 = vrot.slane %v2399, 2
        %v2402 = vsel %vm2269, %v2076, %v2204
        %v2404 = vrot.slane %v2402, 3
        %v2407 = vsel %vm2257, %v2077, %v2205
        %v2408 = vsel %vm2261, %v2077, %v2205
        %v2410 = vrot.slane %v2408, 1
        %v2411 = vsel %vm2265, %v2077, %v2205
        %v2413 = vrot.slane %v2411, 2
        %v2414 = vsel %vm2269, %v2077, %v2205
        %v2416 = vrot.slane %v2414, 3
        %v2419 = vsel %vm2257, %v2078, %v2206
        %v2420 = vsel %vm2261, %v2078, %v2206
        %v2422 = vrot.slane %v2420, 1
        %v2423 = vsel %vm2265, %v2078, %v2206
        %v2425 = vrot.slane %v2423, 2
        %v2426 = vsel %vm2269, %v2078, %v2206
        %v2428 = vrot.slane %v2426, 3
        %v2431 = vsel %vm2257, %v2079, %v2207
        %v2432 = vsel %vm2261, %v2079, %v2207
        %v2434 = vrot.slane %v2432, 1
        %v2435 = vsel %vm2265, %v2079, %v2207
        %v2437 = vrot.slane %v2435, 2
        %v2438 = vsel %vm2269, %v2079, %v2207
        %v2440 = vrot.slane %v2438, 3
        %v2443 = vsel %vm2257, %v2080, %v2208
        %v2444 = vsel %vm2261, %v2080, %v2208
        %v2446 = vrot.slane %v2444, 1
        %v2447 = vsel %vm2265, %v2080, %v2208
        %v2449 = vrot.slane %v2447, 2
        %v2450 = vsel %vm2269, %v2080, %v2208
        %v2452 = vrot.slane %v2450, 3
        %v2455 = vsel %vm2257, %v2081, %v2209
        %v2456 = vsel %vm2261, %v2081, %v2209
        %v2458 = vrot.slane %v2456, 1
        %v2459 = vsel %vm2265, %v2081, %v2209
        %v2461 = vrot.slane %v2459, 2
        %v2462 = vsel %vm2269, %v2081, %v2209
        %v2464 = vrot.slane %v2462, 3
        %v2467 = vsel %vm2257, %v2082, %v2210
        %v2468 = vsel %vm2261, %v2082, %v2210
        %v2470 = vrot.slane %v2468, 1
        %v2471 = vsel %vm2265, %v2082, %v2210
        %v2473 = vrot.slane %v2471, 2
        %v2474 = vsel %vm2269, %v2082, %v2210
        %v2476 = vrot.slane %v2474, 3
        %v2479 = vsel %vm2257, %v2083, %v2211
        %v2480 = vsel %vm2261, %v2083, %v2211
        %v2482 = vrot.slane %v2480, 1
        %v2483 = vsel %vm2265, %v2083, %v2211
        %v2485 = vrot.slane %v2483, 2
        %v2486 = vsel %vm2269, %v2083, %v2211
        %v2488 = vrot.slane %v2486, 3
        %v2491 = vsel %vm2257, %v2084, %v2212
        %v2492 = vsel %vm2261, %v2084, %v2212
        %v2494 = vrot.slane %v2492, 1
        %v2495 = vsel %vm2265, %v2084, %v2212
        %v2497 = vrot.slane %v2495, 2
        %v2498 = vsel %vm2269, %v2084, %v2212
        %v2500 = vrot.slane %v2498, 3
        %v2503 = vsel %vm2257, %v2085, %v2213
        %v2504 = vsel %vm2261, %v2085, %v2213
        %v2506 = vrot.slane %v2504, 1
        %v2507 = vsel %vm2265, %v2085, %v2213
        %v2509 = vrot.slane %v2507, 2
        %v2510 = vsel %vm2269, %v2085, %v2213
        %v2512 = vrot.slane %v2510, 3
        %v2515 = vsel %vm2257, %v2086, %v2214
        %v2516 = vsel %vm2261, %v2086, %v2214
        %v2518 = vrot.slane %v2516, 1
        %v2519 = vsel %vm2265, %v2086, %v2214
        %v2521 = vrot.slane %v2519, 2
        %v2522 = vsel %vm2269, %v2086, %v2214
        %v2524 = vrot.slane %v2522, 3
        %v2527 = vsel %vm2257, %v2087, %v2215
        %v2528 = vsel %vm2261, %v2087, %v2215
        %v2530 = vrot.slane %v2528, 1
        %v2531 = vsel %vm2265, %v2087, %v2215
        %v2533 = vrot.slane %v2531, 2
        %v2534 = vsel %vm2269, %v2087, %v2215
        %v2536 = vrot.slane %v2534, 3
        %v2539 = vsel %vm2257, %v2088, %v2216
        %v2540 = vsel %vm2261, %v2088, %v2216
        %v2542 = vrot.slane %v2540, 1
        %v2543 = vsel %vm2265, %v2088, %v2216
        %v2545 = vrot.slane %v2543, 2
        %v2546 = vsel %vm2269, %v2088, %v2216
        %v2548 = vrot.slane %v2546, 3
        %v2551 = vsel %vm2257, %v2089, %v2217
        %v2552 = vsel %vm2261, %v2089, %v2217
        %v2554 = vrot.slane %v2552, 1
        %v2555 = vsel %vm2265, %v2089, %v2217
        %v2557 = vrot.slane %v2555, 2
        %v2558 = vsel %vm2269, %v2089, %v2217
        %v2560 = vrot.slane %v2558, 3
        %v2563 = vsel %vm2257, %v2090, %v2218
        %v2564 = vsel %vm2261, %v2090, %v2218
        %v2566 = vrot.slane %v2564, 1
        %v2567 = vsel %vm2265, %v2090, %v2218
        %v2569 = vrot.slane %v2567, 2
        %v2570 = vsel %vm2269, %v2090, %v2218
        %v2572 = vrot.slane %v2570, 3
        %v2575 = vsel %vm2257, %v2091, %v2219
        %v2576 = vsel %vm2261, %v2091, %v2219
        %v2578 = vrot.slane %v2576, 1
        %v2579 = vsel %vm2265, %v2091, %v2219
        %v2581 = vrot.slane %v2579, 2
        %v2582 = vsel %vm2269, %v2091, %v2219
        %v2584 = vrot.slane %v2582, 3
        %v2587 = vsel %vm2257, %v2092, %v2220
        %v2588 = vsel %vm2261, %v2092, %v2220
        %v2590 = vrot.slane %v2588, 1
        %v2591 = vsel %vm2265, %v2092, %v2220
        %v2593 = vrot.slane %v2591, 2
        %v2594 = vsel %vm2269, %v2092, %v2220
        %v2596 = vrot.slane %v2594, 3
        %v2599 = vsel %vm2257, %v2093, %v2221
        %v2600 = vsel %vm2261, %v2093, %v2221
        %v2602 = vrot.slane %v2600, 1
        %v2603 = vsel %vm2265, %v2093, %v2221
        %v2605 = vrot.slane %v2603, 2
        %v2606 = vsel %vm2269, %v2093, %v2221
        %v2608 = vrot.slane %v2606, 3
        %v2611 = vsel %vm2257, %v2094, %v2222
        %v2612 = vsel %vm2261, %v2094, %v2222
        %v2614 = vrot.slane %v2612, 1
        %v2615 = vsel %vm2265, %v2094, %v2222
        %v2617 = vrot.slane %v2615, 2
        %v2618 = vsel %vm2269, %v2094, %v2222
        %v2620 = vrot.slane %v2618, 3
        %v2623 = vsel %vm2257, %v2095, %v2223
        %v2624 = vsel %vm2261, %v2095, %v2223
        %v2626 = vrot.slane %v2624, 1
        %v2627 = vsel %vm2265, %v2095, %v2223
        %v2629 = vrot.slane %v2627, 2
        %v2630 = vsel %vm2269, %v2095, %v2223
        %v2632 = vrot.slane %v2630, 3
        %v2635 = vsel %vm2257, %v2096, %v2224
        %v2636 = vsel %vm2261, %v2096, %v2224
        %v2638 = vrot.slane %v2636, 1
        %v2639 = vsel %vm2265, %v2096, %v2224
        %v2641 = vrot.slane %v2639, 2
        %v2642 = vsel %vm2269, %v2096, %v2224
        %v2644 = vrot.slane %v2642, 3
        %v2647 = vsel %vm2257, %v2097, %v2225
        %v2648 = vsel %vm2261, %v2097, %v2225
        %v2650 = vrot.slane %v2648, 1
        %v2651 = vsel %vm2265, %v2097, %v2225
        %v2653 = vrot.slane %v2651, 2
        %v2654 = vsel %vm2269, %v2097, %v2225
        %v2656 = vrot.slane %v2654, 3
        %v2659 = vsel %vm2257, %v2098, %v2226
        %v2660 = vsel %vm2261, %v2098, %v2226
        %v2662 = vrot.slane %v2660, 1
        %v2663 = vsel %vm2265, %v2098, %v2226
        %v2665 = vrot.slane %v2663, 2
        %v2666 = vsel %vm2269, %v2098, %v2226
        %v2668 = vrot.slane %v2666, 3
        %v2671 = vsel %vm2257, %v2099, %v2227
        %v2672 = vsel %vm2261, %v2099, %v2227
        %v2674 = vrot.slane %v2672, 1
        %v2675 = vsel %vm2265, %v2099, %v2227
        %v2677 = vrot.slane %v2675, 2
        %v2678 = vsel %vm2269, %v2099, %v2227
        %v2680 = vrot.slane %v2678, 3
        %v2683 = vsel %vm2257, %v2100, %v2228
        %v2684 = vsel %vm2261, %v2100, %v2228
        %v2686 = vrot.slane %v2684, 1
        %v2687 = vsel %vm2265, %v2100, %v2228
        %v2689 = vrot.slane %v2687, 2
        %v2690 = vsel %vm2269, %v2100, %v2228
        %v2692 = vrot.slane %v2690, 3
        %v2695 = vsel %vm2257, %v2101, %v2229
        %v2696 = vsel %vm2261, %v2101, %v2229
        %v2698 = vrot.slane %v2696, 1
        %v2699 = vsel %vm2265, %v2101, %v2229
        %v2701 = vrot.slane %v2699, 2
        %v2702 = vsel %vm2269, %v2101, %v2229
        %v2704 = vrot.slane %v2702, 3
        %v2707 = vsel %vm2257, %v2102, %v2230
        %v2708 = vsel %vm2261, %v2102, %v2230
        %v2710 = vrot.slane %v2708, 1
        %v2711 = vsel %vm2265, %v2102, %v2230
        %v2713 = vrot.slane %v2711, 2
        %v2714 = vsel %vm2269, %v2102, %v2230
        %v2716 = vrot.slane %v2714, 3
        %v2719 = vsel %vm2257, %v2103, %v2231
        %v2720 = vsel %vm2261, %v2103, %v2231
        %v2722 = vrot.slane %v2720, 1
        %v2723 = vsel %vm2265, %v2103, %v2231
        %v2725 = vrot.slane %v2723, 2
        %v2726 = vsel %vm2269, %v2103, %v2231
        %v2728 = vrot.slane %v2726, 3
        %v2731 = vsel %vm2257, %v2104, %v2232
        %v2732 = vsel %vm2261, %v2104, %v2232
        %v2734 = vrot.slane %v2732, 1
        %v2735 = vsel %vm2265, %v2104, %v2232
        %v2737 = vrot.slane %v2735, 2
        %v2738 = vsel %vm2269, %v2104, %v2232
        %v2740 = vrot.slane %v2738, 3
        %v2743 = vsel %vm2257, %v2105, %v2233
        %v2744 = vsel %vm2261, %v2105, %v2233
        %v2746 = vrot.slane %v2744, 1
        %v2747 = vsel %vm2265, %v2105, %v2233
        %v2749 = vrot.slane %v2747, 2
        %v2750 = vsel %vm2269, %v2105, %v2233
        %v2752 = vrot.slane %v2750, 3
        %v2755 = vsel %vm2257, %v2106, %v2234
        %v2756 = vsel %vm2261, %v2106, %v2234
        %v2758 = vrot.slane %v2756, 1
        %v2759 = vsel %vm2265, %v2106, %v2234
        %v2761 = vrot.slane %v2759, 2
        %v2762 = vsel %vm2269, %v2106, %v2234
        %v2764 = vrot.slane %v2762, 3
        %v2767 = vsel %vm2257, %v2107, %v2235
        %v2768 = vsel %vm2261, %v2107, %v2235
        %v2770 = vrot.slane %v2768, 1
        %v2771 = vsel %vm2265, %v2107, %v2235
        %v2773 = vrot.slane %v2771, 2
        %v2774 = vsel %vm2269, %v2107, %v2235
        %v2776 = vrot.slane %v2774, 3
        %v2779 = vsel %vm2257, %v2108, %v2236
        %v2780 = vsel %vm2261, %v2108, %v2236
        %v2782 = vrot.slane %v2780, 1
        %v2783 = vsel %vm2265, %v2108, %v2236
        %v2785 = vrot.slane %v2783, 2
        %v2786 = vsel %vm2269, %v2108, %v2236
        %v2788 = vrot.slane %v2786, 3
        %v2791 = vsel %vm2257, %v2109, %v2237
        %v2792 = vsel %vm2261, %v2109, %v2237
        %v2794 = vrot.slane %v2792, 1
        %v2795 = vsel %vm2265, %v2109, %v2237
        %v2797 = vrot.slane %v2795, 2
        %v2798 = vsel %vm2269, %v2109, %v2237
        %v2800 = vrot.slane %v2798, 3
        %v2803 = vsel %vm2257, %v2110, %v2238
        %v2804 = vsel %vm2261, %v2110, %v2238
        %v2806 = vrot.slane %v2804, 1
        %v2807 = vsel %vm2265, %v2110, %v2238
        %v2809 = vrot.slane %v2807, 2
        %v2810 = vsel %vm2269, %v2110, %v2238
        %v2812 = vrot.slane %v2810, 3
        %v2815 = vsel %vm2257, %v2111, %v2239
        %v2816 = vsel %vm2261, %v2111, %v2239
        %v2818 = vrot.slane %v2816, 1
        %v2819 = vsel %vm2265, %v2111, %v2239
        %v2821 = vrot.slane %v2819, 2
        %v2822 = vsel %vm2269, %v2111, %v2239
        %v2824 = vrot.slane %v2822, 3
        %v2827 = vsel %vm2257, %v2112, %v2240
        %v2828 = vsel %vm2261, %v2112, %v2240
        %v2830 = vrot.slane %v2828, 1
        %v2831 = vsel %vm2265, %v2112, %v2240
        %v2833 = vrot.slane %v2831, 2
        %v2834 = vsel %vm2269, %v2112, %v2240
        %v2836 = vrot.slane %v2834, 3
        %v2839 = vsel %vm2257, %v2113, %v2241
        %v2840 = vsel %vm2261, %v2113, %v2241
        %v2842 = vrot.slane %v2840, 1
        %v2843 = vsel %vm2265, %v2113, %v2241
        %v2845 = vrot.slane %v2843, 2
        %v2846 = vsel %vm2269, %v2113, %v2241
        %v2848 = vrot.slane %v2846, 3
        %v2851 = vsel %vm2257, %v2114, %v2242
        %v2852 = vsel %vm2261, %v2114, %v2242
        %v2854 = vrot.slane %v2852, 1
        %v2855 = vsel %vm2265, %v2114, %v2242
        %v2857 = vrot.slane %v2855, 2
        %v2858 = vsel %vm2269, %v2114, %v2242
        %v2860 = vrot.slane %v2858, 3
        %v2863 = vsel %vm2257, %v2115, %v2243
        %v2864 = vsel %vm2261, %v2115, %v2243
        %v2866 = vrot.slane %v2864, 1
        %v2867 = vsel %vm2265, %v2115, %v2243
        %v2869 = vrot.slane %v2867, 2
        %v2870 = vsel %vm2269, %v2115, %v2243
        %v2872 = vrot.slane %v2870, 3
        %v2875 = vsel %vm2257, %v2116, %v2244
        %v2876 = vsel %vm2261, %v2116, %v2244
        %v2878 = vrot.slane %v2876, 1
        %v2879 = vsel %vm2265, %v2116, %v2244
        %v2881 = vrot.slane %v2879, 2
        %v2882 = vsel %vm2269, %v2116, %v2244
        %v2884 = vrot.slane %v2882, 3
        %v2887 = vsel %vm2257, %v2117, %v2245
        %v2888 = vsel %vm2261, %v2117, %v2245
        %v2890 = vrot.slane %v2888, 1
        %v2891 = vsel %vm2265, %v2117, %v2245
        %v2893 = vrot.slane %v2891, 2
        %v2894 = vsel %vm2269, %v2117, %v2245
        %v2896 = vrot.slane %v2894, 3
        %v2899 = vsel %vm2257, %v2118, %v2246
        %v2900 = vsel %vm2261, %v2118, %v2246
        %v2902 = vrot.slane %v2900, 1
        %v2903 = vsel %vm2265, %v2118, %v2246
        %v2905 = vrot.slane %v2903, 2
        %v2906 = vsel %vm2269, %v2118, %v2246
        %v2908 = vrot.slane %v2906, 3
        %v2911 = vsel %vm2257, %v2119, %v2247
        %v2912 = vsel %vm2261, %v2119, %v2247
        %v2914 = vrot.slane %v2912, 1
        %v2915 = vsel %vm2265, %v2119, %v2247
        %v2917 = vrot.slane %v2915, 2
        %v2918 = vsel %vm2269, %v2119, %v2247
        %v2920 = vrot.slane %v2918, 3
        %v2923 = vsel %vm2257, %v2120, %v2248
        %v2924 = vsel %vm2261, %v2120, %v2248
        %v2926 = vrot.slane %v2924, 1
        %v2927 = vsel %vm2265, %v2120, %v2248
        %v2929 = vrot.slane %v2927, 2
        %v2930 = vsel %vm2269, %v2120, %v2248
        %v2932 = vrot.slane %v2930, 3
        %v2935 = vsel %vm2257, %v2121, %v2249
        %v2936 = vsel %vm2261, %v2121, %v2249
        %v2938 = vrot.slane %v2936, 1
        %v2939 = vsel %vm2265, %v2121, %v2249
        %v2941 = vrot.slane %v2939, 2
        %v2942 = vsel %vm2269, %v2121, %v2249
        %v2944 = vrot.slane %v2942, 3
        %v2947 = vsel %vm2257, %v2122, %v2250
        %v2948 = vsel %vm2261, %v2122, %v2250
        %v2950 = vrot.slane %v2948, 1
        %v2951 = vsel %vm2265, %v2122, %v2250
        %v2953 = vrot.slane %v2951, 2
        %v2954 = vsel %vm2269, %v2122, %v2250
        %v2956 = vrot.slane %v2954, 3
        %v2959 = vsel %vm2257, %v2123, %v2251
        %v2960 = vsel %vm2261, %v2123, %v2251
        %v2962 = vrot.slane %v2960, 1
        %v2963 = vsel %vm2265, %v2123, %v2251
        %v2965 = vrot.slane %v2963, 2
        %v2966 = vsel %vm2269, %v2123, %v2251
        %v2968 = vrot.slane %v2966, 3
        %v2971 = vsel %vm2257, %v2124, %v2252
        %v2972 = vsel %vm2261, %v2124, %v2252
        %v2974 = vrot.slane %v2972, 1
        %v2975 = vsel %vm2265, %v2124, %v2252
        %v2977 = vrot.slane %v2975, 2
        %v2978 = vsel %vm2269, %v2124, %v2252
        %v2980 = vrot.slane %v2978, 3
        %v2983 = vsel %vm2257, %v2125, %v2253
        %v2984 = vsel %vm2261, %v2125, %v2253
        %v2986 = vrot.slane %v2984, 1
        %v2987 = vsel %vm2265, %v2125, %v2253
        %v2989 = vrot.slane %v2987, 2
        %v2990 = vsel %vm2269, %v2125, %v2253
        %v2992 = vrot.slane %v2990, 3
        %v2995 = vsel %vm2257, %v2126, %v2254
        %v2996 = vsel %vm2261, %v2126, %v2254
        %v2998 = vrot.slane %v2996, 1
        %v2999 = vsel %vm2265, %v2126, %v2254
        %v3001 = vrot.slane %v2999, 2
        %v3002 = vsel %vm2269, %v2126, %v2254
        %v3004 = vrot.slane %v3002, 3
        %v3007 = vsel %vm2257, %v2127, %v2255
        %v3008 = vsel %vm2261, %v2127, %v2255
        %v3010 = vrot.slane %v3008, 1
        %v3011 = vsel %vm2265, %v2127, %v2255
        %v3013 = vrot.slane %v3011, 2
        %v3014 = vsel %vm2269, %v2127, %v2255
        %v3016 = vrot.slane %v3014, 3
        %v3019 = vsel %vm2257, %v2128, %v2256
        %v3020 = vsel %vm2261, %v2128, %v2256
        %v3022 = vrot.slane %v3020, 1
        %v3023 = vsel %vm2265, %v2128, %v2256
        %v3025 = vrot.slane %v3023, 2
        %v3026 = vsel %vm2269, %v2128, %v2256
        %v3028 = vrot.slane %v3026, 3
        %v3285 = vunpack.c.l.bf16 %v2260
        %v3286 = vunpack.c.l.bf16 %v2264
        %v3287 = vunpack.c.l.bf16 %v2268
        %v3288 = vunpack.c.l.bf16 %v2272
        %v3289 = vunpack.c.l.bf16 %v2275
        %v3290 = vunpack.c.l.bf16 %v2278
        %v3291 = vunpack.c.l.bf16 %v2281
        %v3292 = vunpack.c.l.bf16 %v2284
        %v3293 = vunpack.c.l.bf16 %v2287
        %v3294 = vunpack.c.l.bf16 %v2290
        %v3295 = vunpack.c.l.bf16 %v2293
        %v3296 = vunpack.c.l.bf16 %v2296
        %v3297 = vunpack.c.l.bf16 %v2299
        %v3298 = vunpack.c.l.bf16 %v2302
        %v3299 = vunpack.c.l.bf16 %v2305
        %v3300 = vunpack.c.l.bf16 %v2308
        %v3301 = vunpack.c.l.bf16 %v2311
        %v3302 = vunpack.c.l.bf16 %v2314
        %v3303 = vunpack.c.l.bf16 %v2317
        %v3304 = vunpack.c.l.bf16 %v2320
        %v3305 = vunpack.c.l.bf16 %v2323
        %v3306 = vunpack.c.l.bf16 %v2326
        %v3307 = vunpack.c.l.bf16 %v2329
        %v3308 = vunpack.c.l.bf16 %v2332
        %v3309 = vunpack.c.l.bf16 %v2335
        %v3310 = vunpack.c.l.bf16 %v2338
        %v3311 = vunpack.c.l.bf16 %v2341
        %v3312 = vunpack.c.l.bf16 %v2344
        %v3313 = vunpack.c.l.bf16 %v2347
        %v3314 = vunpack.c.l.bf16 %v2350
        %v3315 = vunpack.c.l.bf16 %v2353
        %v3316 = vunpack.c.l.bf16 %v2356
        %v3317 = vunpack.c.l.bf16 %v2359
        %v3318 = vunpack.c.l.bf16 %v2362
        %v3319 = vunpack.c.l.bf16 %v2365
        %v3320 = vunpack.c.l.bf16 %v2368
        %v3321 = vunpack.c.l.bf16 %v2371
        %v3322 = vunpack.c.l.bf16 %v2374
        %v3323 = vunpack.c.l.bf16 %v2377
        %v3324 = vunpack.c.l.bf16 %v2380
        %v3325 = vunpack.c.l.bf16 %v2383
        %v3326 = vunpack.c.l.bf16 %v2386
        %v3327 = vunpack.c.l.bf16 %v2389
        %v3328 = vunpack.c.l.bf16 %v2392
        %v3329 = vunpack.c.l.bf16 %v2395
        %v3330 = vunpack.c.l.bf16 %v2398
        %v3331 = vunpack.c.l.bf16 %v2401
        %v3332 = vunpack.c.l.bf16 %v2404
        %v3333 = vunpack.c.l.bf16 %v2407
        %v3334 = vunpack.c.l.bf16 %v2410
        %v3335 = vunpack.c.l.bf16 %v2413
        %v3336 = vunpack.c.l.bf16 %v2416
        %v3337 = vunpack.c.l.bf16 %v2419
        %v3338 = vunpack.c.l.bf16 %v2422
        %v3339 = vunpack.c.l.bf16 %v2425
        %v3340 = vunpack.c.l.bf16 %v2428
        %v3341 = vunpack.c.l.bf16 %v2431
        %v3342 = vunpack.c.l.bf16 %v2434
        %v3343 = vunpack.c.l.bf16 %v2437
        %v3344 = vunpack.c.l.bf16 %v2440
        %v3345 = vunpack.c.l.bf16 %v2443
        %v3346 = vunpack.c.l.bf16 %v2446
        %v3347 = vunpack.c.l.bf16 %v2449
        %v3348 = vunpack.c.l.bf16 %v2452
        %v3349 = vunpack.c.l.bf16 %v2455
        %v3350 = vunpack.c.l.bf16 %v2458
        %v3351 = vunpack.c.l.bf16 %v2461
        %v3352 = vunpack.c.l.bf16 %v2464
        %v3353 = vunpack.c.l.bf16 %v2467
        %v3354 = vunpack.c.l.bf16 %v2470
        %v3355 = vunpack.c.l.bf16 %v2473
        %v3356 = vunpack.c.l.bf16 %v2476
        %v3357 = vunpack.c.l.bf16 %v2479
        %v3358 = vunpack.c.l.bf16 %v2482
        %v3359 = vunpack.c.l.bf16 %v2485
        %v3360 = vunpack.c.l.bf16 %v2488
        %v3361 = vunpack.c.l.bf16 %v2491
        %v3362 = vunpack.c.l.bf16 %v2494
        %v3363 = vunpack.c.l.bf16 %v2497
        %v3364 = vunpack.c.l.bf16 %v2500
        %v3365 = vunpack.c.l.bf16 %v2503
        %v3366 = vunpack.c.l.bf16 %v2506
        %v3367 = vunpack.c.l.bf16 %v2509
        %v3368 = vunpack.c.l.bf16 %v2512
        %v3369 = vunpack.c.l.bf16 %v2515
        %v3370 = vunpack.c.l.bf16 %v2518
        %v3371 = vunpack.c.l.bf16 %v2521
        %v3372 = vunpack.c.l.bf16 %v2524
        %v3373 = vunpack.c.l.bf16 %v2527
        %v3374 = vunpack.c.l.bf16 %v2530
        %v3375 = vunpack.c.l.bf16 %v2533
        %v3376 = vunpack.c.l.bf16 %v2536
        %v3377 = vunpack.c.l.bf16 %v2539
        %v3378 = vunpack.c.l.bf16 %v2542
        %v3379 = vunpack.c.l.bf16 %v2545
        %v3380 = vunpack.c.l.bf16 %v2548
        %v3381 = vunpack.c.l.bf16 %v2551
        %v3382 = vunpack.c.l.bf16 %v2554
        %v3383 = vunpack.c.l.bf16 %v2557
        %v3384 = vunpack.c.l.bf16 %v2560
        %v3385 = vunpack.c.l.bf16 %v2563
        %v3386 = vunpack.c.l.bf16 %v2566
        %v3387 = vunpack.c.l.bf16 %v2569
        %v3388 = vunpack.c.l.bf16 %v2572
        %v3389 = vunpack.c.l.bf16 %v2575
        %v3390 = vunpack.c.l.bf16 %v2578
        %v3391 = vunpack.c.l.bf16 %v2581
        %v3392 = vunpack.c.l.bf16 %v2584
        %v3393 = vunpack.c.l.bf16 %v2587
        %v3394 = vunpack.c.l.bf16 %v2590
        %v3395 = vunpack.c.l.bf16 %v2593
        %v3396 = vunpack.c.l.bf16 %v2596
        %v3397 = vunpack.c.l.bf16 %v2599
        %v3398 = vunpack.c.l.bf16 %v2602
        %v3399 = vunpack.c.l.bf16 %v2605
        %v3400 = vunpack.c.l.bf16 %v2608
        %v3401 = vunpack.c.l.bf16 %v2611
        %v3402 = vunpack.c.l.bf16 %v2614
        %v3403 = vunpack.c.l.bf16 %v2617
        %v3404 = vunpack.c.l.bf16 %v2620
        %v3405 = vunpack.c.l.bf16 %v2623
        %v3406 = vunpack.c.l.bf16 %v2626
        %v3407 = vunpack.c.l.bf16 %v2629
        %v3408 = vunpack.c.l.bf16 %v2632
        %v3409 = vunpack.c.l.bf16 %v2635
        %v3410 = vunpack.c.l.bf16 %v2638
        %v3411 = vunpack.c.l.bf16 %v2641
        %v3412 = vunpack.c.l.bf16 %v2644
        %v3413 = vunpack.c.l.bf16 %v2647
        %v3414 = vunpack.c.l.bf16 %v2650
        %v3415 = vunpack.c.l.bf16 %v2653
        %v3416 = vunpack.c.l.bf16 %v2656
        %v3417 = vunpack.c.l.bf16 %v2659
        %v3418 = vunpack.c.l.bf16 %v2662
        %v3419 = vunpack.c.l.bf16 %v2665
        %v3420 = vunpack.c.l.bf16 %v2668
        %v3421 = vunpack.c.l.bf16 %v2671
        %v3422 = vunpack.c.l.bf16 %v2674
        %v3423 = vunpack.c.l.bf16 %v2677
        %v3424 = vunpack.c.l.bf16 %v2680
        %v3425 = vunpack.c.l.bf16 %v2683
        %v3426 = vunpack.c.l.bf16 %v2686
        %v3427 = vunpack.c.l.bf16 %v2689
        %v3428 = vunpack.c.l.bf16 %v2692
        %v3429 = vunpack.c.l.bf16 %v2695
        %v3430 = vunpack.c.l.bf16 %v2698
        %v3431 = vunpack.c.l.bf16 %v2701
        %v3432 = vunpack.c.l.bf16 %v2704
        %v3433 = vunpack.c.l.bf16 %v2707
        %v3434 = vunpack.c.l.bf16 %v2710
        %v3435 = vunpack.c.l.bf16 %v2713
        %v3436 = vunpack.c.l.bf16 %v2716
        %v3437 = vunpack.c.l.bf16 %v2719
        %v3438 = vunpack.c.l.bf16 %v2722
        %v3439 = vunpack.c.l.bf16 %v2725
        %v3440 = vunpack.c.l.bf16 %v2728
        %v3441 = vunpack.c.l.bf16 %v2731
        %v3442 = vunpack.c.l.bf16 %v2734
        %v3443 = vunpack.c.l.bf16 %v2737
        %v3444 = vunpack.c.l.bf16 %v2740
        %v3445 = vunpack.c.l.bf16 %v2743
        %v3446 = vunpack.c.l.bf16 %v2746
        %v3447 = vunpack.c.l.bf16 %v2749
        %v3448 = vunpack.c.l.bf16 %v2752
        %v3449 = vunpack.c.l.bf16 %v2755
        %v3450 = vunpack.c.l.bf16 %v2758
        %v3451 = vunpack.c.l.bf16 %v2761
        %v3452 = vunpack.c.l.bf16 %v2764
        %v3453 = vunpack.c.l.bf16 %v2767
        %v3454 = vunpack.c.l.bf16 %v2770
        %v3455 = vunpack.c.l.bf16 %v2773
        %v3456 = vunpack.c.l.bf16 %v2776
        %v3457 = vunpack.c.l.bf16 %v2779
        %v3458 = vunpack.c.l.bf16 %v2782
        %v3459 = vunpack.c.l.bf16 %v2785
        %v3460 = vunpack.c.l.bf16 %v2788
        %v3461 = vunpack.c.l.bf16 %v2791
        %v3462 = vunpack.c.l.bf16 %v2794
        %v3463 = vunpack.c.l.bf16 %v2797
        %v3464 = vunpack.c.l.bf16 %v2800
        %v3465 = vunpack.c.l.bf16 %v2803
        %v3466 = vunpack.c.l.bf16 %v2806
        %v3467 = vunpack.c.l.bf16 %v2809
        %v3468 = vunpack.c.l.bf16 %v2812
        %v3469 = vunpack.c.l.bf16 %v2815
        %v3470 = vunpack.c.l.bf16 %v2818
        %v3471 = vunpack.c.l.bf16 %v2821
        %v3472 = vunpack.c.l.bf16 %v2824
        %v3473 = vunpack.c.l.bf16 %v2827
        %v3474 = vunpack.c.l.bf16 %v2830
        %v3475 = vunpack.c.l.bf16 %v2833
        %v3476 = vunpack.c.l.bf16 %v2836
        %v3477 = vunpack.c.l.bf16 %v2839
        %v3478 = vunpack.c.l.bf16 %v2842
        %v3479 = vunpack.c.l.bf16 %v2845
        %v3480 = vunpack.c.l.bf16 %v2848
        %v3481 = vunpack.c.l.bf16 %v2851
        %v3482 = vunpack.c.l.bf16 %v2854
        %v3483 = vunpack.c.l.bf16 %v2857
        %v3484 = vunpack.c.l.bf16 %v2860
        %v3485 = vunpack.c.l.bf16 %v2863
        %v3486 = vunpack.c.l.bf16 %v2866
        %v3487 = vunpack.c.l.bf16 %v2869
        %v3488 = vunpack.c.l.bf16 %v2872
        %v3489 = vunpack.c.l.bf16 %v2875
        %v3490 = vunpack.c.l.bf16 %v2878
        %v3491 = vunpack.c.l.bf16 %v2881
        %v3492 = vunpack.c.l.bf16 %v2884
        %v3493 = vunpack.c.l.bf16 %v2887
        %v3494 = vunpack.c.l.bf16 %v2890
        %v3495 = vunpack.c.l.bf16 %v2893
        %v3496 = vunpack.c.l.bf16 %v2896
        %v3497 = vunpack.c.l.bf16 %v2899
        %v3498 = vunpack.c.l.bf16 %v2902
        %v3499 = vunpack.c.l.bf16 %v2905
        %v3500 = vunpack.c.l.bf16 %v2908
        %v3501 = vunpack.c.l.bf16 %v2911
        %v3502 = vunpack.c.l.bf16 %v2914
        %v3503 = vunpack.c.l.bf16 %v2917
        %v3504 = vunpack.c.l.bf16 %v2920
        %v3505 = vunpack.c.l.bf16 %v2923
        %v3506 = vunpack.c.l.bf16 %v2926
        %v3507 = vunpack.c.l.bf16 %v2929
        %v3508 = vunpack.c.l.bf16 %v2932
        %v3509 = vunpack.c.l.bf16 %v2935
        %v3510 = vunpack.c.l.bf16 %v2938
        %v3511 = vunpack.c.l.bf16 %v2941
        %v3512 = vunpack.c.l.bf16 %v2944
        %v3513 = vunpack.c.l.bf16 %v2947
        %v3514 = vunpack.c.l.bf16 %v2950
        %v3515 = vunpack.c.l.bf16 %v2953
        %v3516 = vunpack.c.l.bf16 %v2956
        %v3517 = vunpack.c.l.bf16 %v2959
        %v3518 = vunpack.c.l.bf16 %v2962
        %v3519 = vunpack.c.l.bf16 %v2965
        %v3520 = vunpack.c.l.bf16 %v2968
        %v3521 = vunpack.c.l.bf16 %v2971
        %v3522 = vunpack.c.l.bf16 %v2974
        %v3523 = vunpack.c.l.bf16 %v2977
        %v3524 = vunpack.c.l.bf16 %v2980
        %v3525 = vunpack.c.l.bf16 %v2983
        %v3526 = vunpack.c.l.bf16 %v2986
        %v3527 = vunpack.c.l.bf16 %v2989
        %v3528 = vunpack.c.l.bf16 %v2992
        %v3529 = vunpack.c.l.bf16 %v2995
        %v3530 = vunpack.c.l.bf16 %v2998
        %v3531 = vunpack.c.l.bf16 %v3001
        %v3532 = vunpack.c.l.bf16 %v3004
        %v3533 = vunpack.c.l.bf16 %v3007
        %v3534 = vunpack.c.l.bf16 %v3010
        %v3535 = vunpack.c.l.bf16 %v3013
        %v3536 = vunpack.c.l.bf16 %v3016
        %v3537 = vunpack.c.l.bf16 %v3019
        %v3538 = vunpack.c.l.bf16 %v3022
        %v3539 = vunpack.c.l.bf16 %v3025
        %v3540 = vunpack.c.l.bf16 %v3028
        %v3797 = vrot.slane %v3285, 7
        %v3798 = vrot.slane %v3797, 2
        %v3799 = vrot.slane %v3286, 7
        %v3800 = vrot.slane %v3799, 2
        %v3801 = vrot.slane %v3287, 7
        %v3802 = vrot.slane %v3801, 2
        %v3803 = vrot.slane %v3288, 7
        %v3804 = vrot.slane %v3803, 2
        %v3805 = vrot.slane %v3289, 7
        %v3806 = vrot.slane %v3805, 2
        %v3807 = vrot.slane %v3290, 7
        %v3808 = vrot.slane %v3807, 2
        %v3809 = vrot.slane %v3291, 7
        %v3810 = vrot.slane %v3809, 2
        %v3811 = vrot.slane %v3292, 7
        %v3812 = vrot.slane %v3811, 2
        %v3813 = vrot.slane %v3293, 7
        %v3814 = vrot.slane %v3813, 2
        %v3815 = vrot.slane %v3294, 7
        %v3816 = vrot.slane %v3815, 2
        %v3817 = vrot.slane %v3295, 7
        %v3818 = vrot.slane %v3817, 2
        %v3819 = vrot.slane %v3296, 7
        %v3820 = vrot.slane %v3819, 2
        %v3821 = vrot.slane %v3297, 7
        %v3822 = vrot.slane %v3821, 2
        %v3823 = vrot.slane %v3298, 7
        %v3824 = vrot.slane %v3823, 2
        %v3825 = vrot.slane %v3299, 7
        %v3826 = vrot.slane %v3825, 2
        %v3827 = vrot.slane %v3300, 7
        %v3828 = vrot.slane %v3827, 2
        %v3829 = vrot.slane %v3301, 7
        %v3830 = vrot.slane %v3829, 2
        %v3831 = vrot.slane %v3302, 7
        %v3832 = vrot.slane %v3831, 2
        %v3833 = vrot.slane %v3303, 7
        %v3834 = vrot.slane %v3833, 2
        %v3835 = vrot.slane %v3304, 7
        %v3836 = vrot.slane %v3835, 2
        %v3837 = vrot.slane %v3305, 7
        %v3838 = vrot.slane %v3837, 2
        %v3839 = vrot.slane %v3306, 7
        %v3840 = vrot.slane %v3839, 2
        %v3841 = vrot.slane %v3307, 7
        %v3842 = vrot.slane %v3841, 2
        %v3843 = vrot.slane %v3308, 7
        %v3844 = vrot.slane %v3843, 2
        %v3845 = vrot.slane %v3309, 7
        %v3846 = vrot.slane %v3845, 2
        %v3847 = vrot.slane %v3310, 7
        %v3848 = vrot.slane %v3847, 2
        %v3849 = vrot.slane %v3311, 7
        %v3850 = vrot.slane %v3849, 2
        %v3851 = vrot.slane %v3312, 7
        %v3852 = vrot.slane %v3851, 2
        %v3853 = vrot.slane %v3313, 7
        %v3854 = vrot.slane %v3853, 2
        %v3855 = vrot.slane %v3314, 7
        %v3856 = vrot.slane %v3855, 2
        %v3857 = vrot.slane %v3315, 7
        %v3858 = vrot.slane %v3857, 2
        %v3859 = vrot.slane %v3316, 7
        %v3860 = vrot.slane %v3859, 2
        %v3861 = vrot.slane %v3317, 7
        %v3862 = vrot.slane %v3861, 2
        %v3863 = vrot.slane %v3318, 7
        %v3864 = vrot.slane %v3863, 2
        %v3865 = vrot.slane %v3319, 7
        %v3866 = vrot.slane %v3865, 2
        %v3867 = vrot.slane %v3320, 7
        %v3868 = vrot.slane %v3867, 2
        %v3869 = vrot.slane %v3321, 7
        %v3870 = vrot.slane %v3869, 2
        %v3871 = vrot.slane %v3322, 7
        %v3872 = vrot.slane %v3871, 2
        %v3873 = vrot.slane %v3323, 7
        %v3874 = vrot.slane %v3873, 2
        %v3875 = vrot.slane %v3324, 7
        %v3876 = vrot.slane %v3875, 2
        %v3877 = vrot.slane %v3325, 7
        %v3878 = vrot.slane %v3877, 2
        %v3879 = vrot.slane %v3326, 7
        %v3880 = vrot.slane %v3879, 2
        %v3881 = vrot.slane %v3327, 7
        %v3882 = vrot.slane %v3881, 2
        %v3883 = vrot.slane %v3328, 7
        %v3884 = vrot.slane %v3883, 2
        %v3885 = vrot.slane %v3329, 7
        %v3886 = vrot.slane %v3885, 2
        %v3887 = vrot.slane %v3330, 7
        %v3888 = vrot.slane %v3887, 2
        %v3889 = vrot.slane %v3331, 7
        %v3890 = vrot.slane %v3889, 2
        %v3891 = vrot.slane %v3332, 7
        %v3892 = vrot.slane %v3891, 2
        %v3893 = vrot.slane %v3333, 7
        %v3894 = vrot.slane %v3893, 2
        %v3895 = vrot.slane %v3334, 7
        %v3896 = vrot.slane %v3895, 2
        %v3897 = vrot.slane %v3335, 7
        %v3898 = vrot.slane %v3897, 2
        %v3899 = vrot.slane %v3336, 7
        %v3900 = vrot.slane %v3899, 2
        %v3901 = vrot.slane %v3337, 7
        %v3902 = vrot.slane %v3901, 2
        %v3903 = vrot.slane %v3338, 7
        %v3904 = vrot.slane %v3903, 2
        %v3905 = vrot.slane %v3339, 7
        %v3906 = vrot.slane %v3905, 2
        %v3907 = vrot.slane %v3340, 7
        %v3908 = vrot.slane %v3907, 2
        %v3909 = vrot.slane %v3341, 7
        %v3910 = vrot.slane %v3909, 2
        %v3911 = vrot.slane %v3342, 7
        %v3912 = vrot.slane %v3911, 2
        %v3913 = vrot.slane %v3343, 7
        %v3914 = vrot.slane %v3913, 2
        %v3915 = vrot.slane %v3344, 7
        %v3916 = vrot.slane %v3915, 2
        %v3917 = vrot.slane %v3345, 7
        %v3918 = vrot.slane %v3917, 2
        %v3919 = vrot.slane %v3346, 7
        %v3920 = vrot.slane %v3919, 2
        %v3921 = vrot.slane %v3347, 7
        %v3922 = vrot.slane %v3921, 2
        %v3923 = vrot.slane %v3348, 7
        %v3924 = vrot.slane %v3923, 2
        %v3925 = vrot.slane %v3349, 7
        %v3926 = vrot.slane %v3925, 2
        %v3927 = vrot.slane %v3350, 7
        %v3928 = vrot.slane %v3927, 2
        %v3929 = vrot.slane %v3351, 7
        %v3930 = vrot.slane %v3929, 2
        %v3931 = vrot.slane %v3352, 7
        %v3932 = vrot.slane %v3931, 2
        %v3933 = vrot.slane %v3353, 7
        %v3934 = vrot.slane %v3933, 2
        %v3935 = vrot.slane %v3354, 7
        %v3936 = vrot.slane %v3935, 2
        %v3937 = vrot.slane %v3355, 7
        %v3938 = vrot.slane %v3937, 2
        %v3939 = vrot.slane %v3356, 7
        %v3940 = vrot.slane %v3939, 2
        %v3941 = vrot.slane %v3357, 7
        %v3942 = vrot.slane %v3941, 2
        %v3943 = vrot.slane %v3358, 7
        %v3944 = vrot.slane %v3943, 2
        %v3945 = vrot.slane %v3359, 7
        %v3946 = vrot.slane %v3945, 2
        %v3947 = vrot.slane %v3360, 7
        %v3948 = vrot.slane %v3947, 2
        %v3949 = vrot.slane %v3361, 7
        %v3950 = vrot.slane %v3949, 2
        %v3951 = vrot.slane %v3362, 7
        %v3952 = vrot.slane %v3951, 2
        %v3953 = vrot.slane %v3363, 7
        %v3954 = vrot.slane %v3953, 2
        %v3955 = vrot.slane %v3364, 7
        %v3956 = vrot.slane %v3955, 2
        %v3957 = vrot.slane %v3365, 7
        %v3958 = vrot.slane %v3957, 2
        %v3959 = vrot.slane %v3366, 7
        %v3960 = vrot.slane %v3959, 2
        %v3961 = vrot.slane %v3367, 7
        %v3962 = vrot.slane %v3961, 2
        %v3963 = vrot.slane %v3368, 7
        %v3964 = vrot.slane %v3963, 2
        %v3965 = vrot.slane %v3369, 7
        %v3966 = vrot.slane %v3965, 2
        %v3967 = vrot.slane %v3370, 7
        %v3968 = vrot.slane %v3967, 2
        %v3969 = vrot.slane %v3371, 7
        %v3970 = vrot.slane %v3969, 2
        %v3971 = vrot.slane %v3372, 7
        %v3972 = vrot.slane %v3971, 2
        %v3973 = vrot.slane %v3373, 7
        %v3974 = vrot.slane %v3973, 2
        %v3975 = vrot.slane %v3374, 7
        %v3976 = vrot.slane %v3975, 2
        %v3977 = vrot.slane %v3375, 7
        %v3978 = vrot.slane %v3977, 2
        %v3979 = vrot.slane %v3376, 7
        %v3980 = vrot.slane %v3979, 2
        %v3981 = vrot.slane %v3377, 7
        %v3982 = vrot.slane %v3981, 2
        %v3983 = vrot.slane %v3378, 7
        %v3984 = vrot.slane %v3983, 2
        %v3985 = vrot.slane %v3379, 7
        %v3986 = vrot.slane %v3985, 2
        %v3987 = vrot.slane %v3380, 7
        %v3988 = vrot.slane %v3987, 2
        %v3989 = vrot.slane %v3381, 7
        %v3990 = vrot.slane %v3989, 2
        %v3991 = vrot.slane %v3382, 7
        %v3992 = vrot.slane %v3991, 2
        %v3993 = vrot.slane %v3383, 7
        %v3994 = vrot.slane %v3993, 2
        %v3995 = vrot.slane %v3384, 7
        %v3996 = vrot.slane %v3995, 2
        %v3997 = vrot.slane %v3385, 7
        %v3998 = vrot.slane %v3997, 2
        %v3999 = vrot.slane %v3386, 7
        %v4000 = vrot.slane %v3999, 2
        %v4001 = vrot.slane %v3387, 7
        %v4002 = vrot.slane %v4001, 2
        %v4003 = vrot.slane %v3388, 7
        %v4004 = vrot.slane %v4003, 2
        %v4005 = vrot.slane %v3389, 7
        %v4006 = vrot.slane %v4005, 2
        %v4007 = vrot.slane %v3390, 7
        %v4008 = vrot.slane %v4007, 2
        %v4009 = vrot.slane %v3391, 7
        %v4010 = vrot.slane %v4009, 2
        %v4011 = vrot.slane %v3392, 7
        %v4012 = vrot.slane %v4011, 2
        %v4013 = vrot.slane %v3393, 7
        %v4014 = vrot.slane %v4013, 2
        %v4015 = vrot.slane %v3394, 7
        %v4016 = vrot.slane %v4015, 2
        %v4017 = vrot.slane %v3395, 7
        %v4018 = vrot.slane %v4017, 2
        %v4019 = vrot.slane %v3396, 7
        %v4020 = vrot.slane %v4019, 2
        %v4021 = vrot.slane %v3397, 7
        %v4022 = vrot.slane %v4021, 2
        %v4023 = vrot.slane %v3398, 7
        %v4024 = vrot.slane %v4023, 2
        %v4025 = vrot.slane %v3399, 7
        %v4026 = vrot.slane %v4025, 2
        %v4027 = vrot.slane %v3400, 7
        %v4028 = vrot.slane %v4027, 2
        %v4029 = vrot.slane %v3401, 7
        %v4030 = vrot.slane %v4029, 2
        %v4031 = vrot.slane %v3402, 7
        %v4032 = vrot.slane %v4031, 2
        %v4033 = vrot.slane %v3403, 7
        %v4034 = vrot.slane %v4033, 2
        %v4035 = vrot.slane %v3404, 7
        %v4036 = vrot.slane %v4035, 2
        %v4037 = vrot.slane %v3405, 7
        %v4038 = vrot.slane %v4037, 2
        %v4039 = vrot.slane %v3406, 7
        %v4040 = vrot.slane %v4039, 2
        %v4041 = vrot.slane %v3407, 7
        %v4042 = vrot.slane %v4041, 2
        %v4043 = vrot.slane %v3408, 7
        %v4044 = vrot.slane %v4043, 2
        %v4045 = vrot.slane %v3409, 7
        %v4046 = vrot.slane %v4045, 2
        %v4047 = vrot.slane %v3410, 7
        %v4048 = vrot.slane %v4047, 2
        %v4049 = vrot.slane %v3411, 7
        %v4050 = vrot.slane %v4049, 2
        %v4051 = vrot.slane %v3412, 7
        %v4052 = vrot.slane %v4051, 2
        %v4053 = vrot.slane %v3413, 7
        %v4054 = vrot.slane %v4053, 2
        %v4055 = vrot.slane %v3414, 7
        %v4056 = vrot.slane %v4055, 2
        %v4057 = vrot.slane %v3415, 7
        %v4058 = vrot.slane %v4057, 2
        %v4059 = vrot.slane %v3416, 7
        %v4060 = vrot.slane %v4059, 2
        %v4061 = vrot.slane %v3417, 7
        %v4062 = vrot.slane %v4061, 2
        %v4063 = vrot.slane %v3418, 7
        %v4064 = vrot.slane %v4063, 2
        %v4065 = vrot.slane %v3419, 7
        %v4066 = vrot.slane %v4065, 2
        %v4067 = vrot.slane %v3420, 7
        %v4068 = vrot.slane %v4067, 2
        %v4069 = vrot.slane %v3421, 7
        %v4070 = vrot.slane %v4069, 2
        %v4071 = vrot.slane %v3422, 7
        %v4072 = vrot.slane %v4071, 2
        %v4073 = vrot.slane %v3423, 7
        %v4074 = vrot.slane %v4073, 2
        %v4075 = vrot.slane %v3424, 7
        %v4076 = vrot.slane %v4075, 2
        %v4077 = vrot.slane %v3425, 7
        %v4078 = vrot.slane %v4077, 2
        %v4079 = vrot.slane %v3426, 7
        %v4080 = vrot.slane %v4079, 2
        %v4081 = vrot.slane %v3427, 7
        %v4082 = vrot.slane %v4081, 2
        %v4083 = vrot.slane %v3428, 7
        %v4084 = vrot.slane %v4083, 2
        %v4085 = vrot.slane %v3429, 7
        %v4086 = vrot.slane %v4085, 2
        %v4087 = vrot.slane %v3430, 7
        %v4088 = vrot.slane %v4087, 2
        %v4089 = vrot.slane %v3431, 7
        %v4090 = vrot.slane %v4089, 2
        %v4091 = vrot.slane %v3432, 7
        %v4092 = vrot.slane %v4091, 2
        %v4093 = vrot.slane %v3433, 7
        %v4094 = vrot.slane %v4093, 2
        %v4095 = vrot.slane %v3434, 7
        %v4096 = vrot.slane %v4095, 2
        %v4097 = vrot.slane %v3435, 7
        %v4098 = vrot.slane %v4097, 2
        %v4099 = vrot.slane %v3436, 7
        %v4100 = vrot.slane %v4099, 2
        %v4101 = vrot.slane %v3437, 7
        %v4102 = vrot.slane %v4101, 2
        %v4103 = vrot.slane %v3438, 7
        %v4104 = vrot.slane %v4103, 2
        %v4105 = vrot.slane %v3439, 7
        %v4106 = vrot.slane %v4105, 2
        %v4107 = vrot.slane %v3440, 7
        %v4108 = vrot.slane %v4107, 2
        %v4109 = vrot.slane %v3441, 7
        %v4110 = vrot.slane %v4109, 2
        %v4111 = vrot.slane %v3442, 7
        %v4112 = vrot.slane %v4111, 2
        %v4113 = vrot.slane %v3443, 7
        %v4114 = vrot.slane %v4113, 2
        %v4115 = vrot.slane %v3444, 7
        %v4116 = vrot.slane %v4115, 2
        %v4117 = vrot.slane %v3445, 7
        %v4118 = vrot.slane %v4117, 2
        %v4119 = vrot.slane %v3446, 7
        %v4120 = vrot.slane %v4119, 2
        %v4121 = vrot.slane %v3447, 7
        %v4122 = vrot.slane %v4121, 2
        %v4123 = vrot.slane %v3448, 7
        %v4124 = vrot.slane %v4123, 2
        %v4125 = vrot.slane %v3449, 7
        %v4126 = vrot.slane %v4125, 2
        %v4127 = vrot.slane %v3450, 7
        %v4128 = vrot.slane %v4127, 2
        %v4129 = vrot.slane %v3451, 7
        %v4130 = vrot.slane %v4129, 2
        %v4131 = vrot.slane %v3452, 7
        %v4132 = vrot.slane %v4131, 2
        %v4133 = vrot.slane %v3453, 7
        %v4134 = vrot.slane %v4133, 2
        %v4135 = vrot.slane %v3454, 7
        %v4136 = vrot.slane %v4135, 2
        %v4137 = vrot.slane %v3455, 7
        %v4138 = vrot.slane %v4137, 2
        %v4139 = vrot.slane %v3456, 7
        %v4140 = vrot.slane %v4139, 2
        %v4141 = vrot.slane %v3457, 7
        %v4142 = vrot.slane %v4141, 2
        %v4143 = vrot.slane %v3458, 7
        %v4144 = vrot.slane %v4143, 2
        %v4145 = vrot.slane %v3459, 7
        %v4146 = vrot.slane %v4145, 2
        %v4147 = vrot.slane %v3460, 7
        %v4148 = vrot.slane %v4147, 2
        %v4149 = vrot.slane %v3461, 7
        %v4150 = vrot.slane %v4149, 2
        %v4151 = vrot.slane %v3462, 7
        %v4152 = vrot.slane %v4151, 2
        %v4153 = vrot.slane %v3463, 7
        %v4154 = vrot.slane %v4153, 2
        %v4155 = vrot.slane %v3464, 7
        %v4156 = vrot.slane %v4155, 2
        %v4157 = vrot.slane %v3465, 7
        %v4158 = vrot.slane %v4157, 2
        %v4159 = vrot.slane %v3466, 7
        %v4160 = vrot.slane %v4159, 2
        %v4161 = vrot.slane %v3467, 7
        %v4162 = vrot.slane %v4161, 2
        %v4163 = vrot.slane %v3468, 7
        %v4164 = vrot.slane %v4163, 2
        %v4165 = vrot.slane %v3469, 7
        %v4166 = vrot.slane %v4165, 2
        %v4167 = vrot.slane %v3470, 7
        %v4168 = vrot.slane %v4167, 2
        %v4169 = vrot.slane %v3471, 7
        %v4170 = vrot.slane %v4169, 2
        %v4171 = vrot.slane %v3472, 7
        %v4172 = vrot.slane %v4171, 2
        %v4173 = vrot.slane %v3473, 7
        %v4174 = vrot.slane %v4173, 2
        %v4175 = vrot.slane %v3474, 7
        %v4176 = vrot.slane %v4175, 2
        %v4177 = vrot.slane %v3475, 7
        %v4178 = vrot.slane %v4177, 2
        %v4179 = vrot.slane %v3476, 7
        %v4180 = vrot.slane %v4179, 2
        %v4181 = vrot.slane %v3477, 7
        %v4182 = vrot.slane %v4181, 2
        %v4183 = vrot.slane %v3478, 7
        %v4184 = vrot.slane %v4183, 2
        %v4185 = vrot.slane %v3479, 7
        %v4186 = vrot.slane %v4185, 2
        %v4187 = vrot.slane %v3480, 7
        %v4188 = vrot.slane %v4187, 2
        %v4189 = vrot.slane %v3481, 7
        %v4190 = vrot.slane %v4189, 2
        %v4191 = vrot.slane %v3482, 7
        %v4192 = vrot.slane %v4191, 2
        %v4193 = vrot.slane %v3483, 7
        %v4194 = vrot.slane %v4193, 2
        %v4195 = vrot.slane %v3484, 7
        %v4196 = vrot.slane %v4195, 2
        %v4197 = vrot.slane %v3485, 7
        %v4198 = vrot.slane %v4197, 2
        %v4199 = vrot.slane %v3486, 7
        %v4200 = vrot.slane %v4199, 2
        %v4201 = vrot.slane %v3487, 7
        %v4202 = vrot.slane %v4201, 2
        %v4203 = vrot.slane %v3488, 7
        %v4204 = vrot.slane %v4203, 2
        %v4205 = vrot.slane %v3489, 7
        %v4206 = vrot.slane %v4205, 2
        %v4207 = vrot.slane %v3490, 7
        %v4208 = vrot.slane %v4207, 2
        %v4209 = vrot.slane %v3491, 7
        %v4210 = vrot.slane %v4209, 2
        %v4211 = vrot.slane %v3492, 7
        %v4212 = vrot.slane %v4211, 2
        %v4213 = vrot.slane %v3493, 7
        %v4214 = vrot.slane %v4213, 2
        %v4215 = vrot.slane %v3494, 7
        %v4216 = vrot.slane %v4215, 2
        %v4217 = vrot.slane %v3495, 7
        %v4218 = vrot.slane %v4217, 2
        %v4219 = vrot.slane %v3496, 7
        %v4220 = vrot.slane %v4219, 2
        %v4221 = vrot.slane %v3497, 7
        %v4222 = vrot.slane %v4221, 2
        %v4223 = vrot.slane %v3498, 7
        %v4224 = vrot.slane %v4223, 2
        %v4225 = vrot.slane %v3499, 7
        %v4226 = vrot.slane %v4225, 2
        %v4227 = vrot.slane %v3500, 7
        %v4228 = vrot.slane %v4227, 2
        %v4229 = vrot.slane %v3501, 7
        %v4230 = vrot.slane %v4229, 2
        %v4231 = vrot.slane %v3502, 7
        %v4232 = vrot.slane %v4231, 2
        %v4233 = vrot.slane %v3503, 7
        %v4234 = vrot.slane %v4233, 2
        %v4235 = vrot.slane %v3504, 7
        %v4236 = vrot.slane %v4235, 2
        %v4237 = vrot.slane %v3505, 7
        %v4238 = vrot.slane %v4237, 2
        %v4239 = vrot.slane %v3506, 7
        %v4240 = vrot.slane %v4239, 2
        %v4241 = vrot.slane %v3507, 7
        %v4242 = vrot.slane %v4241, 2
        %v4243 = vrot.slane %v3508, 7
        %v4244 = vrot.slane %v4243, 2
        %v4245 = vrot.slane %v3509, 7
        %v4246 = vrot.slane %v4245, 2
        %v4247 = vrot.slane %v3510, 7
        %v4248 = vrot.slane %v4247, 2
        %v4249 = vrot.slane %v3511, 7
        %v4250 = vrot.slane %v4249, 2
        %v4251 = vrot.slane %v3512, 7
        %v4252 = vrot.slane %v4251, 2
        %v4253 = vrot.slane %v3513, 7
        %v4254 = vrot.slane %v4253, 2
        %v4255 = vrot.slane %v3514, 7
        %v4256 = vrot.slane %v4255, 2
        %v4257 = vrot.slane %v3515, 7
        %v4258 = vrot.slane %v4257, 2
        %v4259 = vrot.slane %v3516, 7
        %v4260 = vrot.slane %v4259, 2
        %v4261 = vrot.slane %v3517, 7
        %v4262 = vrot.slane %v4261, 2
        %v4263 = vrot.slane %v3518, 7
        %v4264 = vrot.slane %v4263, 2
        %v4265 = vrot.slane %v3519, 7
        %v4266 = vrot.slane %v4265, 2
        %v4267 = vrot.slane %v3520, 7
        %v4268 = vrot.slane %v4267, 2
        %v4269 = vrot.slane %v3521, 7
        %v4270 = vrot.slane %v4269, 2
        %v4271 = vrot.slane %v3522, 7
        %v4272 = vrot.slane %v4271, 2
        %v4273 = vrot.slane %v3523, 7
        %v4274 = vrot.slane %v4273, 2
        %v4275 = vrot.slane %v3524, 7
        %v4276 = vrot.slane %v4275, 2
        %v4277 = vrot.slane %v3525, 7
        %v4278 = vrot.slane %v4277, 2
        %v4279 = vrot.slane %v3526, 7
        %v4280 = vrot.slane %v4279, 2
        %v4281 = vrot.slane %v3527, 7
        %v4282 = vrot.slane %v4281, 2
        %v4283 = vrot.slane %v3528, 7
        %v4284 = vrot.slane %v4283, 2
        %v4285 = vrot.slane %v3529, 7
        %v4286 = vrot.slane %v4285, 2
        %v4287 = vrot.slane %v3530, 7
        %v4288 = vrot.slane %v4287, 2
        %v4289 = vrot.slane %v3531, 7
        %v4290 = vrot.slane %v4289, 2
        %v4291 = vrot.slane %v3532, 7
        %v4292 = vrot.slane %v4291, 2
        %v4293 = vrot.slane %v3533, 7
        %v4294 = vrot.slane %v4293, 2
        %v4295 = vrot.slane %v3534, 7
        %v4296 = vrot.slane %v4295, 2
        %v4297 = vrot.slane %v3535, 7
        %v4298 = vrot.slane %v4297, 2
        %v4299 = vrot.slane %v3536, 7
        %v4300 = vrot.slane %v4299, 2
        %v4301 = vrot.slane %v3537, 7
        %v4302 = vrot.slane %v4301, 2
        %v4303 = vrot.slane %v3538, 7
        %v4304 = vrot.slane %v4303, 2
        %v4305 = vrot.slane %v3539, 7
        %v4306 = vrot.slane %v4305, 2
        %v4307 = vrot.slane %v3540, 7
        %v4308 = vrot.slane %v4307, 2
        %v4565 = vmax.f32 %v3285, %v3798
        %v4566 = vmax.f32 %v3286, %v3800
        %v4567 = vmax.f32 %v3287, %v3802
        %v4568 = vmax.f32 %v3288, %v3804
        %v4569 = vmax.f32 %v3289, %v3806
        %v4570 = vmax.f32 %v3290, %v3808
        %v4571 = vmax.f32 %v3291, %v3810
        %v4572 = vmax.f32 %v3292, %v3812
        %v4573 = vmax.f32 %v3293, %v3814
        %v4574 = vmax.f32 %v3294, %v3816
        %v4575 = vmax.f32 %v3295, %v3818
        %v4576 = vmax.f32 %v3296, %v3820
        %v4577 = vmax.f32 %v3297, %v3822
        %v4578 = vmax.f32 %v3298, %v3824
        %v4579 = vmax.f32 %v3299, %v3826
        %v4580 = vmax.f32 %v3300, %v3828
        %v4581 = vmax.f32 %v3301, %v3830
        %v4582 = vmax.f32 %v3302, %v3832
        %v4583 = vmax.f32 %v3303, %v3834
        %v4584 = vmax.f32 %v3304, %v3836
        %v4585 = vmax.f32 %v3305, %v3838
        %v4586 = vmax.f32 %v3306, %v3840
        %v4587 = vmax.f32 %v3307, %v3842
        %v4588 = vmax.f32 %v3308, %v3844
        %v4589 = vmax.f32 %v3309, %v3846
        %v4590 = vmax.f32 %v3310, %v3848
        %v4591 = vmax.f32 %v3311, %v3850
        %v4592 = vmax.f32 %v3312, %v3852
        %v4593 = vmax.f32 %v3313, %v3854
        %v4594 = vmax.f32 %v3314, %v3856
        %v4595 = vmax.f32 %v3315, %v3858
        %v4596 = vmax.f32 %v3316, %v3860
        %v4597 = vmax.f32 %v3317, %v3862
        %v4598 = vmax.f32 %v3318, %v3864
        %v4599 = vmax.f32 %v3319, %v3866
        %v4600 = vmax.f32 %v3320, %v3868
        %v4601 = vmax.f32 %v3321, %v3870
        %v4602 = vmax.f32 %v3322, %v3872
        %v4603 = vmax.f32 %v3323, %v3874
        %v4604 = vmax.f32 %v3324, %v3876
        %v4605 = vmax.f32 %v3325, %v3878
        %v4606 = vmax.f32 %v3326, %v3880
        %v4607 = vmax.f32 %v3327, %v3882
        %v4608 = vmax.f32 %v3328, %v3884
        %v4609 = vmax.f32 %v3329, %v3886
        %v4610 = vmax.f32 %v3330, %v3888
        %v4611 = vmax.f32 %v3331, %v3890
        %v4612 = vmax.f32 %v3332, %v3892
        %v4613 = vmax.f32 %v3333, %v3894
        %v4614 = vmax.f32 %v3334, %v3896
        %v4615 = vmax.f32 %v3335, %v3898
        %v4616 = vmax.f32 %v3336, %v3900
        %v4617 = vmax.f32 %v3337, %v3902
        %v4618 = vmax.f32 %v3338, %v3904
        %v4619 = vmax.f32 %v3339, %v3906
        %v4620 = vmax.f32 %v3340, %v3908
        %v4621 = vmax.f32 %v3341, %v3910
        %v4622 = vmax.f32 %v3342, %v3912
        %v4623 = vmax.f32 %v3343, %v3914
        %v4624 = vmax.f32 %v3344, %v3916
        %v4625 = vmax.f32 %v3345, %v3918
        %v4626 = vmax.f32 %v3346, %v3920
        %v4627 = vmax.f32 %v3347, %v3922
        %v4628 = vmax.f32 %v3348, %v3924
        %v4629 = vmax.f32 %v3349, %v3926
        %v4630 = vmax.f32 %v3350, %v3928
        %v4631 = vmax.f32 %v3351, %v3930
        %v4632 = vmax.f32 %v3352, %v3932
        %v4633 = vmax.f32 %v3353, %v3934
        %v4634 = vmax.f32 %v3354, %v3936
        %v4635 = vmax.f32 %v3355, %v3938
        %v4636 = vmax.f32 %v3356, %v3940
        %v4637 = vmax.f32 %v3357, %v3942
        %v4638 = vmax.f32 %v3358, %v3944
        %v4639 = vmax.f32 %v3359, %v3946
        %v4640 = vmax.f32 %v3360, %v3948
        %v4641 = vmax.f32 %v3361, %v3950
        %v4642 = vmax.f32 %v3362, %v3952
        %v4643 = vmax.f32 %v3363, %v3954
        %v4644 = vmax.f32 %v3364, %v3956
        %v4645 = vmax.f32 %v3365, %v3958
        %v4646 = vmax.f32 %v3366, %v3960
        %v4647 = vmax.f32 %v3367, %v3962
        %v4648 = vmax.f32 %v3368, %v3964
        %v4649 = vmax.f32 %v3369, %v3966
        %v4650 = vmax.f32 %v3370, %v3968
        %v4651 = vmax.f32 %v3371, %v3970
        %v4652 = vmax.f32 %v3372, %v3972
        %v4653 = vmax.f32 %v3373, %v3974
        %v4654 = vmax.f32 %v3374, %v3976
        %v4655 = vmax.f32 %v3375, %v3978
        %v4656 = vmax.f32 %v3376, %v3980
        %v4657 = vmax.f32 %v3377, %v3982
        %v4658 = vmax.f32 %v3378, %v3984
        %v4659 = vmax.f32 %v3379, %v3986
        %v4660 = vmax.f32 %v3380, %v3988
        %v4661 = vmax.f32 %v3381, %v3990
        %v4662 = vmax.f32 %v3382, %v3992
        %v4663 = vmax.f32 %v3383, %v3994
        %v4664 = vmax.f32 %v3384, %v3996
        %v4665 = vmax.f32 %v3385, %v3998
        %v4666 = vmax.f32 %v3386, %v4000
        %v4667 = vmax.f32 %v3387, %v4002
        %v4668 = vmax.f32 %v3388, %v4004
        %v4669 = vmax.f32 %v3389, %v4006
        %v4670 = vmax.f32 %v3390, %v4008
        %v4671 = vmax.f32 %v3391, %v4010
        %v4672 = vmax.f32 %v3392, %v4012
        %v4673 = vmax.f32 %v3393, %v4014
        %v4674 = vmax.f32 %v3394, %v4016
        %v4675 = vmax.f32 %v3395, %v4018
        %v4676 = vmax.f32 %v3396, %v4020
        %v4677 = vmax.f32 %v3397, %v4022
        %v4678 = vmax.f32 %v3398, %v4024
        %v4679 = vmax.f32 %v3399, %v4026
        %v4680 = vmax.f32 %v3400, %v4028
        %v4681 = vmax.f32 %v3401, %v4030
        %v4682 = vmax.f32 %v3402, %v4032
        %v4683 = vmax.f32 %v3403, %v4034
        %v4684 = vmax.f32 %v3404, %v4036
        %v4685 = vmax.f32 %v3405, %v4038
        %v4686 = vmax.f32 %v3406, %v4040
        %v4687 = vmax.f32 %v3407, %v4042
        %v4688 = vmax.f32 %v3408, %v4044
        %v4689 = vmax.f32 %v3409, %v4046
        %v4690 = vmax.f32 %v3410, %v4048
        %v4691 = vmax.f32 %v3411, %v4050
        %v4692 = vmax.f32 %v3412, %v4052
        %v4693 = vmax.f32 %v3413, %v4054
        %v4694 = vmax.f32 %v3414, %v4056
        %v4695 = vmax.f32 %v3415, %v4058
        %v4696 = vmax.f32 %v3416, %v4060
        %v4697 = vmax.f32 %v3417, %v4062
        %v4698 = vmax.f32 %v3418, %v4064
        %v4699 = vmax.f32 %v3419, %v4066
        %v4700 = vmax.f32 %v3420, %v4068
        %v4701 = vmax.f32 %v3421, %v4070
        %v4702 = vmax.f32 %v3422, %v4072
        %v4703 = vmax.f32 %v3423, %v4074
        %v4704 = vmax.f32 %v3424, %v4076
        %v4705 = vmax.f32 %v3425, %v4078
        %v4706 = vmax.f32 %v3426, %v4080
        %v4707 = vmax.f32 %v3427, %v4082
        %v4708 = vmax.f32 %v3428, %v4084
        %v4709 = vmax.f32 %v3429, %v4086
        %v4710 = vmax.f32 %v3430, %v4088
        %v4711 = vmax.f32 %v3431, %v4090
        %v4712 = vmax.f32 %v3432, %v4092
        %v4713 = vmax.f32 %v3433, %v4094
        %v4714 = vmax.f32 %v3434, %v4096
        %v4715 = vmax.f32 %v3435, %v4098
        %v4716 = vmax.f32 %v3436, %v4100
        %v4717 = vmax.f32 %v3437, %v4102
        %v4718 = vmax.f32 %v3438, %v4104
        %v4719 = vmax.f32 %v3439, %v4106
        %v4720 = vmax.f32 %v3440, %v4108
        %v4721 = vmax.f32 %v3441, %v4110
        %v4722 = vmax.f32 %v3442, %v4112
        %v4723 = vmax.f32 %v3443, %v4114
        %v4724 = vmax.f32 %v3444, %v4116
        %v4725 = vmax.f32 %v3445, %v4118
        %v4726 = vmax.f32 %v3446, %v4120
        %v4727 = vmax.f32 %v3447, %v4122
        %v4728 = vmax.f32 %v3448, %v4124
        %v4729 = vmax.f32 %v3449, %v4126
        %v4730 = vmax.f32 %v3450, %v4128
        %v4731 = vmax.f32 %v3451, %v4130
        %v4732 = vmax.f32 %v3452, %v4132
        %v4733 = vmax.f32 %v3453, %v4134
        %v4734 = vmax.f32 %v3454, %v4136
        %v4735 = vmax.f32 %v3455, %v4138
        %v4736 = vmax.f32 %v3456, %v4140
        %v4737 = vmax.f32 %v3457, %v4142
        %v4738 = vmax.f32 %v3458, %v4144
        %v4739 = vmax.f32 %v3459, %v4146
        %v4740 = vmax.f32 %v3460, %v4148
        %v4741 = vmax.f32 %v3461, %v4150
        %v4742 = vmax.f32 %v3462, %v4152
        %v4743 = vmax.f32 %v3463, %v4154
        %v4744 = vmax.f32 %v3464, %v4156
        %v4745 = vmax.f32 %v3465, %v4158
        %v4746 = vmax.f32 %v3466, %v4160
        %v4747 = vmax.f32 %v3467, %v4162
        %v4748 = vmax.f32 %v3468, %v4164
        %v4749 = vmax.f32 %v3469, %v4166
        %v4750 = vmax.f32 %v3470, %v4168
        %v4751 = vmax.f32 %v3471, %v4170
        %v4752 = vmax.f32 %v3472, %v4172
        %v4753 = vmax.f32 %v3473, %v4174
        %v4754 = vmax.f32 %v3474, %v4176
        %v4755 = vmax.f32 %v3475, %v4178
        %v4756 = vmax.f32 %v3476, %v4180
        %v4757 = vmax.f32 %v3477, %v4182
        %v4758 = vmax.f32 %v3478, %v4184
        %v4759 = vmax.f32 %v3479, %v4186
        %v4760 = vmax.f32 %v3480, %v4188
        %v4761 = vmax.f32 %v3481, %v4190
        %v4762 = vmax.f32 %v3482, %v4192
        %v4763 = vmax.f32 %v3483, %v4194
        %v4764 = vmax.f32 %v3484, %v4196
        %v4765 = vmax.f32 %v3485, %v4198
        %v4766 = vmax.f32 %v3486, %v4200
        %v4767 = vmax.f32 %v3487, %v4202
        %v4768 = vmax.f32 %v3488, %v4204
        %v4769 = vmax.f32 %v3489, %v4206
        %v4770 = vmax.f32 %v3490, %v4208
        %v4771 = vmax.f32 %v3491, %v4210
        %v4772 = vmax.f32 %v3492, %v4212
        %v4773 = vmax.f32 %v3493, %v4214
        %v4774 = vmax.f32 %v3494, %v4216
        %v4775 = vmax.f32 %v3495, %v4218
        %v4776 = vmax.f32 %v3496, %v4220
        %v4777 = vmax.f32 %v3497, %v4222
        %v4778 = vmax.f32 %v3498, %v4224
        %v4779 = vmax.f32 %v3499, %v4226
        %v4780 = vmax.f32 %v3500, %v4228
        %v4781 = vmax.f32 %v3501, %v4230
        %v4782 = vmax.f32 %v3502, %v4232
        %v4783 = vmax.f32 %v3503, %v4234
        %v4784 = vmax.f32 %v3504, %v4236
        %v4785 = vmax.f32 %v3505, %v4238
        %v4786 = vmax.f32 %v3506, %v4240
        %v4787 = vmax.f32 %v3507, %v4242
        %v4788 = vmax.f32 %v3508, %v4244
        %v4789 = vmax.f32 %v3509, %v4246
        %v4790 = vmax.f32 %v3510, %v4248
        %v4791 = vmax.f32 %v3511, %v4250
        %v4792 = vmax.f32 %v3512, %v4252
        %v4793 = vmax.f32 %v3513, %v4254
        %v4794 = vmax.f32 %v3514, %v4256
        %v4795 = vmax.f32 %v3515, %v4258
        %v4796 = vmax.f32 %v3516, %v4260
        %v4797 = vmax.f32 %v3517, %v4262
        %v4798 = vmax.f32 %v3518, %v4264
        %v4799 = vmax.f32 %v3519, %v4266
        %v4800 = vmax.f32 %v3520, %v4268
        %v4801 = vmax.f32 %v3521, %v4270
        %v4802 = vmax.f32 %v3522, %v4272
        %v4803 = vmax.f32 %v3523, %v4274
        %v4804 = vmax.f32 %v3524, %v4276
        %v4805 = vmax.f32 %v3525, %v4278
        %v4806 = vmax.f32 %v3526, %v4280
        %v4807 = vmax.f32 %v3527, %v4282
        %v4808 = vmax.f32 %v3528, %v4284
        %v4809 = vmax.f32 %v3529, %v4286
        %v4810 = vmax.f32 %v3530, %v4288
        %v4811 = vmax.f32 %v3531, %v4290
        %v4812 = vmax.f32 %v3532, %v4292
        %v4813 = vmax.f32 %v3533, %v4294
        %v4814 = vmax.f32 %v3534, %v4296
        %v4815 = vmax.f32 %v3535, %v4298
        %v4816 = vmax.f32 %v3536, %v4300
        %v4817 = vmax.f32 %v3537, %v4302
        %v4818 = vmax.f32 %v3538, %v4304
        %v4819 = vmax.f32 %v3539, %v4306
        %v4820 = vmax.f32 %v3540, %v4308
        %v4821 = vpack.c.bf16 %v4565, %v4565
        %v4822 = vpack.c.bf16 %v4566, %v4566
        %v4823 = vpack.c.bf16 %v4567, %v4567
        %v4824 = vpack.c.bf16 %v4568, %v4568
        %v4825 = vpack.c.bf16 %v4569, %v4569
        %v4826 = vpack.c.bf16 %v4570, %v4570
        %v4827 = vpack.c.bf16 %v4571, %v4571
        %v4828 = vpack.c.bf16 %v4572, %v4572
        %v4829 = vpack.c.bf16 %v4573, %v4573
        %v4830 = vpack.c.bf16 %v4574, %v4574
        %v4831 = vpack.c.bf16 %v4575, %v4575
        %v4832 = vpack.c.bf16 %v4576, %v4576
        %v4833 = vpack.c.bf16 %v4577, %v4577
        %v4834 = vpack.c.bf16 %v4578, %v4578
        %v4835 = vpack.c.bf16 %v4579, %v4579
        %v4836 = vpack.c.bf16 %v4580, %v4580
        %v4837 = vpack.c.bf16 %v4581, %v4581
        %v4838 = vpack.c.bf16 %v4582, %v4582
        %v4839 = vpack.c.bf16 %v4583, %v4583
        %v4840 = vpack.c.bf16 %v4584, %v4584
        %v4841 = vpack.c.bf16 %v4585, %v4585
        %v4842 = vpack.c.bf16 %v4586, %v4586
        %v4843 = vpack.c.bf16 %v4587, %v4587
        %v4844 = vpack.c.bf16 %v4588, %v4588
        %v4845 = vpack.c.bf16 %v4589, %v4589
        %v4846 = vpack.c.bf16 %v4590, %v4590
        %v4847 = vpack.c.bf16 %v4591, %v4591
        %v4848 = vpack.c.bf16 %v4592, %v4592
        %v4849 = vpack.c.bf16 %v4593, %v4593
        %v4850 = vpack.c.bf16 %v4594, %v4594
        %v4851 = vpack.c.bf16 %v4595, %v4595
        %v4852 = vpack.c.bf16 %v4596, %v4596
        %v4853 = vpack.c.bf16 %v4597, %v4597
        %v4854 = vpack.c.bf16 %v4598, %v4598
        %v4855 = vpack.c.bf16 %v4599, %v4599
        %v4856 = vpack.c.bf16 %v4600, %v4600
        %v4857 = vpack.c.bf16 %v4601, %v4601
        %v4858 = vpack.c.bf16 %v4602, %v4602
        %v4859 = vpack.c.bf16 %v4603, %v4603
        %v4860 = vpack.c.bf16 %v4604, %v4604
        %v4861 = vpack.c.bf16 %v4605, %v4605
        %v4862 = vpack.c.bf16 %v4606, %v4606
        %v4863 = vpack.c.bf16 %v4607, %v4607
        %v4864 = vpack.c.bf16 %v4608, %v4608
        %v4865 = vpack.c.bf16 %v4609, %v4609
        %v4866 = vpack.c.bf16 %v4610, %v4610
        %v4867 = vpack.c.bf16 %v4611, %v4611
        %v4868 = vpack.c.bf16 %v4612, %v4612
        %v4869 = vpack.c.bf16 %v4613, %v4613
        %v4870 = vpack.c.bf16 %v4614, %v4614
        %v4871 = vpack.c.bf16 %v4615, %v4615
        %v4872 = vpack.c.bf16 %v4616, %v4616
        %v4873 = vpack.c.bf16 %v4617, %v4617
        %v4874 = vpack.c.bf16 %v4618, %v4618
        %v4875 = vpack.c.bf16 %v4619, %v4619
        %v4876 = vpack.c.bf16 %v4620, %v4620
        %v4877 = vpack.c.bf16 %v4621, %v4621
        %v4878 = vpack.c.bf16 %v4622, %v4622
        %v4879 = vpack.c.bf16 %v4623, %v4623
        %v4880 = vpack.c.bf16 %v4624, %v4624
        %v4881 = vpack.c.bf16 %v4625, %v4625
        %v4882 = vpack.c.bf16 %v4626, %v4626
        %v4883 = vpack.c.bf16 %v4627, %v4627
        %v4884 = vpack.c.bf16 %v4628, %v4628
        %v4885 = vpack.c.bf16 %v4629, %v4629
        %v4886 = vpack.c.bf16 %v4630, %v4630
        %v4887 = vpack.c.bf16 %v4631, %v4631
        %v4888 = vpack.c.bf16 %v4632, %v4632
        %v4889 = vpack.c.bf16 %v4633, %v4633
        %v4890 = vpack.c.bf16 %v4634, %v4634
        %v4891 = vpack.c.bf16 %v4635, %v4635
        %v4892 = vpack.c.bf16 %v4636, %v4636
        %v4893 = vpack.c.bf16 %v4637, %v4637
        %v4894 = vpack.c.bf16 %v4638, %v4638
        %v4895 = vpack.c.bf16 %v4639, %v4639
        %v4896 = vpack.c.bf16 %v4640, %v4640
        %v4897 = vpack.c.bf16 %v4641, %v4641
        %v4898 = vpack.c.bf16 %v4642, %v4642
        %v4899 = vpack.c.bf16 %v4643, %v4643
        %v4900 = vpack.c.bf16 %v4644, %v4644
        %v4901 = vpack.c.bf16 %v4645, %v4645
        %v4902 = vpack.c.bf16 %v4646, %v4646
        %v4903 = vpack.c.bf16 %v4647, %v4647
        %v4904 = vpack.c.bf16 %v4648, %v4648
        %v4905 = vpack.c.bf16 %v4649, %v4649
        %v4906 = vpack.c.bf16 %v4650, %v4650
        %v4907 = vpack.c.bf16 %v4651, %v4651
        %v4908 = vpack.c.bf16 %v4652, %v4652
        %v4909 = vpack.c.bf16 %v4653, %v4653
        %v4910 = vpack.c.bf16 %v4654, %v4654
        %v4911 = vpack.c.bf16 %v4655, %v4655
        %v4912 = vpack.c.bf16 %v4656, %v4656
        %v4913 = vpack.c.bf16 %v4657, %v4657
        %v4914 = vpack.c.bf16 %v4658, %v4658
        %v4915 = vpack.c.bf16 %v4659, %v4659
        %v4916 = vpack.c.bf16 %v4660, %v4660
        %v4917 = vpack.c.bf16 %v4661, %v4661
        %v4918 = vpack.c.bf16 %v4662, %v4662
        %v4919 = vpack.c.bf16 %v4663, %v4663
        %v4920 = vpack.c.bf16 %v4664, %v4664
        %v4921 = vpack.c.bf16 %v4665, %v4665
        %v4922 = vpack.c.bf16 %v4666, %v4666
        %v4923 = vpack.c.bf16 %v4667, %v4667
        %v4924 = vpack.c.bf16 %v4668, %v4668
        %v4925 = vpack.c.bf16 %v4669, %v4669
        %v4926 = vpack.c.bf16 %v4670, %v4670
        %v4927 = vpack.c.bf16 %v4671, %v4671
        %v4928 = vpack.c.bf16 %v4672, %v4672
        %v4929 = vpack.c.bf16 %v4673, %v4673
        %v4930 = vpack.c.bf16 %v4674, %v4674
        %v4931 = vpack.c.bf16 %v4675, %v4675
        %v4932 = vpack.c.bf16 %v4676, %v4676
        %v4933 = vpack.c.bf16 %v4677, %v4677
        %v4934 = vpack.c.bf16 %v4678, %v4678
        %v4935 = vpack.c.bf16 %v4679, %v4679
        %v4936 = vpack.c.bf16 %v4680, %v4680
        %v4937 = vpack.c.bf16 %v4681, %v4681
        %v4938 = vpack.c.bf16 %v4682, %v4682
        %v4939 = vpack.c.bf16 %v4683, %v4683
        %v4940 = vpack.c.bf16 %v4684, %v4684
        %v4941 = vpack.c.bf16 %v4685, %v4685
        %v4942 = vpack.c.bf16 %v4686, %v4686
        %v4943 = vpack.c.bf16 %v4687, %v4687
        %v4944 = vpack.c.bf16 %v4688, %v4688
        %v4945 = vpack.c.bf16 %v4689, %v4689
        %v4946 = vpack.c.bf16 %v4690, %v4690
        %v4947 = vpack.c.bf16 %v4691, %v4691
        %v4948 = vpack.c.bf16 %v4692, %v4692
        %v4949 = vpack.c.bf16 %v4693, %v4693
        %v4950 = vpack.c.bf16 %v4694, %v4694
        %v4951 = vpack.c.bf16 %v4695, %v4695
        %v4952 = vpack.c.bf16 %v4696, %v4696
        %v4953 = vpack.c.bf16 %v4697, %v4697
        %v4954 = vpack.c.bf16 %v4698, %v4698
        %v4955 = vpack.c.bf16 %v4699, %v4699
        %v4956 = vpack.c.bf16 %v4700, %v4700
        %v4957 = vpack.c.bf16 %v4701, %v4701
        %v4958 = vpack.c.bf16 %v4702, %v4702
        %v4959 = vpack.c.bf16 %v4703, %v4703
        %v4960 = vpack.c.bf16 %v4704, %v4704
        %v4961 = vpack.c.bf16 %v4705, %v4705
        %v4962 = vpack.c.bf16 %v4706, %v4706
        %v4963 = vpack.c.bf16 %v4707, %v4707
        %v4964 = vpack.c.bf16 %v4708, %v4708
        %v4965 = vpack.c.bf16 %v4709, %v4709
        %v4966 = vpack.c.bf16 %v4710, %v4710
        %v4967 = vpack.c.bf16 %v4711, %v4711
        %v4968 = vpack.c.bf16 %v4712, %v4712
        %v4969 = vpack.c.bf16 %v4713, %v4713
        %v4970 = vpack.c.bf16 %v4714, %v4714
        %v4971 = vpack.c.bf16 %v4715, %v4715
        %v4972 = vpack.c.bf16 %v4716, %v4716
        %v4973 = vpack.c.bf16 %v4717, %v4717
        %v4974 = vpack.c.bf16 %v4718, %v4718
        %v4975 = vpack.c.bf16 %v4719, %v4719
        %v4976 = vpack.c.bf16 %v4720, %v4720
        %v4977 = vpack.c.bf16 %v4721, %v4721
        %v4978 = vpack.c.bf16 %v4722, %v4722
        %v4979 = vpack.c.bf16 %v4723, %v4723
        %v4980 = vpack.c.bf16 %v4724, %v4724
        %v4981 = vpack.c.bf16 %v4725, %v4725
        %v4982 = vpack.c.bf16 %v4726, %v4726
        %v4983 = vpack.c.bf16 %v4727, %v4727
        %v4984 = vpack.c.bf16 %v4728, %v4728
        %v4985 = vpack.c.bf16 %v4729, %v4729
        %v4986 = vpack.c.bf16 %v4730, %v4730
        %v4987 = vpack.c.bf16 %v4731, %v4731
        %v4988 = vpack.c.bf16 %v4732, %v4732
        %v4989 = vpack.c.bf16 %v4733, %v4733
        %v4990 = vpack.c.bf16 %v4734, %v4734
        %v4991 = vpack.c.bf16 %v4735, %v4735
        %v4992 = vpack.c.bf16 %v4736, %v4736
        %v4993 = vpack.c.bf16 %v4737, %v4737
        %v4994 = vpack.c.bf16 %v4738, %v4738
        %v4995 = vpack.c.bf16 %v4739, %v4739
        %v4996 = vpack.c.bf16 %v4740, %v4740
        %v4997 = vpack.c.bf16 %v4741, %v4741
        %v4998 = vpack.c.bf16 %v4742, %v4742
        %v4999 = vpack.c.bf16 %v4743, %v4743
        %v5000 = vpack.c.bf16 %v4744, %v4744
        %v5001 = vpack.c.bf16 %v4745, %v4745
        %v5002 = vpack.c.bf16 %v4746, %v4746
        %v5003 = vpack.c.bf16 %v4747, %v4747
        %v5004 = vpack.c.bf16 %v4748, %v4748
        %v5005 = vpack.c.bf16 %v4749, %v4749
        %v5006 = vpack.c.bf16 %v4750, %v4750
        %v5007 = vpack.c.bf16 %v4751, %v4751
        %v5008 = vpack.c.bf16 %v4752, %v4752
        %v5009 = vpack.c.bf16 %v4753, %v4753
        %v5010 = vpack.c.bf16 %v4754, %v4754
        %v5011 = vpack.c.bf16 %v4755, %v4755
        %v5012 = vpack.c.bf16 %v4756, %v4756
        %v5013 = vpack.c.bf16 %v4757, %v4757
        %v5014 = vpack.c.bf16 %v4758, %v4758
        %v5015 = vpack.c.bf16 %v4759, %v4759
        %v5016 = vpack.c.bf16 %v4760, %v4760
        %v5017 = vpack.c.bf16 %v4761, %v4761
        %v5018 = vpack.c.bf16 %v4762, %v4762
        %v5019 = vpack.c.bf16 %v4763, %v4763
        %v5020 = vpack.c.bf16 %v4764, %v4764
        %v5021 = vpack.c.bf16 %v4765, %v4765
        %v5022 = vpack.c.bf16 %v4766, %v4766
        %v5023 = vpack.c.bf16 %v4767, %v4767
        %v5024 = vpack.c.bf16 %v4768, %v4768
        %v5025 = vpack.c.bf16 %v4769, %v4769
        %v5026 = vpack.c.bf16 %v4770, %v4770
        %v5027 = vpack.c.bf16 %v4771, %v4771
        %v5028 = vpack.c.bf16 %v4772, %v4772
        %v5029 = vpack.c.bf16 %v4773, %v4773
        %v5030 = vpack.c.bf16 %v4774, %v4774
        %v5031 = vpack.c.bf16 %v4775, %v4775
        %v5032 = vpack.c.bf16 %v4776, %v4776
        %v5033 = vpack.c.bf16 %v4777, %v4777
        %v5034 = vpack.c.bf16 %v4778, %v4778
        %v5035 = vpack.c.bf16 %v4779, %v4779
        %v5036 = vpack.c.bf16 %v4780, %v4780
        %v5037 = vpack.c.bf16 %v4781, %v4781
        %v5038 = vpack.c.bf16 %v4782, %v4782
        %v5039 = vpack.c.bf16 %v4783, %v4783
        %v5040 = vpack.c.bf16 %v4784, %v4784
        %v5041 = vpack.c.bf16 %v4785, %v4785
        %v5042 = vpack.c.bf16 %v4786, %v4786
        %v5043 = vpack.c.bf16 %v4787, %v4787
        %v5044 = vpack.c.bf16 %v4788, %v4788
        %v5045 = vpack.c.bf16 %v4789, %v4789
        %v5046 = vpack.c.bf16 %v4790, %v4790
        %v5047 = vpack.c.bf16 %v4791, %v4791
        %v5048 = vpack.c.bf16 %v4792, %v4792
        %v5049 = vpack.c.bf16 %v4793, %v4793
        %v5050 = vpack.c.bf16 %v4794, %v4794
        %v5051 = vpack.c.bf16 %v4795, %v4795
        %v5052 = vpack.c.bf16 %v4796, %v4796
        %v5053 = vpack.c.bf16 %v4797, %v4797
        %v5054 = vpack.c.bf16 %v4798, %v4798
        %v5055 = vpack.c.bf16 %v4799, %v4799
        %v5056 = vpack.c.bf16 %v4800, %v4800
        %v5057 = vpack.c.bf16 %v4801, %v4801
        %v5058 = vpack.c.bf16 %v4802, %v4802
        %v5059 = vpack.c.bf16 %v4803, %v4803
        %v5060 = vpack.c.bf16 %v4804, %v4804
        %v5061 = vpack.c.bf16 %v4805, %v4805
        %v5062 = vpack.c.bf16 %v4806, %v4806
        %v5063 = vpack.c.bf16 %v4807, %v4807
        %v5064 = vpack.c.bf16 %v4808, %v4808
        %v5065 = vpack.c.bf16 %v4809, %v4809
        %v5066 = vpack.c.bf16 %v4810, %v4810
        %v5067 = vpack.c.bf16 %v4811, %v4811
        %v5068 = vpack.c.bf16 %v4812, %v4812
        %v5069 = vpack.c.bf16 %v4813, %v4813
        %v5070 = vpack.c.bf16 %v4814, %v4814
        %v5071 = vpack.c.bf16 %v4815, %v4815
        %v5072 = vpack.c.bf16 %v4816, %v4816
        %v5073 = vpack.c.bf16 %v4817, %v4817
        %v5074 = vpack.c.bf16 %v4818, %v4818
        %v5075 = vpack.c.bf16 %v4819, %v4819
        %v5076 = vpack.c.bf16 %v4820, %v4820
        %v5333 = vunpack.c.l.b16 %v4821
        %v5334 = vunpack.c.l.b16 %v4822
        %v5335 = vunpack.c.l.b16 %v4823
        %v5336 = vunpack.c.l.b16 %v4824
        %v5337 = vunpack.c.l.b16 %v4825
        %v5338 = vunpack.c.l.b16 %v4826
        %v5339 = vunpack.c.l.b16 %v4827
        %v5340 = vunpack.c.l.b16 %v4828
        %v5341 = vunpack.c.l.b16 %v4829
        %v5342 = vunpack.c.l.b16 %v4830
        %v5343 = vunpack.c.l.b16 %v4831
        %v5344 = vunpack.c.l.b16 %v4832
        %v5345 = vunpack.c.l.b16 %v4833
        %v5346 = vunpack.c.l.b16 %v4834
        %v5347 = vunpack.c.l.b16 %v4835
        %v5348 = vunpack.c.l.b16 %v4836
        %v5349 = vunpack.c.l.b16 %v4837
        %v5350 = vunpack.c.l.b16 %v4838
        %v5351 = vunpack.c.l.b16 %v4839
        %v5352 = vunpack.c.l.b16 %v4840
        %v5353 = vunpack.c.l.b16 %v4841
        %v5354 = vunpack.c.l.b16 %v4842
        %v5355 = vunpack.c.l.b16 %v4843
        %v5356 = vunpack.c.l.b16 %v4844
        %v5357 = vunpack.c.l.b16 %v4845
        %v5358 = vunpack.c.l.b16 %v4846
        %v5359 = vunpack.c.l.b16 %v4847
        %v5360 = vunpack.c.l.b16 %v4848
        %v5361 = vunpack.c.l.b16 %v4849
        %v5362 = vunpack.c.l.b16 %v4850
        %v5363 = vunpack.c.l.b16 %v4851
        %v5364 = vunpack.c.l.b16 %v4852
        %v5365 = vunpack.c.l.b16 %v4853
        %v5366 = vunpack.c.l.b16 %v4854
        %v5367 = vunpack.c.l.b16 %v4855
        %v5368 = vunpack.c.l.b16 %v4856
        %v5369 = vunpack.c.l.b16 %v4857
        %v5370 = vunpack.c.l.b16 %v4858
        %v5371 = vunpack.c.l.b16 %v4859
        %v5372 = vunpack.c.l.b16 %v4860
        %v5373 = vunpack.c.l.b16 %v4861
        %v5374 = vunpack.c.l.b16 %v4862
        %v5375 = vunpack.c.l.b16 %v4863
        %v5376 = vunpack.c.l.b16 %v4864
        %v5377 = vunpack.c.l.b16 %v4865
        %v5378 = vunpack.c.l.b16 %v4866
        %v5379 = vunpack.c.l.b16 %v4867
        %v5380 = vunpack.c.l.b16 %v4868
        %v5381 = vunpack.c.l.b16 %v4869
        %v5382 = vunpack.c.l.b16 %v4870
        %v5383 = vunpack.c.l.b16 %v4871
        %v5384 = vunpack.c.l.b16 %v4872
        %v5385 = vunpack.c.l.b16 %v4873
        %v5386 = vunpack.c.l.b16 %v4874
        %v5387 = vunpack.c.l.b16 %v4875
        %v5388 = vunpack.c.l.b16 %v4876
        %v5389 = vunpack.c.l.b16 %v4877
        %v5390 = vunpack.c.l.b16 %v4878
        %v5391 = vunpack.c.l.b16 %v4879
        %v5392 = vunpack.c.l.b16 %v4880
        %v5393 = vunpack.c.l.b16 %v4881
        %v5394 = vunpack.c.l.b16 %v4882
        %v5395 = vunpack.c.l.b16 %v4883
        %v5396 = vunpack.c.l.b16 %v4884
        %v5397 = vunpack.c.l.b16 %v4885
        %v5398 = vunpack.c.l.b16 %v4886
        %v5399 = vunpack.c.l.b16 %v4887
        %v5400 = vunpack.c.l.b16 %v4888
        %v5401 = vunpack.c.l.b16 %v4889
        %v5402 = vunpack.c.l.b16 %v4890
        %v5403 = vunpack.c.l.b16 %v4891
        %v5404 = vunpack.c.l.b16 %v4892
        %v5405 = vunpack.c.l.b16 %v4893
        %v5406 = vunpack.c.l.b16 %v4894
        %v5407 = vunpack.c.l.b16 %v4895
        %v5408 = vunpack.c.l.b16 %v4896
        %v5409 = vunpack.c.l.b16 %v4897
        %v5410 = vunpack.c.l.b16 %v4898
        %v5411 = vunpack.c.l.b16 %v4899
        %v5412 = vunpack.c.l.b16 %v4900
        %v5413 = vunpack.c.l.b16 %v4901
        %v5414 = vunpack.c.l.b16 %v4902
        %v5415 = vunpack.c.l.b16 %v4903
        %v5416 = vunpack.c.l.b16 %v4904
        %v5417 = vunpack.c.l.b16 %v4905
        %v5418 = vunpack.c.l.b16 %v4906
        %v5419 = vunpack.c.l.b16 %v4907
        %v5420 = vunpack.c.l.b16 %v4908
        %v5421 = vunpack.c.l.b16 %v4909
        %v5422 = vunpack.c.l.b16 %v4910
        %v5423 = vunpack.c.l.b16 %v4911
        %v5424 = vunpack.c.l.b16 %v4912
        %v5425 = vunpack.c.l.b16 %v4913
        %v5426 = vunpack.c.l.b16 %v4914
        %v5427 = vunpack.c.l.b16 %v4915
        %v5428 = vunpack.c.l.b16 %v4916
        %v5429 = vunpack.c.l.b16 %v4917
        %v5430 = vunpack.c.l.b16 %v4918
        %v5431 = vunpack.c.l.b16 %v4919
        %v5432 = vunpack.c.l.b16 %v4920
        %v5433 = vunpack.c.l.b16 %v4921
        %v5434 = vunpack.c.l.b16 %v4922
        %v5435 = vunpack.c.l.b16 %v4923
        %v5436 = vunpack.c.l.b16 %v4924
        %v5437 = vunpack.c.l.b16 %v4925
        %v5438 = vunpack.c.l.b16 %v4926
        %v5439 = vunpack.c.l.b16 %v4927
        %v5440 = vunpack.c.l.b16 %v4928
        %v5441 = vunpack.c.l.b16 %v4929
        %v5442 = vunpack.c.l.b16 %v4930
        %v5443 = vunpack.c.l.b16 %v4931
        %v5444 = vunpack.c.l.b16 %v4932
        %v5445 = vunpack.c.l.b16 %v4933
        %v5446 = vunpack.c.l.b16 %v4934
        %v5447 = vunpack.c.l.b16 %v4935
        %v5448 = vunpack.c.l.b16 %v4936
        %v5449 = vunpack.c.l.b16 %v4937
        %v5450 = vunpack.c.l.b16 %v4938
        %v5451 = vunpack.c.l.b16 %v4939
        %v5452 = vunpack.c.l.b16 %v4940
        %v5453 = vunpack.c.l.b16 %v4941
        %v5454 = vunpack.c.l.b16 %v4942
        %v5455 = vunpack.c.l.b16 %v4943
        %v5456 = vunpack.c.l.b16 %v4944
        %v5457 = vunpack.c.l.b16 %v4945
        %v5458 = vunpack.c.l.b16 %v4946
        %v5459 = vunpack.c.l.b16 %v4947
        %v5460 = vunpack.c.l.b16 %v4948
        %v5461 = vunpack.c.l.b16 %v4949
        %v5462 = vunpack.c.l.b16 %v4950
        %v5463 = vunpack.c.l.b16 %v4951
        %v5464 = vunpack.c.l.b16 %v4952
        %v5465 = vunpack.c.l.b16 %v4953
        %v5466 = vunpack.c.l.b16 %v4954
        %v5467 = vunpack.c.l.b16 %v4955
        %v5468 = vunpack.c.l.b16 %v4956
        %v5469 = vunpack.c.l.b16 %v4957
        %v5470 = vunpack.c.l.b16 %v4958
        %v5471 = vunpack.c.l.b16 %v4959
        %v5472 = vunpack.c.l.b16 %v4960
        %v5473 = vunpack.c.l.b16 %v4961
        %v5474 = vunpack.c.l.b16 %v4962
        %v5475 = vunpack.c.l.b16 %v4963
        %v5476 = vunpack.c.l.b16 %v4964
        %v5477 = vunpack.c.l.b16 %v4965
        %v5478 = vunpack.c.l.b16 %v4966
        %v5479 = vunpack.c.l.b16 %v4967
        %v5480 = vunpack.c.l.b16 %v4968
        %v5481 = vunpack.c.l.b16 %v4969
        %v5482 = vunpack.c.l.b16 %v4970
        %v5483 = vunpack.c.l.b16 %v4971
        %v5484 = vunpack.c.l.b16 %v4972
        %v5485 = vunpack.c.l.b16 %v4973
        %v5486 = vunpack.c.l.b16 %v4974
        %v5487 = vunpack.c.l.b16 %v4975
        %v5488 = vunpack.c.l.b16 %v4976
        %v5489 = vunpack.c.l.b16 %v4977
        %v5490 = vunpack.c.l.b16 %v4978
        %v5491 = vunpack.c.l.b16 %v4979
        %v5492 = vunpack.c.l.b16 %v4980
        %v5493 = vunpack.c.l.b16 %v4981
        %v5494 = vunpack.c.l.b16 %v4982
        %v5495 = vunpack.c.l.b16 %v4983
        %v5496 = vunpack.c.l.b16 %v4984
        %v5497 = vunpack.c.l.b16 %v4985
        %v5498 = vunpack.c.l.b16 %v4986
        %v5499 = vunpack.c.l.b16 %v4987
        %v5500 = vunpack.c.l.b16 %v4988
        %v5501 = vunpack.c.l.b16 %v4989
        %v5502 = vunpack.c.l.b16 %v4990
        %v5503 = vunpack.c.l.b16 %v4991
        %v5504 = vunpack.c.l.b16 %v4992
        %v5505 = vunpack.c.l.b16 %v4993
        %v5506 = vunpack.c.l.b16 %v4994
        %v5507 = vunpack.c.l.b16 %v4995
        %v5508 = vunpack.c.l.b16 %v4996
        %v5509 = vunpack.c.l.b16 %v4997
        %v5510 = vunpack.c.l.b16 %v4998
        %v5511 = vunpack.c.l.b16 %v4999
        %v5512 = vunpack.c.l.b16 %v5000
        %v5513 = vunpack.c.l.b16 %v5001
        %v5514 = vunpack.c.l.b16 %v5002
        %v5515 = vunpack.c.l.b16 %v5003
        %v5516 = vunpack.c.l.b16 %v5004
        %v5517 = vunpack.c.l.b16 %v5005
        %v5518 = vunpack.c.l.b16 %v5006
        %v5519 = vunpack.c.l.b16 %v5007
        %v5520 = vunpack.c.l.b16 %v5008
        %v5521 = vunpack.c.l.b16 %v5009
        %v5522 = vunpack.c.l.b16 %v5010
        %v5523 = vunpack.c.l.b16 %v5011
        %v5524 = vunpack.c.l.b16 %v5012
        %v5525 = vunpack.c.l.b16 %v5013
        %v5526 = vunpack.c.l.b16 %v5014
        %v5527 = vunpack.c.l.b16 %v5015
        %v5528 = vunpack.c.l.b16 %v5016
        %v5529 = vunpack.c.l.b16 %v5017
        %v5530 = vunpack.c.l.b16 %v5018
        %v5531 = vunpack.c.l.b16 %v5019
        %v5532 = vunpack.c.l.b16 %v5020
        %v5533 = vunpack.c.l.b16 %v5021
        %v5534 = vunpack.c.l.b16 %v5022
        %v5535 = vunpack.c.l.b16 %v5023
        %v5536 = vunpack.c.l.b16 %v5024
        %v5537 = vunpack.c.l.b16 %v5025
        %v5538 = vunpack.c.l.b16 %v5026
        %v5539 = vunpack.c.l.b16 %v5027
        %v5540 = vunpack.c.l.b16 %v5028
        %v5541 = vunpack.c.l.b16 %v5029
        %v5542 = vunpack.c.l.b16 %v5030
        %v5543 = vunpack.c.l.b16 %v5031
        %v5544 = vunpack.c.l.b16 %v5032
        %v5545 = vunpack.c.l.b16 %v5033
        %v5546 = vunpack.c.l.b16 %v5034
        %v5547 = vunpack.c.l.b16 %v5035
        %v5548 = vunpack.c.l.b16 %v5036
        %v5549 = vunpack.c.l.b16 %v5037
        %v5550 = vunpack.c.l.b16 %v5038
        %v5551 = vunpack.c.l.b16 %v5039
        %v5552 = vunpack.c.l.b16 %v5040
        %v5553 = vunpack.c.l.b16 %v5041
        %v5554 = vunpack.c.l.b16 %v5042
        %v5555 = vunpack.c.l.b16 %v5043
        %v5556 = vunpack.c.l.b16 %v5044
        %v5557 = vunpack.c.l.b16 %v5045
        %v5558 = vunpack.c.l.b16 %v5046
        %v5559 = vunpack.c.l.b16 %v5047
        %v5560 = vunpack.c.l.b16 %v5048
        %v5561 = vunpack.c.l.b16 %v5049
        %v5562 = vunpack.c.l.b16 %v5050
        %v5563 = vunpack.c.l.b16 %v5051
        %v5564 = vunpack.c.l.b16 %v5052
        %v5565 = vunpack.c.l.b16 %v5053
        %v5566 = vunpack.c.l.b16 %v5054
        %v5567 = vunpack.c.l.b16 %v5055
        %v5568 = vunpack.c.l.b16 %v5056
        %v5569 = vunpack.c.l.b16 %v5057
        %v5570 = vunpack.c.l.b16 %v5058
        %v5571 = vunpack.c.l.b16 %v5059
        %v5572 = vunpack.c.l.b16 %v5060
        %v5573 = vunpack.c.l.b16 %v5061
        %v5574 = vunpack.c.l.b16 %v5062
        %v5575 = vunpack.c.l.b16 %v5063
        %v5576 = vunpack.c.l.b16 %v5064
        %v5577 = vunpack.c.l.b16 %v5065
        %v5578 = vunpack.c.l.b16 %v5066
        %v5579 = vunpack.c.l.b16 %v5067
        %v5580 = vunpack.c.l.b16 %v5068
        %v5581 = vunpack.c.l.b16 %v5069
        %v5582 = vunpack.c.l.b16 %v5070
        %v5583 = vunpack.c.l.b16 %v5071
        %v5584 = vunpack.c.l.b16 %v5072
        %v5585 = vunpack.c.l.b16 %v5073
        %v5586 = vunpack.c.l.b16 %v5074
        %v5587 = vunpack.c.l.b16 %v5075
        %v5588 = vunpack.c.l.b16 %v5076
        %v5589 = vrot.slane %v5334, 7
        %v5590 = vsel %vm2261, %v5589, %v5333
        %v5591 = vrot.slane %v5335, 6
        %v5592 = vsel %vm2265, %v5591, %v5590
        %v5593 = vrot.slane %v5336, 5
        %v5594 = vsel %vm2269, %v5593, %v5592
        %v5595 = vrot.slane %v5337, 4
        %vm5596 = vcmask 1044484
        %v5597 = vsel %vm5596, %v5595, %v5594
        %v5598 = vrot.slane %v5338, 3
        %vm5599 = vcmask 1045509
        %v5600 = vsel %vm5599, %v5598, %v5597
        %v5601 = vrot.slane %v5339, 2
        %vm5602 = vcmask 1046534
        %v5603 = vsel %vm5602, %v5601, %v5600
        %v5604 = vrot.slane %v5340, 1
        %vm5605 = vcmask 1047559
        %v5606 = vsel %vm5605, %v5604, %v5603
        %v5607 = vrot.slane %v5342, 7
        %v5608 = vsel %vm2261, %v5607, %v5341
        %v5609 = vrot.slane %v5343, 6
        %v5610 = vsel %vm2265, %v5609, %v5608
        %v5611 = vrot.slane %v5344, 5
        %v5612 = vsel %vm2269, %v5611, %v5610
        %v5613 = vrot.slane %v5345, 4
        %v5614 = vsel %vm5596, %v5613, %v5612
        %v5615 = vrot.slane %v5346, 3
        %v5616 = vsel %vm5599, %v5615, %v5614
        %v5617 = vrot.slane %v5347, 2
        %v5618 = vsel %vm5602, %v5617, %v5616
        %v5619 = vrot.slane %v5348, 1
        %v5620 = vsel %vm5605, %v5619, %v5618
        %v5621 = vrot.slane %v5350, 7
        %v5622 = vsel %vm2261, %v5621, %v5349
        %v5623 = vrot.slane %v5351, 6
        %v5624 = vsel %vm2265, %v5623, %v5622
        %v5625 = vrot.slane %v5352, 5
        %v5626 = vsel %vm2269, %v5625, %v5624
        %v5627 = vrot.slane %v5353, 4
        %v5628 = vsel %vm5596, %v5627, %v5626
        %v5629 = vrot.slane %v5354, 3
        %v5630 = vsel %vm5599, %v5629, %v5628
        %v5631 = vrot.slane %v5355, 2
        %v5632 = vsel %vm5602, %v5631, %v5630
        %v5633 = vrot.slane %v5356, 1
        %v5634 = vsel %vm5605, %v5633, %v5632
        %v5635 = vrot.slane %v5358, 7
        %v5636 = vsel %vm2261, %v5635, %v5357
        %v5637 = vrot.slane %v5359, 6
        %v5638 = vsel %vm2265, %v5637, %v5636
        %v5639 = vrot.slane %v5360, 5
        %v5640 = vsel %vm2269, %v5639, %v5638
        %v5641 = vrot.slane %v5361, 4
        %v5642 = vsel %vm5596, %v5641, %v5640
        %v5643 = vrot.slane %v5362, 3
        %v5644 = vsel %vm5599, %v5643, %v5642
        %v5645 = vrot.slane %v5363, 2
        %v5646 = vsel %vm5602, %v5645, %v5644
        %v5647 = vrot.slane %v5364, 1
        %v5648 = vsel %vm5605, %v5647, %v5646
        %v5649 = vrot.slane %v5366, 7
        %v5650 = vsel %vm2261, %v5649, %v5365
        %v5651 = vrot.slane %v5367, 6
        %v5652 = vsel %vm2265, %v5651, %v5650
        %v5653 = vrot.slane %v5368, 5
        %v5654 = vsel %vm2269, %v5653, %v5652
        %v5655 = vrot.slane %v5369, 4
        %v5656 = vsel %vm5596, %v5655, %v5654
        %v5657 = vrot.slane %v5370, 3
        %v5658 = vsel %vm5599, %v5657, %v5656
        %v5659 = vrot.slane %v5371, 2
        %v5660 = vsel %vm5602, %v5659, %v5658
        %v5661 = vrot.slane %v5372, 1
        %v5662 = vsel %vm5605, %v5661, %v5660
        %v5663 = vrot.slane %v5374, 7
        %v5664 = vsel %vm2261, %v5663, %v5373
        %v5665 = vrot.slane %v5375, 6
        %v5666 = vsel %vm2265, %v5665, %v5664
        %v5667 = vrot.slane %v5376, 5
        %v5668 = vsel %vm2269, %v5667, %v5666
        %v5669 = vrot.slane %v5377, 4
        %v5670 = vsel %vm5596, %v5669, %v5668
        %v5671 = vrot.slane %v5378, 3
        %v5672 = vsel %vm5599, %v5671, %v5670
        %v5673 = vrot.slane %v5379, 2
        %v5674 = vsel %vm5602, %v5673, %v5672
        %v5675 = vrot.slane %v5380, 1
        %v5676 = vsel %vm5605, %v5675, %v5674
        %v5677 = vrot.slane %v5382, 7
        %v5678 = vsel %vm2261, %v5677, %v5381
        %v5679 = vrot.slane %v5383, 6
        %v5680 = vsel %vm2265, %v5679, %v5678
        %v5681 = vrot.slane %v5384, 5
        %v5682 = vsel %vm2269, %v5681, %v5680
        %v5683 = vrot.slane %v5385, 4
        %v5684 = vsel %vm5596, %v5683, %v5682
        %v5685 = vrot.slane %v5386, 3
        %v5686 = vsel %vm5599, %v5685, %v5684
        %v5687 = vrot.slane %v5387, 2
        %v5688 = vsel %vm5602, %v5687, %v5686
        %v5689 = vrot.slane %v5388, 1
        %v5690 = vsel %vm5605, %v5689, %v5688
        %v5691 = vrot.slane %v5390, 7
        %v5692 = vsel %vm2261, %v5691, %v5389
        %v5693 = vrot.slane %v5391, 6
        %v5694 = vsel %vm2265, %v5693, %v5692
        %v5695 = vrot.slane %v5392, 5
        %v5696 = vsel %vm2269, %v5695, %v5694
        %v5697 = vrot.slane %v5393, 4
        %v5698 = vsel %vm5596, %v5697, %v5696
        %v5699 = vrot.slane %v5394, 3
        %v5700 = vsel %vm5599, %v5699, %v5698
        %v5701 = vrot.slane %v5395, 2
        %v5702 = vsel %vm5602, %v5701, %v5700
        %v5703 = vrot.slane %v5396, 1
        %v5704 = vsel %vm5605, %v5703, %v5702
        %v5705 = vrot.slane %v5398, 7
        %v5706 = vsel %vm2261, %v5705, %v5397
        %v5707 = vrot.slane %v5399, 6
        %v5708 = vsel %vm2265, %v5707, %v5706
        %v5709 = vrot.slane %v5400, 5
        %v5710 = vsel %vm2269, %v5709, %v5708
        %v5711 = vrot.slane %v5401, 4
        %v5712 = vsel %vm5596, %v5711, %v5710
        %v5713 = vrot.slane %v5402, 3
        %v5714 = vsel %vm5599, %v5713, %v5712
        %v5715 = vrot.slane %v5403, 2
        %v5716 = vsel %vm5602, %v5715, %v5714
        %v5717 = vrot.slane %v5404, 1
        %v5718 = vsel %vm5605, %v5717, %v5716
        %v5719 = vrot.slane %v5406, 7
        %v5720 = vsel %vm2261, %v5719, %v5405
        %v5721 = vrot.slane %v5407, 6
        %v5722 = vsel %vm2265, %v5721, %v5720
        %v5723 = vrot.slane %v5408, 5
        %v5724 = vsel %vm2269, %v5723, %v5722
        %v5725 = vrot.slane %v5409, 4
        %v5726 = vsel %vm5596, %v5725, %v5724
        %v5727 = vrot.slane %v5410, 3
        %v5728 = vsel %vm5599, %v5727, %v5726
        %v5729 = vrot.slane %v5411, 2
        %v5730 = vsel %vm5602, %v5729, %v5728
        %v5731 = vrot.slane %v5412, 1
        %v5732 = vsel %vm5605, %v5731, %v5730
        %v5733 = vrot.slane %v5414, 7
        %v5734 = vsel %vm2261, %v5733, %v5413
        %v5735 = vrot.slane %v5415, 6
        %v5736 = vsel %vm2265, %v5735, %v5734
        %v5737 = vrot.slane %v5416, 5
        %v5738 = vsel %vm2269, %v5737, %v5736
        %v5739 = vrot.slane %v5417, 4
        %v5740 = vsel %vm5596, %v5739, %v5738
        %v5741 = vrot.slane %v5418, 3
        %v5742 = vsel %vm5599, %v5741, %v5740
        %v5743 = vrot.slane %v5419, 2
        %v5744 = vsel %vm5602, %v5743, %v5742
        %v5745 = vrot.slane %v5420, 1
        %v5746 = vsel %vm5605, %v5745, %v5744
        %v5747 = vrot.slane %v5422, 7
        %v5748 = vsel %vm2261, %v5747, %v5421
        %v5749 = vrot.slane %v5423, 6
        %v5750 = vsel %vm2265, %v5749, %v5748
        %v5751 = vrot.slane %v5424, 5
        %v5752 = vsel %vm2269, %v5751, %v5750
        %v5753 = vrot.slane %v5425, 4
        %v5754 = vsel %vm5596, %v5753, %v5752
        %v5755 = vrot.slane %v5426, 3
        %v5756 = vsel %vm5599, %v5755, %v5754
        %v5757 = vrot.slane %v5427, 2
        %v5758 = vsel %vm5602, %v5757, %v5756
        %v5759 = vrot.slane %v5428, 1
        %v5760 = vsel %vm5605, %v5759, %v5758
        %v5761 = vrot.slane %v5430, 7
        %v5762 = vsel %vm2261, %v5761, %v5429
        %v5763 = vrot.slane %v5431, 6
        %v5764 = vsel %vm2265, %v5763, %v5762
        %v5765 = vrot.slane %v5432, 5
        %v5766 = vsel %vm2269, %v5765, %v5764
        %v5767 = vrot.slane %v5433, 4
        %v5768 = vsel %vm5596, %v5767, %v5766
        %v5769 = vrot.slane %v5434, 3
        %v5770 = vsel %vm5599, %v5769, %v5768
        %v5771 = vrot.slane %v5435, 2
        %v5772 = vsel %vm5602, %v5771, %v5770
        %v5773 = vrot.slane %v5436, 1
        %v5774 = vsel %vm5605, %v5773, %v5772
        %v5775 = vrot.slane %v5438, 7
        %v5776 = vsel %vm2261, %v5775, %v5437
        %v5777 = vrot.slane %v5439, 6
        %v5778 = vsel %vm2265, %v5777, %v5776
        %v5779 = vrot.slane %v5440, 5
        %v5780 = vsel %vm2269, %v5779, %v5778
        %v5781 = vrot.slane %v5441, 4
        %v5782 = vsel %vm5596, %v5781, %v5780
        %v5783 = vrot.slane %v5442, 3
        %v5784 = vsel %vm5599, %v5783, %v5782
        %v5785 = vrot.slane %v5443, 2
        %v5786 = vsel %vm5602, %v5785, %v5784
        %v5787 = vrot.slane %v5444, 1
        %v5788 = vsel %vm5605, %v5787, %v5786
        %v5789 = vrot.slane %v5446, 7
        %v5790 = vsel %vm2261, %v5789, %v5445
        %v5791 = vrot.slane %v5447, 6
        %v5792 = vsel %vm2265, %v5791, %v5790
        %v5793 = vrot.slane %v5448, 5
        %v5794 = vsel %vm2269, %v5793, %v5792
        %v5795 = vrot.slane %v5449, 4
        %v5796 = vsel %vm5596, %v5795, %v5794
        %v5797 = vrot.slane %v5450, 3
        %v5798 = vsel %vm5599, %v5797, %v5796
        %v5799 = vrot.slane %v5451, 2
        %v5800 = vsel %vm5602, %v5799, %v5798
        %v5801 = vrot.slane %v5452, 1
        %v5802 = vsel %vm5605, %v5801, %v5800
        %v5803 = vrot.slane %v5454, 7
        %v5804 = vsel %vm2261, %v5803, %v5453
        %v5805 = vrot.slane %v5455, 6
        %v5806 = vsel %vm2265, %v5805, %v5804
        %v5807 = vrot.slane %v5456, 5
        %v5808 = vsel %vm2269, %v5807, %v5806
        %v5809 = vrot.slane %v5457, 4
        %v5810 = vsel %vm5596, %v5809, %v5808
        %v5811 = vrot.slane %v5458, 3
        %v5812 = vsel %vm5599, %v5811, %v5810
        %v5813 = vrot.slane %v5459, 2
        %v5814 = vsel %vm5602, %v5813, %v5812
        %v5815 = vrot.slane %v5460, 1
        %v5816 = vsel %vm5605, %v5815, %v5814
        %v5817 = vrot.slane %v5462, 7
        %v5818 = vsel %vm2261, %v5817, %v5461
        %v5819 = vrot.slane %v5463, 6
        %v5820 = vsel %vm2265, %v5819, %v5818
        %v5821 = vrot.slane %v5464, 5
        %v5822 = vsel %vm2269, %v5821, %v5820
        %v5823 = vrot.slane %v5465, 4
        %v5824 = vsel %vm5596, %v5823, %v5822
        %v5825 = vrot.slane %v5466, 3
        %v5826 = vsel %vm5599, %v5825, %v5824
        %v5827 = vrot.slane %v5467, 2
        %v5828 = vsel %vm5602, %v5827, %v5826
        %v5829 = vrot.slane %v5468, 1
        %v5830 = vsel %vm5605, %v5829, %v5828
        %v5831 = vrot.slane %v5470, 7
        %v5832 = vsel %vm2261, %v5831, %v5469
        %v5833 = vrot.slane %v5471, 6
        %v5834 = vsel %vm2265, %v5833, %v5832
        %v5835 = vrot.slane %v5472, 5
        %v5836 = vsel %vm2269, %v5835, %v5834
        %v5837 = vrot.slane %v5473, 4
        %v5838 = vsel %vm5596, %v5837, %v5836
        %v5839 = vrot.slane %v5474, 3
        %v5840 = vsel %vm5599, %v5839, %v5838
        %v5841 = vrot.slane %v5475, 2
        %v5842 = vsel %vm5602, %v5841, %v5840
        %v5843 = vrot.slane %v5476, 1
        %v5844 = vsel %vm5605, %v5843, %v5842
        %v5845 = vrot.slane %v5478, 7
        %v5846 = vsel %vm2261, %v5845, %v5477
        %v5847 = vrot.slane %v5479, 6
        %v5848 = vsel %vm2265, %v5847, %v5846
        %v5849 = vrot.slane %v5480, 5
        %v5850 = vsel %vm2269, %v5849, %v5848
        %v5851 = vrot.slane %v5481, 4
        %v5852 = vsel %vm5596, %v5851, %v5850
        %v5853 = vrot.slane %v5482, 3
        %v5854 = vsel %vm5599, %v5853, %v5852
        %v5855 = vrot.slane %v5483, 2
        %v5856 = vsel %vm5602, %v5855, %v5854
        %v5857 = vrot.slane %v5484, 1
        %v5858 = vsel %vm5605, %v5857, %v5856
        %v5859 = vrot.slane %v5486, 7
        %v5860 = vsel %vm2261, %v5859, %v5485
        %v5861 = vrot.slane %v5487, 6
        %v5862 = vsel %vm2265, %v5861, %v5860
        %v5863 = vrot.slane %v5488, 5
        %v5864 = vsel %vm2269, %v5863, %v5862
        %v5865 = vrot.slane %v5489, 4
        %v5866 = vsel %vm5596, %v5865, %v5864
        %v5867 = vrot.slane %v5490, 3
        %v5868 = vsel %vm5599, %v5867, %v5866
        %v5869 = vrot.slane %v5491, 2
        %v5870 = vsel %vm5602, %v5869, %v5868
        %v5871 = vrot.slane %v5492, 1
        %v5872 = vsel %vm5605, %v5871, %v5870
        %v5873 = vrot.slane %v5494, 7
        %v5874 = vsel %vm2261, %v5873, %v5493
        %v5875 = vrot.slane %v5495, 6
        %v5876 = vsel %vm2265, %v5875, %v5874
        %v5877 = vrot.slane %v5496, 5
        %v5878 = vsel %vm2269, %v5877, %v5876
        %v5879 = vrot.slane %v5497, 4
        %v5880 = vsel %vm5596, %v5879, %v5878
        %v5881 = vrot.slane %v5498, 3
        %v5882 = vsel %vm5599, %v5881, %v5880
        %v5883 = vrot.slane %v5499, 2
        %v5884 = vsel %vm5602, %v5883, %v5882
        %v5885 = vrot.slane %v5500, 1
        %v5886 = vsel %vm5605, %v5885, %v5884
        %v5887 = vrot.slane %v5502, 7
        %v5888 = vsel %vm2261, %v5887, %v5501
        %v5889 = vrot.slane %v5503, 6
        %v5890 = vsel %vm2265, %v5889, %v5888
        %v5891 = vrot.slane %v5504, 5
        %v5892 = vsel %vm2269, %v5891, %v5890
        %v5893 = vrot.slane %v5505, 4
        %v5894 = vsel %vm5596, %v5893, %v5892
        %v5895 = vrot.slane %v5506, 3
        %v5896 = vsel %vm5599, %v5895, %v5894
        %v5897 = vrot.slane %v5507, 2
        %v5898 = vsel %vm5602, %v5897, %v5896
        %v5899 = vrot.slane %v5508, 1
        %v5900 = vsel %vm5605, %v5899, %v5898
        %v5901 = vrot.slane %v5510, 7
        %v5902 = vsel %vm2261, %v5901, %v5509
        %v5903 = vrot.slane %v5511, 6
        %v5904 = vsel %vm2265, %v5903, %v5902
        %v5905 = vrot.slane %v5512, 5
        %v5906 = vsel %vm2269, %v5905, %v5904
        %v5907 = vrot.slane %v5513, 4
        %v5908 = vsel %vm5596, %v5907, %v5906
        %v5909 = vrot.slane %v5514, 3
        %v5910 = vsel %vm5599, %v5909, %v5908
        %v5911 = vrot.slane %v5515, 2
        %v5912 = vsel %vm5602, %v5911, %v5910
        %v5913 = vrot.slane %v5516, 1
        %v5914 = vsel %vm5605, %v5913, %v5912
        %v5915 = vrot.slane %v5518, 7
        %v5916 = vsel %vm2261, %v5915, %v5517
        %v5917 = vrot.slane %v5519, 6
        %v5918 = vsel %vm2265, %v5917, %v5916
        %v5919 = vrot.slane %v5520, 5
        %v5920 = vsel %vm2269, %v5919, %v5918
        %v5921 = vrot.slane %v5521, 4
        %v5922 = vsel %vm5596, %v5921, %v5920
        %v5923 = vrot.slane %v5522, 3
        %v5924 = vsel %vm5599, %v5923, %v5922
        %v5925 = vrot.slane %v5523, 2
        %v5926 = vsel %vm5602, %v5925, %v5924
        %v5927 = vrot.slane %v5524, 1
        %v5928 = vsel %vm5605, %v5927, %v5926
        %v5929 = vrot.slane %v5526, 7
        %v5930 = vsel %vm2261, %v5929, %v5525
        %v5931 = vrot.slane %v5527, 6
        %v5932 = vsel %vm2265, %v5931, %v5930
        %v5933 = vrot.slane %v5528, 5
        %v5934 = vsel %vm2269, %v5933, %v5932
        %v5935 = vrot.slane %v5529, 4
        %v5936 = vsel %vm5596, %v5935, %v5934
        %v5937 = vrot.slane %v5530, 3
        %v5938 = vsel %vm5599, %v5937, %v5936
        %v5939 = vrot.slane %v5531, 2
        %v5940 = vsel %vm5602, %v5939, %v5938
        %v5941 = vrot.slane %v5532, 1
        %v5942 = vsel %vm5605, %v5941, %v5940
        %v5943 = vrot.slane %v5534, 7
        %v5944 = vsel %vm2261, %v5943, %v5533
        %v5945 = vrot.slane %v5535, 6
        %v5946 = vsel %vm2265, %v5945, %v5944
        %v5947 = vrot.slane %v5536, 5
        %v5948 = vsel %vm2269, %v5947, %v5946
        %v5949 = vrot.slane %v5537, 4
        %v5950 = vsel %vm5596, %v5949, %v5948
        %v5951 = vrot.slane %v5538, 3
        %v5952 = vsel %vm5599, %v5951, %v5950
        %v5953 = vrot.slane %v5539, 2
        %v5954 = vsel %vm5602, %v5953, %v5952
        %v5955 = vrot.slane %v5540, 1
        %v5956 = vsel %vm5605, %v5955, %v5954
        %v5957 = vrot.slane %v5542, 7
        %v5958 = vsel %vm2261, %v5957, %v5541
        %v5959 = vrot.slane %v5543, 6
        %v5960 = vsel %vm2265, %v5959, %v5958
        %v5961 = vrot.slane %v5544, 5
        %v5962 = vsel %vm2269, %v5961, %v5960
        %v5963 = vrot.slane %v5545, 4
        %v5964 = vsel %vm5596, %v5963, %v5962
        %v5965 = vrot.slane %v5546, 3
        %v5966 = vsel %vm5599, %v5965, %v5964
        %v5967 = vrot.slane %v5547, 2
        %v5968 = vsel %vm5602, %v5967, %v5966
        %v5969 = vrot.slane %v5548, 1
        %v5970 = vsel %vm5605, %v5969, %v5968
        %v5971 = vrot.slane %v5550, 7
        %v5972 = vsel %vm2261, %v5971, %v5549
        %v5973 = vrot.slane %v5551, 6
        %v5974 = vsel %vm2265, %v5973, %v5972
        %v5975 = vrot.slane %v5552, 5
        %v5976 = vsel %vm2269, %v5975, %v5974
        %v5977 = vrot.slane %v5553, 4
        %v5978 = vsel %vm5596, %v5977, %v5976
        %v5979 = vrot.slane %v5554, 3
        %v5980 = vsel %vm5599, %v5979, %v5978
        %v5981 = vrot.slane %v5555, 2
        %v5982 = vsel %vm5602, %v5981, %v5980
        %v5983 = vrot.slane %v5556, 1
        %v5984 = vsel %vm5605, %v5983, %v5982
        %v5985 = vrot.slane %v5558, 7
        %v5986 = vsel %vm2261, %v5985, %v5557
        %v5987 = vrot.slane %v5559, 6
        %v5988 = vsel %vm2265, %v5987, %v5986
        %v5989 = vrot.slane %v5560, 5
        %v5990 = vsel %vm2269, %v5989, %v5988
        %v5991 = vrot.slane %v5561, 4
        %v5992 = vsel %vm5596, %v5991, %v5990
        %v5993 = vrot.slane %v5562, 3
        %v5994 = vsel %vm5599, %v5993, %v5992
        %v5995 = vrot.slane %v5563, 2
        %v5996 = vsel %vm5602, %v5995, %v5994
        %v5997 = vrot.slane %v5564, 1
        %v5998 = vsel %vm5605, %v5997, %v5996
        %v5999 = vrot.slane %v5566, 7
        %v6000 = vsel %vm2261, %v5999, %v5565
        %v6001 = vrot.slane %v5567, 6
        %v6002 = vsel %vm2265, %v6001, %v6000
        %v6003 = vrot.slane %v5568, 5
        %v6004 = vsel %vm2269, %v6003, %v6002
        %v6005 = vrot.slane %v5569, 4
        %v6006 = vsel %vm5596, %v6005, %v6004
        %v6007 = vrot.slane %v5570, 3
        %v6008 = vsel %vm5599, %v6007, %v6006
        %v6009 = vrot.slane %v5571, 2
        %v6010 = vsel %vm5602, %v6009, %v6008
        %v6011 = vrot.slane %v5572, 1
        %v6012 = vsel %vm5605, %v6011, %v6010
        %v6013 = vrot.slane %v5574, 7
        %v6014 = vsel %vm2261, %v6013, %v5573
        %v6015 = vrot.slane %v5575, 6
        %v6016 = vsel %vm2265, %v6015, %v6014
        %v6017 = vrot.slane %v5576, 5
        %v6018 = vsel %vm2269, %v6017, %v6016
        %v6019 = vrot.slane %v5577, 4
        %v6020 = vsel %vm5596, %v6019, %v6018
        %v6021 = vrot.slane %v5578, 3
        %v6022 = vsel %vm5599, %v6021, %v6020
        %v6023 = vrot.slane %v5579, 2
        %v6024 = vsel %vm5602, %v6023, %v6022
        %v6025 = vrot.slane %v5580, 1
        %v6026 = vsel %vm5605, %v6025, %v6024
        %v6027 = vrot.slane %v5582, 7
        %v6028 = vsel %vm2261, %v6027, %v5581
        %v6029 = vrot.slane %v5583, 6
        %v6030 = vsel %vm2265, %v6029, %v6028
        %v6031 = vrot.slane %v5584, 5
        %v6032 = vsel %vm2269, %v6031, %v6030
        %v6033 = vrot.slane %v5585, 4
        %v6034 = vsel %vm5596, %v6033, %v6032
        %v6035 = vrot.slane %v5586, 3
        %v6036 = vsel %vm5599, %v6035, %v6034
        %v6037 = vrot.slane %v5587, 2
        %v6038 = vsel %vm5602, %v6037, %v6036
        %v6039 = vrot.slane %v5588, 1
        %v6040 = vsel %vm5605, %v6039, %v6038
        %v6041 = vpack.c.b16 %v5606, %v5606
        %v6042 = vpack.c.b16 %v5620, %v5620
        %v6043 = vpack.c.b16 %v5634, %v5634
        %v6044 = vpack.c.b16 %v5648, %v5648
        %v6045 = vpack.c.b16 %v5662, %v5662
        %v6046 = vpack.c.b16 %v5676, %v5676
        %v6047 = vpack.c.b16 %v5690, %v5690
        %v6048 = vpack.c.b16 %v5704, %v5704
        %v6049 = vpack.c.b16 %v5718, %v5718
        %v6050 = vpack.c.b16 %v5732, %v5732
        %v6051 = vpack.c.b16 %v5746, %v5746
        %v6052 = vpack.c.b16 %v5760, %v5760
        %v6053 = vpack.c.b16 %v5774, %v5774
        %v6054 = vpack.c.b16 %v5788, %v5788
        %v6055 = vpack.c.b16 %v5802, %v5802
        %v6056 = vpack.c.b16 %v5816, %v5816
        %v6057 = vpack.c.b16 %v5830, %v5830
        %v6058 = vpack.c.b16 %v5844, %v5844
        %v6059 = vpack.c.b16 %v5858, %v5858
        %v6060 = vpack.c.b16 %v5872, %v5872
        %v6061 = vpack.c.b16 %v5886, %v5886
        %v6062 = vpack.c.b16 %v5900, %v5900
        %v6063 = vpack.c.b16 %v5914, %v5914
        %v6064 = vpack.c.b16 %v5928, %v5928
        %v6065 = vpack.c.b16 %v5942, %v5942
        %v6066 = vpack.c.b16 %v5956, %v5956
        %v6067 = vpack.c.b16 %v5970, %v5970
        %v6068 = vpack.c.b16 %v5984, %v5984
        %v6069 = vpack.c.b16 %v5998, %v5998
        %v6070 = vpack.c.b16 %v6012, %v6012
        %v6071 = vpack.c.b16 %v6026, %v6026
        %v6072 = vpack.c.b16 %v6040, %v6040
        %6105 = vst [vmem:[%s240] sm:$0xf] %v6041
        %6106 = vst [vmem:[%s240 + $0x4] sm:$0xf] %v6042
        %6107 = vst [vmem:[%s240 + $0x8] sm:$0xf] %v6043
        %6108 = vst [vmem:[%s240 + $0xc] sm:$0xf] %v6044
        %6109 = vst [vmem:[%s240 + $0x10] sm:$0xf] %v6045
        %6110 = vst [vmem:[%s240 + $0x14] sm:$0xf] %v6046
        %6111 = vst [vmem:[%s240 + $0x18] sm:$0xf] %v6047
        %6112 = vst [vmem:[%s240 + $0x1c] sm:$0xf] %v6048
        %6113 = vst [vmem:[%s240 + $0x20] sm:$0xf] %v6049
        %6114 = vst [vmem:[%s240 + $0x24] sm:$0xf] %v6050
        %6115 = vst [vmem:[%s240 + $0x28] sm:$0xf] %v6051
        %6116 = vst [vmem:[%s240 + $0x2c] sm:$0xf] %v6052
        %6117 = vst [vmem:[%s240 + $0x30] sm:$0xf] %v6053
        %6118 = vst [vmem:[%s240 + $0x34] sm:$0xf] %v6054
        %6119 = vst [vmem:[%s240 + $0x38] sm:$0xf] %v6055
        %6120 = vst [vmem:[%s240 + $0x3c] sm:$0xf] %v6056
        %6121 = vst [vmem:[%s240 + $0x40] sm:$0xf] %v6057
        %6122 = vst [vmem:[%s240 + $0x44] sm:$0xf] %v6058
        %6123 = vst [vmem:[%s240 + $0x48] sm:$0xf] %v6059
        %6124 = vst [vmem:[%s240 + $0x4c] sm:$0xf] %v6060
        %6125 = vst [vmem:[%s240 + $0x50] sm:$0xf] %v6061
        %6126 = vst [vmem:[%s240 + $0x54] sm:$0xf] %v6062
        %6127 = vst [vmem:[%s240 + $0x58] sm:$0xf] %v6063
        %6128 = vst [vmem:[%s240 + $0x5c] sm:$0xf] %v6064
        %6129 = vst [vmem:[%s240 + $0x60] sm:$0xf] %v6065
        %6130 = vst [vmem:[%s240 + $0x64] sm:$0xf] %v6066
        %6131 = vst [vmem:[%s240 + $0x68] sm:$0xf] %v6067
        %6132 = vst [vmem:[%s240 + $0x6c] sm:$0xf] %v6068
        %6133 = vst [vmem:[%s240 + $0x70] sm:$0xf] %v6069
        %6134 = vst [vmem:[%s240 + $0x74] sm:$0xf] %v6070
        %6135 = vst [vmem:[%s240 + $0x78] sm:$0xf] %v6071
        %6136 = vst [vmem:[%s240 + $0x7c] sm:$0xf] %v6072
        %s6137 = sand.u32 %s113, 1
        %s6138 = scalar_lea.sflag [#allocation4], %s6137
        %s6139 = sand.u32 %s113, 1
        %s6140 = smul.addr %s6139, 128
        %s6141 = scalar_lea.vmem [#allocation8], %s6140
        // Predicated region
        $region45: #{tpu_custom_call.1} parent=31 // pred_check
          %p6142 = pneg %p123
        $region46: #{tpu_custom_call.1} parent=31 // pred_check_branch
          %6144 = sbr.rel (%p6142) target = $region48
        $region47: #{tpu_custom_call.1} parent=31 // pred_region
          %s6145 = smul.u32 16, %s26
          %6147 = vsyncadd %s6138, 0
          %s6148 = smul.addr %s6145, 2
          %s6149 = smul.addr %s25, 32
          %s6150 = sadd.s32 %s6148, %s6149
          %s6151 = smul.addr %s6150, 4
          %s6152 = scalar_lea.hbm %s3, %s6151
          %s6153 = sshll.u32 %s6141, 4
          %s6154 = int_to_ptr.vmem [resolvable:$true] %s6153
          %s6155 = sshll.u32 %s6152, 4
          %s6156 = int_to_ptr.hbm [resolvable:$true] %s6155
          %6161 = dma.vmem_to_hbm [thread:$0]  %s6154, 2048, %s6156, %s6138, 64, 64, 4
        $region48: #{tpu_custom_call.1} parent=31 // pred_fallthru
          _
      $region32: #{tpu_custom_call.1} parent=5 // pred_fallthru
        _
      %p6162 = scmp.le.s32.totalorder 2, %s16
      // Predicated region
      $region49: #{tpu_custom_call.1} parent=5 // pred_check
        %p6163 = pneg %p6162
      $region50: #{tpu_custom_call.1} parent=5 // pred_check_branch
        %6165 = sbr.rel (%p6163) target = $region52
      $region51: #{tpu_custom_call.1} parent=5 // pred_region
        %s6166 = ssub.s32 %s16, 2
        // Predicated region
        $region53: #{tpu_custom_call.1} parent=51 // pred_check
          %p6167 = pneg %p129
        $region54: #{tpu_custom_call.1} parent=51 // pred_check_branch
          %6169 = sbr.rel (%p6167) target = $region56
        $region55: #{tpu_custom_call.1} parent=51 // pred_region
          %s6170 = sand.u32 %s114, 1
          %s6171 = scalar_lea.sflag [#allocation4], %s6170
          %s6172 = sand.u32 %s114, 1
          %s6173 = smul.addr %s6172, 128
          %s6174 = scalar_lea.vmem [#allocation8], %s6173
          %6176 = dma.done %s6171, 2048
        $region56: #{tpu_custom_call.1} parent=51 // pred_fallthru
          _
      $region52: #{tpu_custom_call.1} parent=5 // pred_fallthru
        _
    $region6: #{tpu_custom_call.1} parent=1 // loop_footer
      %s20 = sadd.s32 1, %s16
    $region7: #{tpu_custom_call.1} parent=1 // loop_footer_branch
      %15 = sbr.rel target = $region3
    $region8: #{tpu_custom_call.1} parent=1 // loop_exit
      _
    %6177 = vsyncpa [#allocation3], 1
    %s6178 = scalar_lea.sflag [#allocation3], 1
    %6179 = vsyncpa %s6178, 1
    %6180 = vsyncpa [#allocation6], 1
    %6181 = vsyncpa [#allocation4], 1
    %s6182 = scalar_lea.sflag [#allocation4], 1
    %6183 = vsyncpa %s6182, 1

</llo_original>
